<compile_context>
chip_gen: v7x
topology: tpu7x:2x2x1
jax: 0.10.0
libtpu: 0.0.40
codegen_flags: <defaults>
</compile_context>

<pallas_src>
import functools
import math

import jax
import jax.numpy as jnp
from jax import lax
from jax.experimental import pallas as pl
from jax.experimental.pallas import tpu as pltpu


def _mha_kernel(qx_ref, kx_ref, vx_ref,
                wq_ref, wk_ref, wv_ref, wo_ref, bo_ref,
                *out_and_scratch, nhead, dk, dv, with_attn):
    if with_attn:
        attn_ref, ctx_ref, kh_scr, vh_scr = out_and_scratch
    else:
        attn_ref = None
        ctx_ref, kh_scr, vh_scr = out_and_scratch

    in_dtype = qx_ref.dtype          # compute dtype follows the inputs (f32 or bf16)
    scale = 1.0 / math.sqrt(dk)

    # --- K/V projections: once per batch step, cached in VMEM scratch -------
    @pl.when(pl.program_id(1) == 0)
    def _():
        kx = kx_ref[0]               # (Lk, dm)
        vx = vx_ref[0]               # (Lk, dm)
        kh_scr[...] = jnp.dot(kx, wk_ref[...],
                              preferred_element_type=jnp.float32).astype(kh_scr.dtype)
        vh_scr[...] = jnp.dot(vx, wv_ref[...],
                              preferred_element_type=jnp.float32).astype(vh_scr.dtype)

    # --- Q projection for this tile (1/sqrt(dk) folded in) ------------------
    qx = qx_ref[0]                   # (Tq, dm)
    qh_all = (jnp.dot(qx, wq_ref[...], preferred_element_type=jnp.float32)
              * scale).astype(in_dtype)                                  # (Tq, H*dk)

    tq = qh_all.shape[0]
    dm = wo_ref.shape[1]
    ctx_acc = jnp.zeros((tq, dm), jnp.float32)

    # small static unroll over heads (H is small); per-head lane slices of the
    # fused projections, per-head sublane-aligned row slice of wo.
    for h in range(nhead):
        qh = qh_all[:, h * dk:(h + 1) * dk]          # (Tq, dk)
        kh = kh_scr[:, h * dk:(h + 1) * dk]          # (Lk, dk)
        vh = vh_scr[:, h * dv:(h + 1) * dv]          # (Lk, dv)

        # scores: contract last axis of both operands (no .T / XLU transpose)
        s = lax.dot_general(qh, kh,
                            dimension_numbers=(((1,), (1,)), ((), ())),
                            preferred_element_type=jnp.float32)          # (Tq, Lk)
        # TODO(synk): optional `mask` argument not implemented (mask=None path only).
        s_max = jnp.max(s, axis=-1, keepdims=True)
        p = jnp.exp(s - s_max)
        denom = jnp.sum(p, axis=-1, keepdims=True)
        attn = p * pl.reciprocal(denom)              # exact: rows sum to 1
        # NOTE: dropout on attention weights is identity in eval / dropout=None.
        if with_attn:
            attn_ref[0, h] = attn.astype(attn_ref.dtype)

        ctx_h = jnp.dot(attn.astype(in_dtype), vh,
                        preferred_element_type=jnp.float32)              # (Tq, dv)
        # fold this head straight into the output projection (no concat)
        ctx_acc = ctx_acc + jnp.dot(ctx_h.astype(in_dtype),
                                    wo_ref[h * dv:(h + 1) * dv, :],
                                    preferred_element_type=jnp.float32)  # (Tq, dm)

    ctx_ref[0] = (ctx_acc + bo_ref[0]).astype(ctx_ref.dtype)


def multi_head_attention(q, k, v, wq, wk, wv, wo, bo, *,
                         nhead, dk, dv, block_q=128, attn_dtype=None,
                         return_attn=True, vmem_limit_bytes=56 * 1024 * 1024):
    """q,k,v: (B,L,dm); wq/wk: (dm,H*dk); wv: (dm,H*dv); wo: (H*dv,dm); bo: (1,dm).

    block_q: 128 fills the v5e MXU; use 256 on v6e/v7x when Lq allows and the
    VMEM budget fits (re-derive on v7x: only 64 MiB physical VMEM).
    attn_dtype: pass jnp.bfloat16 to halve the attention-weights HBM writeback.
    return_attn=False drops the O(H*L^2) attention output entirely.
    """
    B, Lq, dm = q.shape
    Lk = k.shape[1]
    assert wq.shape == (dm, nhead * dk) and wk.shape == (dm, nhead * dk)
    assert wv.shape == (dm, nhead * dv) and wo.shape == (nhead * dv, dm)

    block_q = min(block_q, Lq)
    assert Lq % block_q == 0, "Lq must be divisible by block_q"
    n_q = Lq // block_q
    if attn_dtype is None:
        attn_dtype = q.dtype

    kernel = functools.partial(_mha_kernel, nhead=nhead, dk=dk, dv=dv,
                               with_attn=return_attn)

    ctx_spec = pl.BlockSpec((1, block_q, dm), lambda b, qi: (b, qi, 0))
    ctx_shape = jax.ShapeDtypeStruct((B, Lq, dm), q.dtype)
    if return_attn:
        out_specs = [
            pl.BlockSpec((1, nhead, block_q, Lk), lambda b, qi: (b, 0, qi, 0)),
            ctx_spec,
        ]
        out_shape = (jax.ShapeDtypeStruct((B, nhead, Lq, Lk), attn_dtype), ctx_shape)
    else:
        out_specs = [ctx_spec]
        out_shape = (ctx_shape,)

    # TODO(synk): for very long Lk an online (flash-style) softmax tiled over Lk
    # would be needed; here K/V are resident per batch step.
    grid_spec = pltpu.PrefetchScalarGridSpec(
        num_scalar_prefetch=0,
        grid=(B, n_q),
        in_specs=[
            pl.BlockSpec((1, block_q, dm), lambda b, qi: (b, qi, 0)),   # q tile
            pl.BlockSpec((1, Lk, dm),      lambda b, qi: (b, 0, 0)),    # k (per batch)
            pl.BlockSpec((1, Lk, dm),      lambda b, qi: (b, 0, 0)),    # v (per batch)
            # weights: grid-invariant blocks -> DMA'd once, kept resident in VMEM
            pl.BlockSpec((dm, nhead * dk), lambda b, qi: (0, 0)),       # wq (fused heads)
            pl.BlockSpec((dm, nhead * dk), lambda b, qi: (0, 0)),       # wk
            pl.BlockSpec((dm, nhead * dv), lambda b, qi: (0, 0)),       # wv
            pl.BlockSpec((nhead * dv, dm), lambda b, qi: (0, 0)),       # wo
            pl.BlockSpec((1, dm),          lambda b, qi: (0, 0)),       # wo bias
        ],
        out_specs=out_specs,
        scratch_shapes=[
            pltpu.VMEM((Lk, nhead * dk), q.dtype),   # projected K, reused across q tiles
            pltpu.VMEM((Lk, nhead * dv), q.dtype),   # projected V, reused across q tiles
        ],
    )

    outs = pl.pallas_call(
        kernel,
        grid_spec=grid_spec,
        out_shape=out_shape,
        compiler_params=pltpu.CompilerParams(
            # batch axis parallel (megacore on v7x); qi must be "arbitrary" so
            # the K/V-projection scratch legally carries across q tiles.
            dimension_semantics=("parallel", "arbitrary"),
            vmem_limit_bytes=vmem_limit_bytes,
        ),
    )(q, k, v, wq, wk, wv, wo, bo)

    if return_attn:
        attn, ctx = outs
        return ctx, attn
    return outs[0], None


def _reference(q, k, v, wq, wk, wv, wo, bo, *, nhead, dk, dv):
    """Pure-JAX reference mirroring the PyTorch forward (fused-head weight layout)."""
    B, Lq, dm = q.shape
    Lk = k.shape[1]
    qh = (q @ wq).reshape(B, Lq, nhead, dk).transpose(0, 2, 1, 3)
    kh = (k @ wk).reshape(B, Lk, nhead, dk).transpose(0, 2, 1, 3)
    vh = (v @ wv).reshape(B, Lk, nhead, dv).transpose(0, 2, 1, 3)
    s = jnp.einsum("bhqd,bhkd->bhqk", qh, kh) / jnp.sqrt(jnp.float32(dk))
    attn = jax.nn.softmax(s, axis=-1)
    ctx_h = jnp.einsum("bhqk,bhkv->bhqv", attn, vh)
    ctx = ctx_h.transpose(0, 2, 1, 3).reshape(B, Lq, nhead * dv) @ wo + bo[0]
    return ctx, attn


if __name__ == "__main__":
    # module hyperparameters: dm % nhead == 0, dv = dm // nhead (context reshape)
    B, Lq, Lk = 2, 128, 128
    dm, nhead = 128, 4
    dk, dv = 32, 32

    key = jax.random.PRNGKey(0)
    ks = jax.random.split(key, 8)
    q = jax.random.normal(ks[0], (B, Lq, dm), jnp.float32)
    k = jax.random.normal(ks[1], (B, Lk, dm), jnp.float32)
    v = jax.random.normal(ks[2], (B, Lk, dm), jnp.float32)

    # fused-head parameters (equivalent to nn.Linear weights, applied as x @ W)
    wq = jax.random.normal(ks[3], (dm, nhead * dk), jnp.float32) * 0.1
    wk = jax.random.normal(ks[4], (dm, nhead * dk), jnp.float32) * 0.1
    wv = jax.random.normal(ks[5], (dm, nhead * dv), jnp.float32) * 0.1
    wo = jax.random.normal(ks[6], (nhead * dv, dm), jnp.float32) * 0.1
    bo = jax.random.normal(ks[7], (1, dm), jnp.float32) * 0.1

    ctx, attn = multi_head_attention(q, k, v, wq, wk, wv, wo, bo,
                                     nhead=nhead, dk=dk, dv=dv)
    jax.block_until_ready((ctx, attn))

    ctx_ref, attn_ref = _reference(q, k, v, wq, wk, wv, wo, bo,
                                   nhead=nhead, dk=dk, dv=dv)
    assert ctx.shape == (B, Lq, dm) and attn.shape == (B, nhead, Lq, Lk)
    assert jnp.allclose(ctx, ctx_ref, atol=2e-3, rtol=2e-3)
    assert jnp.allclose(attn, attn_ref, atol=2e-3, rtol=2e-3)

    print("KERNEL_OK")
</pallas_src>

<mosaic_0001>
module attributes {stable_mosaic.version = 11 : i64} {
  func.func @_mha_kernel(%arg0: i32, %arg1: i32, %arg2: memref<1x128x128xf32, #tpu.memory_space<vmem>>, %arg3: memref<1x128x128xf32, #tpu.memory_space<vmem>>, %arg4: memref<1x128x128xf32, #tpu.memory_space<vmem>>, %arg5: memref<128x128xf32, #tpu.memory_space<vmem>>, %arg6: memref<128x128xf32, #tpu.memory_space<vmem>>, %arg7: memref<128x128xf32, #tpu.memory_space<vmem>>, %arg8: memref<128x128xf32, #tpu.memory_space<vmem>>, %arg9: memref<1x128xf32, #tpu.memory_space<vmem>>, %arg10: memref<1x4x128x128xf32, #tpu.memory_space<vmem>>, %arg11: memref<1x128x128xf32, #tpu.memory_space<vmem>>, %arg12: memref<128x128xf32, #tpu.memory_space<vmem>>, %arg13: memref<128x128xf32, #tpu.memory_space<vmem>>) attributes {dimension_semantics = [#tpu.dimension_semantics<parallel>, #tpu.dimension_semantics<arbitrary>], iteration_bounds = array<i64: 2, 1>, scalar_prefetch = 0 : i64, scratch_operands = 2 : i64, tpu.core_type = #tpu.core_type<tc>, window_params = [{transform_indices = @transform_0, window_bounds = array<i64: 1, 128, 128>}, {transform_indices = @transform_1, window_bounds = array<i64: 1, 128, 128>}, {transform_indices = @transform_2, window_bounds = array<i64: 1, 128, 128>}, {pipeline_mode = #tpu.pipeline_mode<synchronous>, transform_indices = @transform_3, window_bounds = array<i64: 128, 128>}, {pipeline_mode = #tpu.pipeline_mode<synchronous>, transform_indices = @transform_4, window_bounds = array<i64: 128, 128>}, {pipeline_mode = #tpu.pipeline_mode<synchronous>, transform_indices = @transform_5, window_bounds = array<i64: 128, 128>}, {pipeline_mode = #tpu.pipeline_mode<synchronous>, transform_indices = @transform_6, window_bounds = array<i64: 128, 128>}, {pipeline_mode = #tpu.pipeline_mode<synchronous>, transform_indices = @transform_7, window_bounds = array<i64: 1, 128>}, {transform_indices = @transform_8, window_bounds = array<i64: 1, 4, 128, 128>}, {transform_indices = @transform_9, window_bounds = array<i64: 1, 128, 128>}]} {
    %c0_i32 = arith.constant 0 : i32
    %0 = arith.cmpi eq, %arg1, %c0_i32 : i32
    %1 = arith.extui %0 : i1 to i32
    %c0_i32_0 = arith.constant 0 : i32
    %2 = arith.cmpi ne, %1, %c0_i32_0 : i32
    scf.if %2 {
      %c0_66 = arith.constant 0 : index
      %c0_67 = arith.constant 0 : index
      %c0_68 = arith.constant 0 : index
      %102 = vector.load %arg3[%c0_66, %c0_67, %c0_68] : memref<1x128x128xf32, #tpu.memory_space<vmem>>, vector<1x128x128xf32>
      %103 = vector.shape_cast %102 : vector<1x128x128xf32> to vector<128x128xf32>
      %c0_69 = arith.constant 0 : index
      %c0_70 = arith.constant 0 : index
      %c0_71 = arith.constant 0 : index
      %104 = vector.load %arg4[%c0_69, %c0_70, %c0_71] : memref<1x128x128xf32, #tpu.memory_space<vmem>>, vector<1x128x128xf32>
      %105 = vector.shape_cast %104 : vector<1x128x128xf32> to vector<128x128xf32>
      %c0_72 = arith.constant 0 : index
      %c0_73 = arith.constant 0 : index
      %106 = vector.load %arg6[%c0_72, %c0_73] : memref<128x128xf32, #tpu.memory_space<vmem>>, vector<128x128xf32>
      %cst_74 = arith.constant dense<0.000000e+00> : vector<128x128xf32>
      %107 = tpu.matmul %103, %106, %cst_74 {dimension_numbers = #tpu.dot_dimension_numbers<[1], [0], [0], [1], [0, 0, 1, 1], [], []>} : vector<128x128xf32>, vector<128x128xf32>, vector<128x128xf32> -> vector<128x128xf32>
      %c0_75 = arith.constant 0 : index
      %c0_76 = arith.constant 0 : index
      %108 = vector.load %arg12[%c0_75, %c0_76] : memref<128x128xf32, #tpu.memory_space<vmem>>, vector<128x128xf32>
      tpu.vector_store %arg12[%c0_75, %c0_76], %107 {strides = array<i32>} : memref<128x128xf32, #tpu.memory_space<vmem>>, vector<128x128xf32>,
      %c0_77 = arith.constant 0 : index
      %c0_78 = arith.constant 0 : index
      %109 = vector.load %arg7[%c0_77, %c0_78] : memref<128x128xf32, #tpu.memory_space<vmem>>, vector<128x128xf32>
      %cst_79 = arith.constant dense<0.000000e+00> : vector<128x128xf32>
      %110 = tpu.matmul %105, %109, %cst_79 {dimension_numbers = #tpu.dot_dimension_numbers<[1], [0], [0], [1], [0, 0, 1, 1], [], []>} : vector<128x128xf32>, vector<128x128xf32>, vector<128x128xf32> -> vector<128x128xf32>
      %c0_80 = arith.constant 0 : index
      %c0_81 = arith.constant 0 : index
      %111 = vector.load %arg13[%c0_80, %c0_81] : memref<128x128xf32, #tpu.memory_space<vmem>>, vector<128x128xf32>
      tpu.vector_store %arg13[%c0_80, %c0_81], %110 {strides = array<i32>} : memref<128x128xf32, #tpu.memory_space<vmem>>, vector<128x128xf32>,
    } else {
    }
    %c0 = arith.constant 0 : index
    %c0_1 = arith.constant 0 : index
    %c0_2 = arith.constant 0 : index
    %3 = vector.load %arg2[%c0, %c0_1, %c0_2] : memref<1x128x128xf32, #tpu.memory_space<vmem>>, vector<1x128x128xf32>
    %4 = vector.shape_cast %3 : vector<1x128x128xf32> to vector<128x128xf32>
    %c0_3 = arith.constant 0 : index
    %c0_4 = arith.constant 0 : index
    %5 = vector.load %arg5[%c0_3, %c0_4] : memref<128x128xf32, #tpu.memory_space<vmem>>, vector<128x128xf32>
    %cst = arith.constant dense<0.000000e+00> : vector<128x128xf32>
    %6 = tpu.matmul %4, %5, %cst {dimension_numbers = #tpu.dot_dimension_numbers<[1], [0], [0], [1], [0, 0, 1, 1], [], []>} : vector<128x128xf32>, vector<128x128xf32>, vector<128x128xf32> -> vector<128x128xf32>
    %cst_5 = arith.constant 0.176776692 : f32
    %7 = vector.broadcast %cst_5 : f32 to vector<128x128xf32>
    %8 = arith.mulf %6, %7 : vector<128x128xf32>
    %cst_6 = arith.constant 0.000000e+00 : f32
    %9 = vector.broadcast %cst_6 : f32 to vector<128x128xf32>
    %10 = vector.extract_strided_slice %8 {offsets = [0, 0], sizes = [128, 32], strides = [1, 1]} : vector<128x128xf32> to vector<128x32xf32>
    %c0_7 = arith.constant 0 : index
    %c0_8 = arith.constant 0 : index
    %11 = vector.load %arg12[%c0_7, %c0_8] : memref<128x128xf32, #tpu.memory_space<vmem>>, vector<128x32xf32>
    %c0_9 = arith.constant 0 : index
    %c0_10 = arith.constant 0 : index
    %12 = vector.load %arg13[%c0_9, %c0_10] : memref<128x128xf32, #tpu.memory_space<vmem>>, vector<128x32xf32>
    %cst_11 = arith.constant dense<0.000000e+00> : vector<128x128xf32>
    %13 = tpu.matmul %10, %11, %cst_11 {dimension_numbers = #tpu.dot_dimension_numbers<[1], [1], [0], [0], [0, 0, 1, 0], [], []>} : vector<128x32xf32>, vector<128x32xf32>, vector<128x128xf32> -> vector<128x128xf32>
    %cst_12 = arith.constant dense<0xFF800000> : vector<128xf32>
    %14 = vector.multi_reduction <maximumf>, %13, %cst_12 [1] : vector<128x128xf32> to vector<128xf32>
    %15 = vector.shape_cast %14 : vector<128xf32> to vector<128x1xf32>
    %16 = vector.broadcast %15 : vector<128x1xf32> to vector<128x128xf32>
    %17 = arith.subf %13, %16 : vector<128x128xf32>
    %18 = math.exp %17 : vector<128x128xf32>
    %cst_13 = arith.constant dense<0.000000e+00> : vector<128xf32>
    %19 = vector.multi_reduction <add>, %18, %cst_13 [1] : vector<128x128xf32> to vector<128xf32>
    %20 = vector.shape_cast %19 : vector<128xf32> to vector<128x1xf32>
    %21 = tpu.reciprocal %20 : vector<128x1xf32> -> vector<128x1xf32>
    %22 = vector.broadcast %21 : vector<128x1xf32> to vector<128x128xf32>
    %23 = arith.mulf %18, %22 : vector<128x128xf32>
    %c0_14 = arith.constant 0 : index
    %c0_15 = arith.constant 0 : index
    %c0_16 = arith.constant 0 : index
    %c0_17 = arith.constant 0 : index
    %24 = vector.load %arg10[%c0_14, %c0_15, %c0_16, %c0_17] : memref<1x4x128x128xf32, #tpu.memory_space<vmem>>, vector<1x1x128x128xf32>
    %25 = vector.shape_cast %24 : vector<1x1x128x128xf32> to vector<128x128xf32>
    %26 = vector.shape_cast %23 : vector<128x128xf32> to vector<1x1x128x128xf32>
    tpu.vector_store %arg10[%c0_14, %c0_15, %c0_16, %c0_17], %26 {strides = array<i32>} : memref<1x4x128x128xf32, #tpu.memory_space<vmem>>, vector<1x1x128x128xf32>,
    %cst_18 = arith.constant dense<0.000000e+00> : vector<128x32xf32>
    %27 = tpu.matmul %23, %12, %cst_18 {dimension_numbers = #tpu.dot_dimension_numbers<[1], [0], [0], [1], [0, 0, 1, 1], [], []>} : vector<128x128xf32>, vector<128x32xf32>, vector<128x32xf32> -> vector<128x32xf32>
    %c0_19 = arith.constant 0 : index
    %c0_20 = arith.constant 0 : index
    %28 = vector.load %arg8[%c0_19, %c0_20] : memref<128x128xf32, #tpu.memory_space<vmem>>, vector<32x128xf32>
    %cst_21 = arith.constant dense<0.000000e+00> : vector<128x128xf32>
    %29 = tpu.matmul %27, %28, %cst_21 {dimension_numbers = #tpu.dot_dimension_numbers<[1], [0], [0], [1], [0, 0, 1, 1], [], []>} : vector<128x32xf32>, vector<32x128xf32>, vector<128x128xf32> -> vector<128x128xf32>
    %30 = arith.addf %9, %29 : vector<128x128xf32>
    %31 = vector.extract_strided_slice %8 {offsets = [0, 32], sizes = [128, 32], strides = [1, 1]} : vector<128x128xf32> to vector<128x32xf32>
    %c0_22 = arith.constant 0 : index
    %c32 = arith.constant 32 : index
    %32 = vector.load %arg12[%c0_22, %c32] : memref<128x128xf32, #tpu.memory_space<vmem>>, vector<128x32xf32>
    %c0_23 = arith.constant 0 : index
    %c32_24 = arith.constant 32 : index
    %33 = vector.load %arg13[%c0_23, %c32_24] : memref<128x128xf32, #tpu.memory_space<vmem>>, vector<128x32xf32>
    %cst_25 = arith.constant dense<0.000000e+00> : vector<128x128xf32>
    %34 = tpu.matmul %31, %32, %cst_25 {dimension_numbers = #tpu.dot_dimension_numbers<[1], [1], [0], [0], [0, 0, 1, 0], [], []>} : vector<128x32xf32>, vector<128x32xf32>, vector<128x128xf32> -> vector<128x128xf32>
    %cst_26 = arith.constant dense<0xFF800000> : vector<128xf32>
    %35 = vector.multi_reduction <maximumf>, %34, %cst_26 [1] : vector<128x128xf32> to vector<128xf32>
    %36 = vector.shape_cast %35 : vector<128xf32> to vector<128x1xf32>
    %37 = vector.broadcast %36 : vector<128x1xf32> to vector<128x128xf32>
    %38 = arith.subf %34, %37 : vector<128x128xf32>
    %39 = math.exp %38 : vector<128x128xf32>
    %cst_27 = arith.constant dense<0.000000e+00> : vector<128xf32>
    %40 = vector.multi_reduction <add>, %39, %cst_27 [1] : vector<128x128xf32> to vector<128xf32>
    %41 = vector.shape_cast %40 : vector<128xf32> to vector<128x1xf32>
    %42 = tpu.reciprocal %41 : vector<128x1xf32> -> vector<128x1xf32>
    %43 = vector.broadcast %42 : vector<128x1xf32> to vector<128x128xf32>
    %44 = arith.mulf %39, %43 : vector<128x128xf32>
    %c0_28 = arith.constant 0 : index
    %c1 = arith.constant 1 : index
    %c0_29 = arith.constant 0 : index
    %c0_30 = arith.constant 0 : index
    %45 = vector.load %arg10[%c0_28, %c1, %c0_29, %c0_30] : memref<1x4x128x128xf32, #tpu.memory_space<vmem>>, vector<1x1x128x128xf32>
    %46 = vector.shape_cast %45 : vector<1x1x128x128xf32> to vector<128x128xf32>
    %47 = vector.shape_cast %44 : vector<128x128xf32> to vector<1x1x128x128xf32>
    tpu.vector_store %arg10[%c0_28, %c1, %c0_29, %c0_30], %47 {strides = array<i32>} : memref<1x4x128x128xf32, #tpu.memory_space<vmem>>, vector<1x1x128x128xf32>,
    %cst_31 = arith.constant dense<0.000000e+00> : vector<128x32xf32>
    %48 = tpu.matmul %44, %33, %cst_31 {dimension_numbers = #tpu.dot_dimension_numbers<[1], [0], [0], [1], [0, 0, 1, 1], [], []>} : vector<128x128xf32>, vector<128x32xf32>, vector<128x32xf32> -> vector<128x32xf32>
    %c32_32 = arith.constant 32 : index
    %c0_33 = arith.constant 0 : index
    %49 = vector.load %arg8[%c32_32, %c0_33] : memref<128x128xf32, #tpu.memory_space<vmem>>, vector<32x128xf32>
    %cst_34 = arith.constant dense<0.000000e+00> : vector<128x128xf32>
    %50 = tpu.matmul %48, %49, %cst_34 {dimension_numbers = #tpu.dot_dimension_numbers<[1], [0], [0], [1], [0, 0, 1, 1], [], []>} : vector<128x32xf32>, vector<32x128xf32>, vector<128x128xf32> -> vector<128x128xf32>
    %51 = arith.addf %30, %50 : vector<128x128xf32>
    %52 = vector.extract_strided_slice %8 {offsets = [0, 64], sizes = [128, 32], strides = [1, 1]} : vector<128x128xf32> to vector<128x32xf32>
    %c0_35 = arith.constant 0 : index
    %c64 = arith.constant 64 : index
    %53 = vector.load %arg12[%c0_35, %c64] : memref<128x128xf32, #tpu.memory_space<vmem>>, vector<128x32xf32>
    %c0_36 = arith.constant 0 : index
    %c64_37 = arith.constant 64 : index
    %54 = vector.load %arg13[%c0_36, %c64_37] : memref<128x128xf32, #tpu.memory_space<vmem>>, vector<128x32xf32>
    %cst_38 = arith.constant dense<0.000000e+00> : vector<128x128xf32>
    %55 = tpu.matmul %52, %53, %cst_38 {dimension_numbers = #tpu.dot_dimension_numbers<[1], [1], [0], [0], [0, 0, 1, 0], [], []>} : vector<128x32xf32>, vector<128x32xf32>, vector<128x128xf32> -> vector<128x128xf32>
    %cst_39 = arith.constant dense<0xFF800000> : vector<128xf32>
    %56 = vector.multi_reduction <maximumf>, %55, %cst_39 [1] : vector<128x128xf32> to vector<128xf32>
    %57 = vector.shape_cast %56 : vector<128xf32> to vector<128x1xf32>
    %58 = vector.broadcast %57 : vector<128x1xf32> to vector<128x128xf32>
    %59 = arith.subf %55, %58 : vector<128x128xf32>
    %60 = math.exp %59 : vector<128x128xf32>
    %cst_40 = arith.constant dense<0.000000e+00> : vector<128xf32>
    %61 = vector.multi_reduction <add>, %60, %cst_40 [1] : vector<128x128xf32> to vector<128xf32>
    %62 = vector.shape_cast %61 : vector<128xf32> to vector<128x1xf32>
    %63 = tpu.reciprocal %62 : vector<128x1xf32> -> vector<128x1xf32>
    %64 = vector.broadcast %63 : vector<128x1xf32> to vector<128x128xf32>
    %65 = arith.mulf %60, %64 : vector<128x128xf32>
    %c0_41 = arith.constant 0 : index
    %c2 = arith.constant 2 : index
    %c0_42 = arith.constant 0 : index
    %c0_43 = arith.constant 0 : index
    %66 = vector.load %arg10[%c0_41, %c2, %c0_42, %c0_43] : memref<1x4x128x128xf32, #tpu.memory_space<vmem>>, vector<1x1x128x128xf32>
    %67 = vector.shape_cast %66 : vector<1x1x128x128xf32> to vector<128x128xf32>
    %68 = vector.shape_cast %65 : vector<128x128xf32> to vector<1x1x128x128xf32>
    tpu.vector_store %arg10[%c0_41, %c2, %c0_42, %c0_43], %68 {strides = array<i32>} : memref<1x4x128x128xf32, #tpu.memory_space<vmem>>, vector<1x1x128x128xf32>,
    %cst_44 = arith.constant dense<0.000000e+00> : vector<128x32xf32>
    %69 = tpu.matmul %65, %54, %cst_44 {dimension_numbers = #tpu.dot_dimension_numbers<[1], [0], [0], [1], [0, 0, 1, 1], [], []>} : vector<128x128xf32>, vector<128x32xf32>, vector<128x32xf32> -> vector<128x32xf32>
    %c64_45 = arith.constant 64 : index
    %c0_46 = arith.constant 0 : index
    %70 = vector.load %arg8[%c64_45, %c0_46] : memref<128x128xf32, #tpu.memory_space<vmem>>, vector<32x128xf32>
    %cst_47 = arith.constant dense<0.000000e+00> : vector<128x128xf32>
    %71 = tpu.matmul %69, %70, %cst_47 {dimension_numbers = #tpu.dot_dimension_numbers<[1], [0], [0], [1], [0, 0, 1, 1], [], []>} : vector<128x32xf32>, vector<32x128xf32>, vector<128x128xf32> -> vector<128x128xf32>
    %72 = arith.addf %51, %71 : vector<128x128xf32>
    %73 = vector.extract_strided_slice %8 {offsets = [0, 96], sizes = [128, 32], strides = [1, 1]} : vector<128x128xf32> to vector<128x32xf32>
    %c0_48 = arith.constant 0 : index
    %c96 = arith.constant 96 : index
    %74 = vector.load %arg12[%c0_48, %c96] : memref<128x128xf32, #tpu.memory_space<vmem>>, vector<128x32xf32>
    %c0_49 = arith.constant 0 : index
    %c96_50 = arith.constant 96 : index
    %75 = vector.load %arg13[%c0_49, %c96_50] : memref<128x128xf32, #tpu.memory_space<vmem>>, vector<128x32xf32>
    %cst_51 = arith.constant dense<0.000000e+00> : vector<128x128xf32>
    %76 = tpu.matmul %73, %74, %cst_51 {dimension_numbers = #tpu.dot_dimension_numbers<[1], [1], [0], [0], [0, 0, 1, 0], [], []>} : vector<128x32xf32>, vector<128x32xf32>, vector<128x128xf32> -> vector<128x128xf32>
    %cst_52 = arith.constant dense<0xFF800000> : vector<128xf32>
    %77 = vector.multi_reduction <maximumf>, %76, %cst_52 [1] : vector<128x128xf32> to vector<128xf32>
    %78 = vector.shape_cast %77 : vector<128xf32> to vector<128x1xf32>
    %79 = vector.broadcast %78 : vector<128x1xf32> to vector<128x128xf32>
    %80 = arith.subf %76, %79 : vector<128x128xf32>
    %81 = math.exp %80 : vector<128x128xf32>
    %cst_53 = arith.constant dense<0.000000e+00> : vector<128xf32>
    %82 = vector.multi_reduction <add>, %81, %cst_53 [1] : vector<128x128xf32> to vector<128xf32>
    %83 = vector.shape_cast %82 : vector<128xf32> to vector<128x1xf32>
    %84 = tpu.reciprocal %83 : vector<128x1xf32> -> vector<128x1xf32>
    %85 = vector.broadcast %84 : vector<128x1xf32> to vector<128x128xf32>
    %86 = arith.mulf %81, %85 : vector<128x128xf32>
    %c0_54 = arith.constant 0 : index
    %c3 = arith.constant 3 : index
    %c0_55 = arith.constant 0 : index
    %c0_56 = arith.constant 0 : index
    %87 = vector.load %arg10[%c0_54, %c3, %c0_55, %c0_56] : memref<1x4x128x128xf32, #tpu.memory_space<vmem>>, vector<1x1x128x128xf32>
    %88 = vector.shape_cast %87 : vector<1x1x128x128xf32> to vector<128x128xf32>
    %89 = vector.shape_cast %86 : vector<128x128xf32> to vector<1x1x128x128xf32>
    tpu.vector_store %arg10[%c0_54, %c3, %c0_55, %c0_56], %89 {strides = array<i32>} : memref<1x4x128x128xf32, #tpu.memory_space<vmem>>, vector<1x1x128x128xf32>,
    %cst_57 = arith.constant dense<0.000000e+00> : vector<128x32xf32>
    %90 = tpu.matmul %86, %75, %cst_57 {dimension_numbers = #tpu.dot_dimension_numbers<[1], [0], [0], [1], [0, 0, 1, 1], [], []>} : vector<128x128xf32>, vector<128x32xf32>, vector<128x32xf32> -> vector<128x32xf32>
    %c96_58 = arith.constant 96 : index
    %c0_59 = arith.constant 0 : index
    %91 = vector.load %arg8[%c96_58, %c0_59] : memref<128x128xf32, #tpu.memory_space<vmem>>, vector<32x128xf32>
    %cst_60 = arith.constant dense<0.000000e+00> : vector<128x128xf32>
    %92 = tpu.matmul %90, %91, %cst_60 {dimension_numbers = #tpu.dot_dimension_numbers<[1], [0], [0], [1], [0, 0, 1, 1], [], []>} : vector<128x32xf32>, vector<32x128xf32>, vector<128x128xf32> -> vector<128x128xf32>
    %93 = arith.addf %72, %92 : vector<128x128xf32>
    %c0_61 = arith.constant 0 : index
    %c0_62 = arith.constant 0 : index
    %94 = vector.load %arg9[%c0_61, %c0_62] : memref<1x128xf32, #tpu.memory_space<vmem>>, vector<1x128xf32>
    %95 = vector.shape_cast %94 : vector<1x128xf32> to vector<128xf32>
    %96 = vector.shape_cast %95 : vector<128xf32> to vector<1x128xf32>
    %97 = vector.broadcast %96 : vector<1x128xf32> to vector<128x128xf32>
    %98 = arith.addf %93, %97 : vector<128x128xf32>
    %c0_63 = arith.constant 0 : index
    %c0_64 = arith.constant 0 : index
    %c0_65 = arith.constant 0 : index
    %99 = vector.load %arg11[%c0_63, %c0_64, %c0_65] : memref<1x128x128xf32, #tpu.memory_space<vmem>>, vector<1x128x128xf32>
    %100 = vector.shape_cast %99 : vector<1x128x128xf32> to vector<128x128xf32>
    %101 = vector.shape_cast %98 : vector<128x128xf32> to vector<1x128x128xf32>
    tpu.vector_store %arg11[%c0_63, %c0_64, %c0_65], %101 {strides = array<i32>} : memref<1x128x128xf32, #tpu.memory_space<vmem>>, vector<1x128x128xf32>,
    return
  }
  func.func @transform_0(%arg0: i32, %arg1: i32) -> (i32, i32, i32) {
    %c0_i32 = arith.constant 0 : i32
    %c0_i32_0 = arith.constant 0 : i32
    return %arg0, %arg1, %c0_i32 : i32, i32, i32
  }
  func.func @transform_1(%arg0: i32, %arg1: i32) -> (i32, i32, i32) {
    %c0_i32 = arith.constant 0 : i32
    %c0_i32_0 = arith.constant 0 : i32
    %c0_i32_1 = arith.constant 0 : i32
    return %arg0, %c0_i32, %c0_i32_0 : i32, i32, i32
  }
  func.func @transform_2(%arg0: i32, %arg1: i32) -> (i32, i32, i32) {
    %c0_i32 = arith.constant 0 : i32
    %c0_i32_0 = arith.constant 0 : i32
    %c0_i32_1 = arith.constant 0 : i32
    return %arg0, %c0_i32, %c0_i32_0 : i32, i32, i32
  }
  func.func @transform_3(%arg0: i32, %arg1: i32) -> (i32, i32) {
    %c0_i32 = arith.constant 0 : i32
    %c0_i32_0 = arith.constant 0 : i32
    %c0_i32_1 = arith.constant 0 : i32
    return %c0_i32, %c0_i32_0 : i32, i32
  }
  func.func @transform_4(%arg0: i32, %arg1: i32) -> (i32, i32) {
    %c0_i32 = arith.constant 0 : i32
    %c0_i32_0 = arith.constant 0 : i32
    %c0_i32_1 = arith.constant 0 : i32
    return %c0_i32, %c0_i32_0 : i32, i32
  }
  func.func @transform_5(%arg0: i32, %arg1: i32) -> (i32, i32) {
    %c0_i32 = arith.constant 0 : i32
    %c0_i32_0 = arith.constant 0 : i32
    %c0_i32_1 = arith.constant 0 : i32
    return %c0_i32, %c0_i32_0 : i32, i32
  }
  func.func @transform_6(%arg0: i32, %arg1: i32) -> (i32, i32) {
    %c0_i32 = arith.constant 0 : i32
    %c0_i32_0 = arith.constant 0 : i32
    %c0_i32_1 = arith.constant 0 : i32
    return %c0_i32, %c0_i32_0 : i32, i32
  }
  func.func @transform_7(%arg0: i32, %arg1: i32) -> (i32, i32) {
    %c0_i32 = arith.constant 0 : i32
    %c0_i32_0 = arith.constant 0 : i32
    %c0_i32_1 = arith.constant 0 : i32
    return %c0_i32, %c0_i32_0 : i32, i32
  }
  func.func @transform_8(%arg0: i32, %arg1: i32) -> (i32, i32, i32, i32) {
    %c0_i32 = arith.constant 0 : i32
    %c0_i32_0 = arith.constant 0 : i32
    %c0_i32_1 = arith.constant 0 : i32
    return %arg0, %c0_i32, %arg1, %c0_i32_0 : i32, i32, i32, i32
  }
  func.func @transform_9(%arg0: i32, %arg1: i32) -> (i32, i32, i32) {
    %c0_i32 = arith.constant 0 : i32
    %c0_i32_0 = arith.constant 0 : i32
    return %arg0, %arg1, %c0_i32 : i32, i32, i32
  }
}

</mosaic_0001>

<llo_original>
// kernel: tpu_custom_call.1
$region0: #{tpu_custom_call.1}
  #allocation0 [shape = 'u32[]', space=smem, size = 0x4, offset = 0x4, fixed_abs, tag = 'smem constant byte address 0x4 - core index']
  #allocation1 [shape = 'u32[144,128]{1,0:T(1,128)}', space=vmem, size = 0x12000, scoped, tag = 'internal scratch']
  #allocation2 [shape = 'f32[128,128]{1,0:T(8,128)}', space=vmem, size = 0x10000, scoped, tag = 'scratch operand']
  #allocation3 [shape = 'f32[128,128]{1,0:T(8,128)}', space=vmem, size = 0x10000, scoped, tag = 'scratch operand']
  %s0 = inlined_call_operand.hbm [shape: f32[2,128,128], index: 0, kind: input, shape index: {}]
  %s1 = inlined_call_operand.hbm [shape: f32[2,128,128], index: 1, kind: input, shape index: {}]
  %s2 = inlined_call_operand.hbm [shape: f32[2,128,128], index: 2, kind: input, shape index: {}]
  %s3 = inlined_call_operand.hbm [shape: f32[128,128], index: 3, kind: input, shape index: {}]
  %s4 = inlined_call_operand.hbm [shape: f32[128,128], index: 4, kind: input, shape index: {}]
  %s5 = inlined_call_operand.hbm [shape: f32[128,128], index: 5, kind: input, shape index: {}]
  %s6 = inlined_call_operand.hbm [shape: f32[128,128], index: 6, kind: input, shape index: {}]
  %s7 = inlined_call_operand.vmem [shape: f32[1,128], index: 7, kind: input, shape index: {}]
  %s8 = inlined_call_operand.hbm [shape: f32[2,4,128,128], index: 8, kind: output, shape index: {0}]
  %s9 = inlined_call_operand.hbm [shape: f32[2,128,128], index: 9, kind: output, shape index: {1}]
  %10 = xla_tuple %s8, %s9
  %s11 = sld [smem:[#allocation0]]
  $region105: #{tpu_custom_call.1} parent=0
    _
  %s13 = ssub.s32 1, %s11
  %s14 = scalar_select 0, %s13, %s11
  $region1: #{tpu_custom_call.1} parent=0
    #allocation4 [shape = 'u8[131072]{0}', space=vmem, size = 0x20000, scoped, tag = 'input window, operand 0']
    #allocation5 [shape = 's32[2]{0}', space=sflag, size = 0x8, scoped, tag = 'scoped memory for tpu_custom_call.1']
    #allocation6 [shape = 's32[2]{0}', space=sflag, size = 0x8, scoped, tag = 'scoped memory for tpu_custom_call.1']
    #allocation7 [shape = 'u8[131072]{0}', space=vmem, size = 0x20000, scoped, tag = 'input window, operand 1']
    #allocation8 [shape = 's32[2]{0}', space=sflag, size = 0x8, scoped, tag = 'scoped memory for tpu_custom_call.1']
    #allocation9 [shape = 'u8[131072]{0}', space=vmem, size = 0x20000, scoped, tag = 'input window, operand 2']
    #allocation10 [shape = 'u8[65536]{0}', space=vmem, size = 0x10000, scoped, tag = 'input window, operand 3, single buffered']
    #allocation11 [shape = 's32[1]{0}', space=sflag, size = 0x4, scoped, tag = 'scoped memory for tpu_custom_call.1']
    #allocation12 [shape = 'u8[65536]{0}', space=vmem, size = 0x10000, scoped, tag = 'input window, operand 4, single buffered']
    #allocation13 [shape = 'u8[65536]{0}', space=vmem, size = 0x10000, scoped, tag = 'input window, operand 5, single buffered']
    #allocation14 [shape = 's32[1]{0}', space=sflag, size = 0x4, scoped, tag = 'scoped memory for tpu_custom_call.1']
    #allocation15 [shape = 'u8[65536]{0}', space=vmem, size = 0x10000, scoped, tag = 'input window, operand 6, single buffered']
    #allocation16 [shape = 'u8[524288]{0}', space=vmem, size = 0x80000, scoped, tag = 'output window, operand 0']
    #allocation17 [shape = 'u8[131072]{0}', space=vmem, size = 0x20000, scoped, tag = 'output window, operand 1']
    #allocation18 [shape = 's32[2]{0}', space=sflag, size = 0x8, scoped, tag = 'scoped memory for tpu_custom_call.1']
    %15 = vsyncpa [#allocation5], 0
    %s16 = scalar_lea.sflag [#allocation5], 1
    %17 = vsyncpa %s16, 0
    %18 = vsyncpa [#allocation8], 0
    %s19 = scalar_lea.sflag [#allocation8], 1
    %20 = vsyncpa %s19, 0
    %21 = vsyncpa [#allocation11], 0
    %22 = vsyncpa [#allocation14], 0
    %23 = vsyncpa [#allocation6], 0
    %s24 = scalar_lea.sflag [#allocation6], 1
    %25 = vsyncpa %s24, 0
    %26 = vsyncpa [#allocation18], 0
    %s27 = scalar_lea.sflag [#allocation18], 1
    %28 = vsyncpa %s27, 0
    loop: start=0, step=1, limit=4
    $region2: #{tpu_custom_call.1} parent=1 // loop_pre_header
      _
    $region3: #{tpu_custom_call.1} parent=1 // loop_header
      %s30 = sphi 0, %s34
      %p31 = scmp.ge.s32.totalorder %s30, 4
      %s37 = sphi 0, %s49
      %s38 = sphi 0, %s45
      %s39 = sphi 0, %s37
      %s40 = sphi 0, %s38
      %s41 = sphi 0, %s39
      %s42 = sphi 0, %s40
      %s54 = sphi 0, %s56
      %s57 = sphi 0, %s54
      %s58 = sphi 0, %s57
      %s74 = sphi 0, %s58
      %s80 = sphi 0, %s82
      %s83 = sphi 0, %s80
      %s84 = sphi 0, %s83
      %s100 = sphi 0, %s84
      %s106 = sphi 0, %s108
      %s109 = sphi 0, %s106
      %s110 = sphi 0, %s109
      %s126 = sphi 0, %s110
      %s130 = sphi 0, %s130
      %s132 = sphi 0, %s130
      %s133 = sphi 0, %s132
      %s147 = sphi 0, %s133
      %s151 = sphi 0, %s151
      %s153 = sphi 0, %s151
      %s154 = sphi 0, %s153
      %s168 = sphi 0, %s154
      %s172 = sphi 0, %s172
      %s174 = sphi 0, %s172
      %s175 = sphi 0, %s174
      %s189 = sphi 0, %s175
      %s193 = sphi 0, %s193
      %s195 = sphi 0, %s193
      %s196 = sphi 0, %s195
      %s210 = sphi 0, %s196
      %s214 = sphi 0, %s214
      %s216 = sphi 0, %s214
      %s217 = sphi 0, %s216
      %s231 = sphi 0, %s217
      %s239 = sphi 0, %s241
      %s242 = sphi 0, %s239
      %s243 = sphi 0, %s242
      %s259 = sphi 0, %s243
      %s267 = sphi 0, %s269
      %s270 = sphi 0, %s267
      %s271 = sphi 0, %s270
      %s287 = sphi 0, %s271
    $region4: #{tpu_custom_call.1} parent=1 // loop_header_branch
      %33 = sbr.rel (%p31) target = $region8
    $region5: #{tpu_custom_call.1} parent=1 // loop_body
      %s35 = ssub.s32 %s30, 1
      %s36 = ssub.s32 %s30, 2
      %s43 = sadd.s32 1, %s38
      %p44 = scmp.ge.s32.totalorder %s43, 1
      %s45 = scalar_select %p44, 0, %s43
      %s46 = sadd.s32 1, %s37
      %s47 = scalar_select %p44, %s46, %s37
      %p48 = scmp.ge.s32.totalorder %s47, 2
      %s49 = scalar_select %p48, 0, %s47
      %s50 = ssub.s32 %s37, %s49
      %s51 = ssub.s32 %s38, %s45
      %s52 = sor.u32 %s50, %s51
      %p53 = scmp.eq.s32.totalorder %s52, 0
      %s55 = sadd.s32 %s54, 1
      %s56 = scalar_select %p53, %s54, %s55
      %p59 = pneg %p53
      %p60 = scmp.eq.s32.totalorder %s30, 1
      %p61 = por %p59, %p60
      %p62 = scmp.ne.s32.totalorder %s54, %s57
      %p63 = scmp.eq.s32.totalorder %s30, 0
      %p64 = por %p62, %p63
      %p65 = scmp.ne.s32.totalorder %s54, %s57
      %p66 = scmp.eq.s32.totalorder %s35, 1
      %p67 = por %p65, %p66
      %p68 = scmp.ne.s32.totalorder %s57, %s58
      %p69 = scmp.eq.s32.totalorder %s35, 0
      %p70 = por %p68, %p69
      %p71 = scmp.ne.s32.totalorder %s57, %s58
      %p72 = scmp.eq.s32.totalorder %s36, 1
      %p73 = por %p71, %p72
      %p75 = scmp.ne.s32.totalorder %s58, %s74
      %p76 = scmp.eq.s32.totalorder %s36, 0
      %p77 = por %p75, %p76
      %s78 = ssub.s32 %s37, %s49
      %p79 = scmp.eq.s32.totalorder %s78, 0
      %s81 = sadd.s32 %s80, 1
      %s82 = scalar_select %p79, %s80, %s81
      %p85 = pneg %p79
      %p86 = scmp.eq.s32.totalorder %s30, 1
      %p87 = por %p85, %p86
      %p88 = scmp.ne.s32.totalorder %s80, %s83
      %p89 = scmp.eq.s32.totalorder %s30, 0
      %p90 = por %p88, %p89
      %p91 = scmp.ne.s32.totalorder %s80, %s83
      %p92 = scmp.eq.s32.totalorder %s35, 1
      %p93 = por %p91, %p92
      %p94 = scmp.ne.s32.totalorder %s83, %s84
      %p95 = scmp.eq.s32.totalorder %s35, 0
      %p96 = por %p94, %p95
      %p97 = scmp.ne.s32.totalorder %s83, %s84
      %p98 = scmp.eq.s32.totalorder %s36, 1
      %p99 = por %p97, %p98
      %p101 = scmp.ne.s32.totalorder %s84, %s100
      %p102 = scmp.eq.s32.totalorder %s36, 0
      %p103 = por %p101, %p102
      %s104 = ssub.s32 %s37, %s49
      %p105 = scmp.eq.s32.totalorder %s104, 0
      %s107 = sadd.s32 %s106, 1
      %s108 = scalar_select %p105, %s106, %s107
      %p111 = pneg %p105
      %p112 = scmp.eq.s32.totalorder %s30, 1
      %p113 = por %p111, %p112
      %p114 = scmp.ne.s32.totalorder %s106, %s109
      %p115 = scmp.eq.s32.totalorder %s30, 0
      %p116 = por %p114, %p115
      %p117 = scmp.ne.s32.totalorder %s106, %s109
      %p118 = scmp.eq.s32.totalorder %s35, 1
      %p119 = por %p117, %p118
      %p120 = scmp.ne.s32.totalorder %s109, %s110
      %p121 = scmp.eq.s32.totalorder %s35, 0
      %p122 = por %p120, %p121
      %p123 = scmp.ne.s32.totalorder %s109, %s110
      %p124 = scmp.eq.s32.totalorder %s36, 1
      %p125 = por %p123, %p124
      %p127 = scmp.ne.s32.totalorder %s110, %s126
      %p128 = scmp.eq.s32.totalorder %s36, 0
      %p129 = por %p127, %p128
      %s131 = sadd.s32 %s130, 1
      %p134 = scmp.eq.s32.totalorder %s30, 1
      %p135 = scmp.ne.s32.totalorder %s130, %s132
      %p136 = scmp.eq.s32.totalorder %s30, 0
      %p137 = por %p135, %p136
      %p138 = scmp.ne.s32.totalorder %s130, %s132
      %p139 = scmp.eq.s32.totalorder %s35, 1
      %p140 = por %p138, %p139
      %p141 = scmp.ne.s32.totalorder %s132, %s133
      %p142 = scmp.eq.s32.totalorder %s35, 0
      %p143 = por %p141, %p142
      %p144 = scmp.ne.s32.totalorder %s132, %s133
      %p145 = scmp.eq.s32.totalorder %s36, 1
      %p146 = por %p144, %p145
      %p148 = scmp.ne.s32.totalorder %s133, %s147
      %p149 = scmp.eq.s32.totalorder %s36, 0
      %p150 = por %p148, %p149
      %s152 = sadd.s32 %s151, 1
      %p155 = scmp.eq.s32.totalorder %s30, 1
      %p156 = scmp.ne.s32.totalorder %s151, %s153
      %p157 = scmp.eq.s32.totalorder %s30, 0
      %p158 = por %p156, %p157
      %p159 = scmp.ne.s32.totalorder %s151, %s153
      %p160 = scmp.eq.s32.totalorder %s35, 1
      %p161 = por %p159, %p160
      %p162 = scmp.ne.s32.totalorder %s153, %s154
      %p163 = scmp.eq.s32.totalorder %s35, 0
      %p164 = por %p162, %p163
      %p165 = scmp.ne.s32.totalorder %s153, %s154
      %p166 = scmp.eq.s32.totalorder %s36, 1
      %p167 = por %p165, %p166
      %p169 = scmp.ne.s32.totalorder %s154, %s168
      %p170 = scmp.eq.s32.totalorder %s36, 0
      %p171 = por %p169, %p170
      %s173 = sadd.s32 %s172, 1
      %p176 = scmp.eq.s32.totalorder %s30, 1
      %p177 = scmp.ne.s32.totalorder %s172, %s174
      %p178 = scmp.eq.s32.totalorder %s30, 0
      %p179 = por %p177, %p178
      %p180 = scmp.ne.s32.totalorder %s172, %s174
      %p181 = scmp.eq.s32.totalorder %s35, 1
      %p182 = por %p180, %p181
      %p183 = scmp.ne.s32.totalorder %s174, %s175
      %p184 = scmp.eq.s32.totalorder %s35, 0
      %p185 = por %p183, %p184
      %p186 = scmp.ne.s32.totalorder %s174, %s175
      %p187 = scmp.eq.s32.totalorder %s36, 1
      %p188 = por %p186, %p187
      %p190 = scmp.ne.s32.totalorder %s175, %s189
      %p191 = scmp.eq.s32.totalorder %s36, 0
      %p192 = por %p190, %p191
      %s194 = sadd.s32 %s193, 1
      %p197 = scmp.eq.s32.totalorder %s30, 1
      %p198 = scmp.ne.s32.totalorder %s193, %s195
      %p199 = scmp.eq.s32.totalorder %s30, 0
      %p200 = por %p198, %p199
      %p201 = scmp.ne.s32.totalorder %s193, %s195
      %p202 = scmp.eq.s32.totalorder %s35, 1
      %p203 = por %p201, %p202
      %p204 = scmp.ne.s32.totalorder %s195, %s196
      %p205 = scmp.eq.s32.totalorder %s35, 0
      %p206 = por %p204, %p205
      %p207 = scmp.ne.s32.totalorder %s195, %s196
      %p208 = scmp.eq.s32.totalorder %s36, 1
      %p209 = por %p207, %p208
      %p211 = scmp.ne.s32.totalorder %s196, %s210
      %p212 = scmp.eq.s32.totalorder %s36, 0
      %p213 = por %p211, %p212
      %s215 = sadd.s32 %s214, 1
      %p218 = scmp.eq.s32.totalorder %s30, 1
      %p219 = scmp.ne.s32.totalorder %s214, %s216
      %p220 = scmp.eq.s32.totalorder %s30, 0
      %p221 = por %p219, %p220
      %p222 = scmp.ne.s32.totalorder %s214, %s216
      %p223 = scmp.eq.s32.totalorder %s35, 1
      %p224 = por %p222, %p223
      %p225 = scmp.ne.s32.totalorder %s216, %s217
      %p226 = scmp.eq.s32.totalorder %s35, 0
      %p227 = por %p225, %p226
      %p228 = scmp.ne.s32.totalorder %s216, %s217
      %p229 = scmp.eq.s32.totalorder %s36, 1
      %p230 = por %p228, %p229
      %p232 = scmp.ne.s32.totalorder %s217, %s231
      %p233 = scmp.eq.s32.totalorder %s36, 0
      %p234 = por %p232, %p233
      %s235 = ssub.s32 %s37, %s49
      %s236 = ssub.s32 %s38, %s45
      %s237 = sor.u32 %s235, %s236
      %p238 = scmp.eq.s32.totalorder %s237, 0
      %s240 = sadd.s32 %s239, 1
      %s241 = scalar_select %p238, %s239, %s240
      %p244 = pneg %p238
      %p245 = scmp.eq.s32.totalorder %s30, 1
      %p246 = por %p244, %p245
      %p247 = scmp.ne.s32.totalorder %s239, %s242
      %p248 = scmp.eq.s32.totalorder %s30, 0
      %p249 = por %p247, %p248
      %p250 = scmp.ne.s32.totalorder %s239, %s242
      %p251 = scmp.eq.s32.totalorder %s35, 1
      %p252 = por %p250, %p251
      %p253 = scmp.ne.s32.totalorder %s242, %s243
      %p254 = scmp.eq.s32.totalorder %s35, 0
      %p255 = por %p253, %p254
      %p256 = scmp.ne.s32.totalorder %s242, %s243
      %p257 = scmp.eq.s32.totalorder %s36, 1
      %p258 = por %p256, %p257
      %p260 = scmp.ne.s32.totalorder %s243, %s259
      %p261 = scmp.eq.s32.totalorder %s36, 0
      %p262 = por %p260, %p261
      %s263 = ssub.s32 %s37, %s49
      %s264 = ssub.s32 %s38, %s45
      %s265 = sor.u32 %s263, %s264
      %p266 = scmp.eq.s32.totalorder %s265, 0
      %s268 = sadd.s32 %s267, 1
      %s269 = scalar_select %p266, %s267, %s268
      %p272 = pneg %p266
      %p273 = scmp.eq.s32.totalorder %s30, 1
      %p274 = por %p272, %p273
      %p275 = scmp.ne.s32.totalorder %s267, %s270
      %p276 = scmp.eq.s32.totalorder %s30, 0
      %p277 = por %p275, %p276
      %p278 = scmp.ne.s32.totalorder %s267, %s270
      %p279 = scmp.eq.s32.totalorder %s35, 1
      %p280 = por %p278, %p279
      %p281 = scmp.ne.s32.totalorder %s270, %s271
      %p282 = scmp.eq.s32.totalorder %s35, 0
      %p283 = por %p281, %p282
      %p284 = scmp.ne.s32.totalorder %s270, %s271
      %p285 = scmp.eq.s32.totalorder %s36, 1
      %p286 = por %p284, %p285
      %p288 = scmp.ne.s32.totalorder %s271, %s287
      %p289 = scmp.eq.s32.totalorder %s36, 0
      %p290 = por %p288, %p289
      %p291 = scmp.le.s32.totalorder 1, %s30
      %p292 = scmp.lt.s32.totalorder %s30, 3
      %p293 = pnand %p291, %p292
      %p294 = pneg %p293
      // Predicated region
      $region9: #{tpu_custom_call.1} parent=5 // pred_check
        _
      $region10: #{tpu_custom_call.1} parent=5 // pred_check_branch
        %296 = sbr.rel (%p293) target = $region12
      $region11: #{tpu_custom_call.1} parent=5 // pred_region
        %s297 = ssub.s32 %s30, 1
        // Predicated region
        $region13: #{tpu_custom_call.1} parent=11 // pred_check
          %p298 = pneg %p143
        $region14: #{tpu_custom_call.1} parent=11 // pred_check_branch
          %300 = sbr.rel (%p298) target = $region16
        $region15: #{tpu_custom_call.1} parent=11 // pred_region
          %s302 = ssub.s32 2048, 2048
          %303 = vsyncadd [#allocation11], %s302
          %s304 = sshll.u32 [#allocation10], 4
          %s305 = int_to_ptr.vmem [resolvable:$true] %s304
          %310 = dma.hbm_to_vmem [thread:$0]  %s3, 2048, %s305, [#allocation11], 128, 128, 8
        $region16: #{tpu_custom_call.1} parent=11 // pred_fallthru
          _
        // Predicated region
        $region17: #{tpu_custom_call.1} parent=11 // pred_check
          %p311 = pneg %p164
        $region18: #{tpu_custom_call.1} parent=11 // pred_check_branch
          %313 = sbr.rel (%p311) target = $region20
        $region19: #{tpu_custom_call.1} parent=11 // pred_region
          %s315 = ssub.s32 2048, 2048
          %316 = vsyncadd [#allocation11], %s315
          %s317 = sshll.u32 [#allocation12], 4
          %s318 = int_to_ptr.vmem [resolvable:$true] %s317
          %323 = dma.hbm_to_vmem [thread:$0]  %s4, 2048, %s318, [#allocation11], 128, 128, 8
        $region20: #{tpu_custom_call.1} parent=11 // pred_fallthru
          _
        // Predicated region
        $region21: #{tpu_custom_call.1} parent=11 // pred_check
          %p324 = pneg %p185
        $region22: #{tpu_custom_call.1} parent=11 // pred_check_branch
          %326 = sbr.rel (%p324) target = $region24
        $region23: #{tpu_custom_call.1} parent=11 // pred_region
          %s328 = ssub.s32 2048, 2048
          %329 = vsyncadd [#allocation14], %s328
          %s330 = sshll.u32 [#allocation13], 4
          %s331 = int_to_ptr.vmem [resolvable:$true] %s330
          %336 = dma.hbm_to_vmem [thread:$0]  %s5, 2048, %s331, [#allocation14], 128, 128, 8
        $region24: #{tpu_custom_call.1} parent=11 // pred_fallthru
          _
        // Predicated region
        $region25: #{tpu_custom_call.1} parent=11 // pred_check
          %p337 = pneg %p206
        $region26: #{tpu_custom_call.1} parent=11 // pred_check_branch
          %339 = sbr.rel (%p337) target = $region28
        $region27: #{tpu_custom_call.1} parent=11 // pred_region
          %s341 = ssub.s32 2048, 2048
          %342 = vsyncadd [#allocation14], %s341
          %s343 = sshll.u32 [#allocation15], 4
          %s344 = int_to_ptr.vmem [resolvable:$true] %s343
          %349 = dma.hbm_to_vmem [thread:$0]  %s6, 2048, %s344, [#allocation14], 128, 128, 8
        $region28: #{tpu_custom_call.1} parent=11 // pred_fallthru
          _
        // Predicated region
        $region29: #{tpu_custom_call.1} parent=11 // pred_check
          %p350 = pneg %p227
        $region30: #{tpu_custom_call.1} parent=11 // pred_check_branch
          %352 = sbr.rel (%p350) target = $region32
        $region31: #{tpu_custom_call.1} parent=11 // pred_region
          _
        $region32: #{tpu_custom_call.1} parent=11 // pred_fallthru
          _
      $region12: #{tpu_custom_call.1} parent=5 // pred_fallthru
        _
      %p353 = scmp.lt.s32.totalorder %s30, 2
      // Predicated region
      $region33: #{tpu_custom_call.1} parent=5 // pred_check
        %p354 = pneg %p353
      $region34: #{tpu_custom_call.1} parent=5 // pred_check_branch
        %356 = sbr.rel (%p354) target = $region36
      $region35: #{tpu_custom_call.1} parent=5 // pred_region
        // Predicated region
        $region37: #{tpu_custom_call.1} parent=35 // pred_check
          %p357 = pneg %p64
        $region38: #{tpu_custom_call.1} parent=35 // pred_check_branch
          %359 = sbr.rel (%p357) target = $region40
        $region39: #{tpu_custom_call.1} parent=35 // pred_region
          %s360 = sand.u32 %s54, 1
          %s361 = scalar_lea.sflag [#allocation5], %s360
          %s362 = sand.u32 %s54, 1
          %s363 = smul.addr %s362, 128
          %s364 = scalar_lea.vmem [#allocation4], %s363
          %s365 = smul.u32 16, %s38
          %s367 = ssub.s32 2048, 2048
          %368 = vsyncadd %s361, %s367
          %s369 = smul.addr %s37, 16
          %s370 = sadd.s32 %s365, %s369
          %s371 = smul.addr %s370, 128
          %s372 = scalar_lea.hbm %s0, %s371
          %s373 = sshll.u32 %s364, 4
          %s374 = int_to_ptr.vmem [resolvable:$true] %s373
          %379 = dma.hbm_to_vmem [thread:$0]  %s372, 2048, %s374, %s361, 128, 128, 8
        $region40: #{tpu_custom_call.1} parent=35 // pred_fallthru
          _
        // Predicated region
        $region41: #{tpu_custom_call.1} parent=35 // pred_check
          %p380 = pneg %p90
        $region42: #{tpu_custom_call.1} parent=35 // pred_check_branch
          %382 = sbr.rel (%p380) target = $region44
        $region43: #{tpu_custom_call.1} parent=35 // pred_region
          %s383 = sand.u32 %s30, 1
          %s384 = scalar_lea.sflag [#allocation8], %s383
          %s385 = sand.u32 %s80, 1
          %s386 = smul.addr %s385, 128
          %s387 = scalar_lea.vmem [#allocation7], %s386
          %s389 = ssub.s32 2048, 2048
          %390 = vsyncadd %s384, %s389
          %s391 = smul.addr %s37, 16
          %s392 = smul.addr %s391, 128
          %s393 = scalar_lea.hbm %s1, %s392
          %s394 = sshll.u32 %s387, 4
          %s395 = int_to_ptr.vmem [resolvable:$true] %s394
          %400 = dma.hbm_to_vmem [thread:$0]  %s393, 2048, %s395, %s384, 128, 128, 8
        $region44: #{tpu_custom_call.1} parent=35 // pred_fallthru
          _
        // Predicated region
        $region45: #{tpu_custom_call.1} parent=35 // pred_check
          %p401 = pneg %p116
        $region46: #{tpu_custom_call.1} parent=35 // pred_check_branch
          %403 = sbr.rel (%p401) target = $region48
        $region47: #{tpu_custom_call.1} parent=35 // pred_region
          %s404 = sand.u32 %s30, 1
          %s405 = scalar_lea.sflag [#allocation8], %s404
          %s406 = sand.u32 %s106, 1
          %s407 = smul.addr %s406, 128
          %s408 = scalar_lea.vmem [#allocation9], %s407
          %s410 = ssub.s32 2048, 2048
          %411 = vsyncadd %s405, %s410
          %s412 = smul.addr %s37, 16
          %s413 = smul.addr %s412, 128
          %s414 = scalar_lea.hbm %s2, %s413
          %s415 = sshll.u32 %s408, 4
          %s416 = int_to_ptr.vmem [resolvable:$true] %s415
          %421 = dma.hbm_to_vmem [thread:$0]  %s414, 2048, %s416, %s405, 128, 128, 8
        $region48: #{tpu_custom_call.1} parent=35 // pred_fallthru
          _
      $region36: #{tpu_custom_call.1} parent=5 // pred_fallthru
        _
      %p422 = scmp.le.s32.totalorder 1, %s30
      %p423 = scmp.lt.s32.totalorder %s30, 3
      %p424 = pnand %p422, %p423
      %p425 = pneg %p424
      // Predicated region
      $region49: #{tpu_custom_call.1} parent=5 // pred_check
        _
      $region50: #{tpu_custom_call.1} parent=5 // pred_check_branch
        %427 = sbr.rel (%p424) target = $region52
      $region51: #{tpu_custom_call.1} parent=5 // pred_region
        %s428 = ssub.s32 %s30, 1
        %s429 = sand.u32 %s57, 1
        %s430 = scalar_lea.sflag [#allocation5], %s429
        %s431 = sand.u32 %s57, 1
        %s432 = smul.addr %s431, 128
        %s433 = scalar_lea.vmem [#allocation4], %s432
        // Predicated region
        $region53: #{tpu_custom_call.1} parent=51 // pred_check
          %p434 = pneg %p70
        $region54: #{tpu_custom_call.1} parent=51 // pred_check_branch
          %436 = sbr.rel (%p434) target = $region56
        $region55: #{tpu_custom_call.1} parent=51 // pred_region
          %437 = dma.done %s430, 2048
        $region56: #{tpu_custom_call.1} parent=51 // pred_fallthru
          _
        %s438 = sand.u32 %s35, 1
        %s439 = scalar_lea.sflag [#allocation8], %s438
        %s440 = sand.u32 %s83, 1
        %s441 = smul.addr %s440, 128
        %s442 = scalar_lea.vmem [#allocation7], %s441
        // Predicated region
        $region57: #{tpu_custom_call.1} parent=51 // pred_check
          %p443 = pneg %p96
        $region58: #{tpu_custom_call.1} parent=51 // pred_check_branch
          %445 = sbr.rel (%p443) target = $region60
        $region59: #{tpu_custom_call.1} parent=51 // pred_region
          %446 = dma.done %s439, 2048
        $region60: #{tpu_custom_call.1} parent=51 // pred_fallthru
          _
        %s447 = sand.u32 %s35, 1
        %s448 = scalar_lea.sflag [#allocation8], %s447
        %s449 = sand.u32 %s109, 1
        %s450 = smul.addr %s449, 128
        %s451 = scalar_lea.vmem [#allocation9], %s450
        // Predicated region
        $region61: #{tpu_custom_call.1} parent=51 // pred_check
          %p452 = pneg %p122
        $region62: #{tpu_custom_call.1} parent=51 // pred_check_branch
          %454 = sbr.rel (%p452) target = $region64
        $region63: #{tpu_custom_call.1} parent=51 // pred_region
          %455 = dma.done %s448, 2048
        $region64: #{tpu_custom_call.1} parent=51 // pred_fallthru
          _
        // Predicated region
        $region65: #{tpu_custom_call.1} parent=51 // pred_check
          %p456 = pneg %p143
        $region66: #{tpu_custom_call.1} parent=51 // pred_check_branch
          %458 = sbr.rel (%p456) target = $region68
        $region67: #{tpu_custom_call.1} parent=51 // pred_region
          %459 = dma.done [#allocation11], 2048
        $region68: #{tpu_custom_call.1} parent=51 // pred_fallthru
          _
        // Predicated region
        $region69: #{tpu_custom_call.1} parent=51 // pred_check
          %p460 = pneg %p164
        $region70: #{tpu_custom_call.1} parent=51 // pred_check_branch
          %462 = sbr.rel (%p460) target = $region72
        $region71: #{tpu_custom_call.1} parent=51 // pred_region
          %463 = dma.done [#allocation11], 2048
        $region72: #{tpu_custom_call.1} parent=51 // pred_fallthru
          _
        // Predicated region
        $region73: #{tpu_custom_call.1} parent=51 // pred_check
          %p464 = pneg %p185
        $region74: #{tpu_custom_call.1} parent=51 // pred_check_branch
          %466 = sbr.rel (%p464) target = $region76
        $region75: #{tpu_custom_call.1} parent=51 // pred_region
          %467 = dma.done [#allocation14], 2048
        $region76: #{tpu_custom_call.1} parent=51 // pred_fallthru
          _
        // Predicated region
        $region77: #{tpu_custom_call.1} parent=51 // pred_check
          %p468 = pneg %p206
        $region78: #{tpu_custom_call.1} parent=51 // pred_check_branch
          %470 = sbr.rel (%p468) target = $region80
        $region79: #{tpu_custom_call.1} parent=51 // pred_region
          %471 = dma.done [#allocation14], 2048
        $region80: #{tpu_custom_call.1} parent=51 // pred_fallthru
          _
        %s472 = sand.u32 %s57, 1
        %s473 = scalar_lea.sflag [#allocation5], %s472
        %s474 = sand.u32 %s57, 1
        %s475 = smul.addr %s474, 128
        %s476 = scalar_lea.vmem [#allocation4], %s475
        %p477 = pneg %p70
        %p478 = pneg %p67
        %s479 = sand.u32 %s35, 1
        %s480 = scalar_lea.sflag [#allocation8], %s479
        %s481 = sand.u32 %s83, 1
        %s482 = smul.addr %s481, 128
        %s483 = scalar_lea.vmem [#allocation7], %s482
        %p484 = pneg %p96
        %p485 = pneg %p93
        %s486 = sand.u32 %s35, 1
        %s487 = scalar_lea.sflag [#allocation8], %s486
        %s488 = sand.u32 %s109, 1
        %s489 = smul.addr %s488, 128
        %s490 = scalar_lea.vmem [#allocation9], %s489
        %p491 = pneg %p122
        %p492 = pneg %p119
        %p493 = pneg %p143
        %p494 = pneg %p140
        %p495 = pneg %p164
        %p496 = pneg %p161
        %p497 = pneg %p185
        %p498 = pneg %p182
        %p499 = pneg %p206
        %p500 = pneg %p203
        %p501 = pneg %p227
        %p502 = pneg %p224
        %p503 = pneg %p255
        %p504 = pneg %p252
        %s505 = sand.u32 %s242, 1
        %s506 = scalar_lea.sflag [#allocation6], %s505
        %s507 = sand.u32 %s242, 1
        %s508 = smul.addr %s507, 512
        %s509 = scalar_lea.vmem [#allocation16], %s508
        %p510 = pneg %p283
        %p511 = pneg %p280
        %s512 = sand.u32 %s270, 1
        %s513 = scalar_lea.sflag [#allocation18], %s512
        %s514 = sand.u32 %s270, 1
        %s515 = smul.addr %s514, 128
        %s516 = scalar_lea.vmem [#allocation17], %s515
        %s517 = smul.u32 16, %s40
        %s518 = smul.u32 16, %s40
        %s519 = smul.u32 16, %s40
        %p520 = scmp.eq.s32.totalorder %s40, 0
        // Predicated region
        $region81: #{tpu_custom_call.1} parent=51 // pred_check
          %p521 = pneg %p520
        $region82: #{tpu_custom_call.1} parent=51 // pred_check_branch
          %523 = sbr.rel (%p521) target = $region84
        $region83: #{tpu_custom_call.1} parent=51 // pred_region
          %v524 = vld [vmem:[%s442] sm:$0xff]
          %v525 = vld [vmem:[%s442 + $0x8] sm:$0xff]
          %v526 = vld [vmem:[%s442 + $0x10] sm:$0xff]
          %v527 = vld [vmem:[%s442 + $0x18] sm:$0xff]
          %v528 = vld [vmem:[%s442 + $0x20] sm:$0xff]
          %v529 = vld [vmem:[%s442 + $0x28] sm:$0xff]
          %v530 = vld [vmem:[%s442 + $0x30] sm:$0xff]
          %v531 = vld [vmem:[%s442 + $0x38] sm:$0xff]
          %v532 = vld [vmem:[%s442 + $0x40] sm:$0xff]
          %v533 = vld [vmem:[%s442 + $0x48] sm:$0xff]
          %v534 = vld [vmem:[%s442 + $0x50] sm:$0xff]
          %v535 = vld [vmem:[%s442 + $0x58] sm:$0xff]
          %v536 = vld [vmem:[%s442 + $0x60] sm:$0xff]
          %v537 = vld [vmem:[%s442 + $0x68] sm:$0xff]
          %v538 = vld [vmem:[%s442 + $0x70] sm:$0xff]
          %v539 = vld [vmem:[%s442 + $0x78] sm:$0xff]
          %v540 = vld [vmem:[%s451] sm:$0xff]
          %v541 = vld [vmem:[%s451 + $0x8] sm:$0xff]
          %v542 = vld [vmem:[%s451 + $0x10] sm:$0xff]
          %v543 = vld [vmem:[%s451 + $0x18] sm:$0xff]
          %v544 = vld [vmem:[%s451 + $0x20] sm:$0xff]
          %v545 = vld [vmem:[%s451 + $0x28] sm:$0xff]
          %v546 = vld [vmem:[%s451 + $0x30] sm:$0xff]
          %v547 = vld [vmem:[%s451 + $0x38] sm:$0xff]
          %v548 = vld [vmem:[%s451 + $0x40] sm:$0xff]
          %v549 = vld [vmem:[%s451 + $0x48] sm:$0xff]
          %v550 = vld [vmem:[%s451 + $0x50] sm:$0xff]
          %v551 = vld [vmem:[%s451 + $0x58] sm:$0xff]
          %v552 = vld [vmem:[%s451 + $0x60] sm:$0xff]
          %v553 = vld [vmem:[%s451 + $0x68] sm:$0xff]
          %v554 = vld [vmem:[%s451 + $0x70] sm:$0xff]
          %v555 = vld [vmem:[%s451 + $0x78] sm:$0xff]
          %v556 = vld [vmem:[#allocation12] sm:$0xff]
          %v557 = vld [vmem:[#allocation12 + $0x8] sm:$0xff]
          %v558 = vld [vmem:[#allocation12 + $0x10] sm:$0xff]
          %v559 = vld [vmem:[#allocation12 + $0x18] sm:$0xff]
          %v560 = vld [vmem:[#allocation12 + $0x20] sm:$0xff]
          %v561 = vld [vmem:[#allocation12 + $0x28] sm:$0xff]
          %v562 = vld [vmem:[#allocation12 + $0x30] sm:$0xff]
          %v563 = vld [vmem:[#allocation12 + $0x38] sm:$0xff]
          %v564 = vld [vmem:[#allocation12 + $0x40] sm:$0xff]
          %v565 = vld [vmem:[#allocation12 + $0x48] sm:$0xff]
          %v566 = vld [vmem:[#allocation12 + $0x50] sm:$0xff]
          %v567 = vld [vmem:[#allocation12 + $0x58] sm:$0xff]
          %v568 = vld [vmem:[#allocation12 + $0x60] sm:$0xff]
          %v569 = vld [vmem:[#allocation12 + $0x68] sm:$0xff]
          %v570 = vld [vmem:[#allocation12 + $0x70] sm:$0xff]
          %v571 = vld [vmem:[#allocation12 + $0x78] sm:$0xff]
          %572 = vmatprep.subr.mxu0 0.0
          %573 = vmatpush1.msra.mxu0 %v556
          %574 = vmatprep.subr.mxu0 0.0
          %575 = vmatpush1.msra.mxu0 %v557
          %576 = vmatprep.subr.mxu0 0.0
          %577 = vmatpush1.msra.mxu0 %v558
          %578 = vmatprep.subr.mxu0 0.0
          %579 = vmatpush1.msra.mxu0 %v559
          %580 = vmatprep.subr.mxu0 0.0
          %581 = vmatpush1.msra.mxu0 %v560
          %582 = vmatprep.subr.mxu0 0.0
          %583 = vmatpush1.msra.mxu0 %v561
          %584 = vmatprep.subr.mxu0 0.0
          %585 = vmatpush1.msra.mxu0 %v562
          %586 = vmatprep.subr.mxu0 0.0
          %587 = vmatpush1.msra.mxu0 %v563
          %588 = vmatprep.subr.mxu0 0.0
          %589 = vmatpush1.msra.mxu0 %v564
          %590 = vmatprep.subr.mxu0 0.0
          %591 = vmatpush1.msra.mxu0 %v565
          %592 = vmatprep.subr.mxu0 0.0
          %593 = vmatpush1.msra.mxu0 %v566
          %594 = vmatprep.subr.mxu0 0.0
          %595 = vmatpush1.msra.mxu0 %v567
          %596 = vmatprep.subr.mxu0 0.0
          %597 = vmatpush1.msra.mxu0 %v568
          %598 = vmatprep.subr.mxu0 0.0
          %599 = vmatpush1.msra.mxu0 %v569
          %600 = vmatprep.subr.mxu0 0.0
          %601 = vmatpush1.msra.mxu0 %v570
          %602 = vmatprep.subr.mxu0 0.0
          %603 = vmatpush1.msra.mxu0 %v571
          %604 = vmatprep.subr.mxu0 0.0
          %605 = vmatpush1.msra.mxu0 0.0
          %606 = vmatprep.subr.mxu0 0.0
          %607 = vmatpush1.msra.mxu0 0.0
          %608 = vmatprep.subr.mxu0 0.0
          %609 = vmatpush1.msra.mxu0 0.0
          %610 = vmatprep.subr.mxu0 0.0
          %611 = vmatpush1.msra.mxu0 0.0
          %612 = vmatprep.subr.mxu0 0.0
          %613 = vmatpush1.msra.mxu0 0.0
          %614 = vmatprep.subr.mxu0 0.0
          %615 = vmatpush1.msra.mxu0 0.0
          %616 = vmatprep.subr.mxu0 0.0
          %617 = vmatpush1.msra.mxu0 0.0
          %618 = vmatprep.subr.mxu0 0.0
          %619 = vmatpush1.msra.mxu0 0.0
          %620 = vmatprep.subr.mxu0 0.0
          %621 = vmatpush1.msra.mxu0 0.0
          %622 = vmatprep.subr.mxu0 0.0
          %623 = vmatpush1.msra.mxu0 0.0
          %624 = vmatprep.subr.mxu0 0.0
          %625 = vmatpush1.msra.mxu0 0.0
          %626 = vmatprep.subr.mxu0 0.0
          %627 = vmatpush1.msra.mxu0 0.0
          %628 = vmatprep.subr.mxu0 0.0
          %629 = vmatpush1.msra.mxu0 0.0
          %630 = vmatprep.subr.mxu0 0.0
          %631 = vmatpush1.msra.mxu0 0.0
          %632 = vmatprep.subr.mxu0 0.0
          %633 = vmatpush1.msra.mxu0 0.0
          %634 = vmatprep.subr.mxu0 0.0
          %635 = vmatpush1.msra.mxu0 0.0
          %636 = vmatprep.mubr.f32.mxu0 0.0
          %637 = vmatmul.mubr.f32.gmra.mrb[0].mxu0 %v524
          %v638 = vpop.f32.mrb[0].mxu0
          %v639 = vadd.f32 0.0, %v638
          %v640 = vpop.f32.mrb[0].mxu0
          %641 = vmatprep.mubr.f32.mxu0 0.0
          %642 = vmatmul.mubr.f32.gmra.mrb[0].mxu0 %v525
          %v643 = vpop.f32.mrb[0].mxu0
          %v644 = vadd.f32 0.0, %v643
          %v645 = vpop.f32.mrb[0].mxu0
          %646 = vmatprep.mubr.f32.mxu0 0.0
          %647 = vmatmul.mubr.f32.gmra.mrb[0].mxu0 %v526
          %v648 = vpop.f32.mrb[0].mxu0
          %v649 = vadd.f32 0.0, %v648
          %v650 = vpop.f32.mrb[0].mxu0
          %651 = vmatprep.mubr.f32.mxu0 0.0
          %652 = vmatmul.mubr.f32.gmra.mrb[0].mxu0 %v527
          %v653 = vpop.f32.mrb[0].mxu0
          %v654 = vadd.f32 0.0, %v653
          %v655 = vpop.f32.mrb[0].mxu0
          %656 = vmatprep.mubr.f32.mxu0 0.0
          %657 = vmatmul.mubr.f32.gmra.mrb[0].mxu0 %v528
          %v658 = vpop.f32.mrb[0].mxu0
          %v659 = vadd.f32 0.0, %v658
          %v660 = vpop.f32.mrb[0].mxu0
          %661 = vmatprep.mubr.f32.mxu0 0.0
          %662 = vmatmul.mubr.f32.gmra.mrb[0].mxu0 %v529
          %v663 = vpop.f32.mrb[0].mxu0
          %v664 = vadd.f32 0.0, %v663
          %v665 = vpop.f32.mrb[0].mxu0
          %666 = vmatprep.mubr.f32.mxu0 0.0
          %667 = vmatmul.mubr.f32.gmra.mrb[0].mxu0 %v530
          %v668 = vpop.f32.mrb[0].mxu0
          %v669 = vadd.f32 0.0, %v668
          %v670 = vpop.f32.mrb[0].mxu0
          %671 = vmatprep.mubr.f32.mxu0 0.0
          %672 = vmatmul.mubr.f32.gmra.mrb[0].mxu0 %v531
          %v673 = vpop.f32.mrb[0].mxu0
          %v674 = vadd.f32 0.0, %v673
          %v675 = vpop.f32.mrb[0].mxu0
          %676 = vmatprep.mubr.f32.mxu0 0.0
          %677 = vmatmul.mubr.f32.gmra.mrb[0].mxu0 %v532
          %v678 = vpop.f32.mrb[0].mxu0
          %v679 = vadd.f32 0.0, %v678
          %v680 = vpop.f32.mrb[0].mxu0
          %681 = vmatprep.mubr.f32.mxu0 0.0
          %682 = vmatmul.mubr.f32.gmra.mrb[0].mxu0 %v533
          %v683 = vpop.f32.mrb[0].mxu0
          %v684 = vadd.f32 0.0, %v683
          %v685 = vpop.f32.mrb[0].mxu0
          %686 = vmatprep.mubr.f32.mxu0 0.0
          %687 = vmatmul.mubr.f32.gmra.mrb[0].mxu0 %v534
          %v688 = vpop.f32.mrb[0].mxu0
          %v689 = vadd.f32 0.0, %v688
          %v690 = vpop.f32.mrb[0].mxu0
          %691 = vmatprep.mubr.f32.mxu0 0.0
          %692 = vmatmul.mubr.f32.gmra.mrb[0].mxu0 %v535
          %v693 = vpop.f32.mrb[0].mxu0
          %v694 = vadd.f32 0.0, %v693
          %v695 = vpop.f32.mrb[0].mxu0
          %696 = vmatprep.mubr.f32.mxu0 0.0
          %697 = vmatmul.mubr.f32.gmra.mrb[0].mxu0 %v536
          %v698 = vpop.f32.mrb[0].mxu0
          %v699 = vadd.f32 0.0, %v698
          %v700 = vpop.f32.mrb[0].mxu0
          %701 = vmatprep.mubr.f32.mxu0 0.0
          %702 = vmatmul.mubr.f32.gmra.mrb[0].mxu0 %v537
          %v703 = vpop.f32.mrb[0].mxu0
          %v704 = vadd.f32 0.0, %v703
          %v705 = vpop.f32.mrb[0].mxu0
          %706 = vmatprep.mubr.f32.mxu0 0.0
          %707 = vmatmul.mubr.f32.gmra.mrb[0].mxu0 %v538
          %v708 = vpop.f32.mrb[0].mxu0
          %v709 = vadd.f32 0.0, %v708
          %v710 = vpop.f32.mrb[0].mxu0
          %711 = vmatprep.mubr.f32.mxu0 0.0
          %712 = vmatmul.mubr.f32.gmra.mrb[0].mxu0 %v539
          %v713 = vpop.f32.mrb[0].mxu0
          %v714 = vadd.f32 0.0, %v713
          %v715 = vpop.f32.mrb[0].mxu0
          %716 = vdwg.mxu0
          %717 = vst [vmem:[#allocation2] sm:$0xff] %v639
          %718 = vst [vmem:[#allocation2 + $0x8] sm:$0xff] %v644
          %719 = vst [vmem:[#allocation2 + $0x10] sm:$0xff] %v649
          %720 = vst [vmem:[#allocation2 + $0x18] sm:$0xff] %v654
          %721 = vst [vmem:[#allocation2 + $0x20] sm:$0xff] %v659
          %722 = vst [vmem:[#allocation2 + $0x28] sm:$0xff] %v664
          %723 = vst [vmem:[#allocation2 + $0x30] sm:$0xff] %v669
          %724 = vst [vmem:[#allocation2 + $0x38] sm:$0xff] %v674
          %725 = vst [vmem:[#allocation2 + $0x40] sm:$0xff] %v679
          %726 = vst [vmem:[#allocation2 + $0x48] sm:$0xff] %v684
          %727 = vst [vmem:[#allocation2 + $0x50] sm:$0xff] %v689
          %728 = vst [vmem:[#allocation2 + $0x58] sm:$0xff] %v694
          %729 = vst [vmem:[#allocation2 + $0x60] sm:$0xff] %v699
          %730 = vst [vmem:[#allocation2 + $0x68] sm:$0xff] %v704
          %731 = vst [vmem:[#allocation2 + $0x70] sm:$0xff] %v709
          %732 = vst [vmem:[#allocation2 + $0x78] sm:$0xff] %v714
          %v733 = vld [vmem:[#allocation13] sm:$0xff]
          %v734 = vld [vmem:[#allocation13 + $0x8] sm:$0xff]
          %v735 = vld [vmem:[#allocation13 + $0x10] sm:$0xff]
          %v736 = vld [vmem:[#allocation13 + $0x18] sm:$0xff]
          %v737 = vld [vmem:[#allocation13 + $0x20] sm:$0xff]
          %v738 = vld [vmem:[#allocation13 + $0x28] sm:$0xff]
          %v739 = vld [vmem:[#allocation13 + $0x30] sm:$0xff]
          %v740 = vld [vmem:[#allocation13 + $0x38] sm:$0xff]
          %v741 = vld [vmem:[#allocation13 + $0x40] sm:$0xff]
          %v742 = vld [vmem:[#allocation13 + $0x48] sm:$0xff]
          %v743 = vld [vmem:[#allocation13 + $0x50] sm:$0xff]
          %v744 = vld [vmem:[#allocation13 + $0x58] sm:$0xff]
          %v745 = vld [vmem:[#allocation13 + $0x60] sm:$0xff]
          %v746 = vld [vmem:[#allocation13 + $0x68] sm:$0xff]
          %v747 = vld [vmem:[#allocation13 + $0x70] sm:$0xff]
          %v748 = vld [vmem:[#allocation13 + $0x78] sm:$0xff]
          %749 = vmatprep.subr.mxu0 0.0
          %750 = vmatpush1.msra.mxu0 %v733
          %751 = vmatprep.subr.mxu0 0.0
          %752 = vmatpush1.msra.mxu0 %v734
          %753 = vmatprep.subr.mxu0 0.0
          %754 = vmatpush1.msra.mxu0 %v735
          %755 = vmatprep.subr.mxu0 0.0
          %756 = vmatpush1.msra.mxu0 %v736
          %757 = vmatprep.subr.mxu0 0.0
          %758 = vmatpush1.msra.mxu0 %v737
          %759 = vmatprep.subr.mxu0 0.0
          %760 = vmatpush1.msra.mxu0 %v738
          %761 = vmatprep.subr.mxu0 0.0
          %762 = vmatpush1.msra.mxu0 %v739
          %763 = vmatprep.subr.mxu0 0.0
          %764 = vmatpush1.msra.mxu0 %v740
          %765 = vmatprep.subr.mxu0 0.0
          %766 = vmatpush1.msra.mxu0 %v741
          %767 = vmatprep.subr.mxu0 0.0
          %768 = vmatpush1.msra.mxu0 %v742
          %769 = vmatprep.subr.mxu0 0.0
          %770 = vmatpush1.msra.mxu0 %v743
          %771 = vmatprep.subr.mxu0 0.0
          %772 = vmatpush1.msra.mxu0 %v744
          %773 = vmatprep.subr.mxu0 0.0
          %774 = vmatpush1.msra.mxu0 %v745
          %775 = vmatprep.subr.mxu0 0.0
          %776 = vmatpush1.msra.mxu0 %v746
          %777 = vmatprep.subr.mxu0 0.0
          %778 = vmatpush1.msra.mxu0 %v747
          %779 = vmatprep.subr.mxu0 0.0
          %780 = vmatpush1.msra.mxu0 %v748
          %781 = vmatprep.subr.mxu0 0.0
          %782 = vmatpush1.msra.mxu0 0.0
          %783 = vmatprep.subr.mxu0 0.0
          %784 = vmatpush1.msra.mxu0 0.0
          %785 = vmatprep.subr.mxu0 0.0
          %786 = vmatpush1.msra.mxu0 0.0
          %787 = vmatprep.subr.mxu0 0.0
          %788 = vmatpush1.msra.mxu0 0.0
          %789 = vmatprep.subr.mxu0 0.0
          %790 = vmatpush1.msra.mxu0 0.0
          %791 = vmatprep.subr.mxu0 0.0
          %792 = vmatpush1.msra.mxu0 0.0
          %793 = vmatprep.subr.mxu0 0.0
          %794 = vmatpush1.msra.mxu0 0.0
          %795 = vmatprep.subr.mxu0 0.0
          %796 = vmatpush1.msra.mxu0 0.0
          %797 = vmatprep.subr.mxu0 0.0
          %798 = vmatpush1.msra.mxu0 0.0
          %799 = vmatprep.subr.mxu0 0.0
          %800 = vmatpush1.msra.mxu0 0.0
          %801 = vmatprep.subr.mxu0 0.0
          %802 = vmatpush1.msra.mxu0 0.0
          %803 = vmatprep.subr.mxu0 0.0
          %804 = vmatpush1.msra.mxu0 0.0
          %805 = vmatprep.subr.mxu0 0.0
          %806 = vmatpush1.msra.mxu0 0.0
          %807 = vmatprep.subr.mxu0 0.0
          %808 = vmatpush1.msra.mxu0 0.0
          %809 = vmatprep.subr.mxu0 0.0
          %810 = vmatpush1.msra.mxu0 0.0
          %811 = vmatprep.subr.mxu0 0.0
          %812 = vmatpush1.msra.mxu0 0.0
          %813 = vmatprep.mubr.f32.mxu0 0.0
          %814 = vmatmul.mubr.f32.gmra.mrb[0].mxu0 %v540
          %v815 = vpop.f32.mrb[0].mxu0
          %v816 = vadd.f32 0.0, %v815
          %v817 = vpop.f32.mrb[0].mxu0
          %818 = vmatprep.mubr.f32.mxu0 0.0
          %819 = vmatmul.mubr.f32.gmra.mrb[0].mxu0 %v541
          %v820 = vpop.f32.mrb[0].mxu0
          %v821 = vadd.f32 0.0, %v820
          %v822 = vpop.f32.mrb[0].mxu0
          %823 = vmatprep.mubr.f32.mxu0 0.0
          %824 = vmatmul.mubr.f32.gmra.mrb[0].mxu0 %v542
          %v825 = vpop.f32.mrb[0].mxu0
          %v826 = vadd.f32 0.0, %v825
          %v827 = vpop.f32.mrb[0].mxu0
          %828 = vmatprep.mubr.f32.mxu0 0.0
          %829 = vmatmul.mubr.f32.gmra.mrb[0].mxu0 %v543
          %v830 = vpop.f32.mrb[0].mxu0
          %v831 = vadd.f32 0.0, %v830
          %v832 = vpop.f32.mrb[0].mxu0
          %833 = vmatprep.mubr.f32.mxu0 0.0
          %834 = vmatmul.mubr.f32.gmra.mrb[0].mxu0 %v544
          %v835 = vpop.f32.mrb[0].mxu0
          %v836 = vadd.f32 0.0, %v835
          %v837 = vpop.f32.mrb[0].mxu0
          %838 = vmatprep.mubr.f32.mxu0 0.0
          %839 = vmatmul.mubr.f32.gmra.mrb[0].mxu0 %v545
          %v840 = vpop.f32.mrb[0].mxu0
          %v841 = vadd.f32 0.0, %v840
          %v842 = vpop.f32.mrb[0].mxu0
          %843 = vmatprep.mubr.f32.mxu0 0.0
          %844 = vmatmul.mubr.f32.gmra.mrb[0].mxu0 %v546
          %v845 = vpop.f32.mrb[0].mxu0
          %v846 = vadd.f32 0.0, %v845
          %v847 = vpop.f32.mrb[0].mxu0
          %848 = vmatprep.mubr.f32.mxu0 0.0
          %849 = vmatmul.mubr.f32.gmra.mrb[0].mxu0 %v547
          %v850 = vpop.f32.mrb[0].mxu0
          %v851 = vadd.f32 0.0, %v850
          %v852 = vpop.f32.mrb[0].mxu0
          %853 = vmatprep.mubr.f32.mxu0 0.0
          %854 = vmatmul.mubr.f32.gmra.mrb[0].mxu0 %v548
          %v855 = vpop.f32.mrb[0].mxu0
          %v856 = vadd.f32 0.0, %v855
          %v857 = vpop.f32.mrb[0].mxu0
          %858 = vmatprep.mubr.f32.mxu0 0.0
          %859 = vmatmul.mubr.f32.gmra.mrb[0].mxu0 %v549
          %v860 = vpop.f32.mrb[0].mxu0
          %v861 = vadd.f32 0.0, %v860
          %v862 = vpop.f32.mrb[0].mxu0
          %863 = vmatprep.mubr.f32.mxu0 0.0
          %864 = vmatmul.mubr.f32.gmra.mrb[0].mxu0 %v550
          %v865 = vpop.f32.mrb[0].mxu0
          %v866 = vadd.f32 0.0, %v865
          %v867 = vpop.f32.mrb[0].mxu0
          %868 = vmatprep.mubr.f32.mxu0 0.0
          %869 = vmatmul.mubr.f32.gmra.mrb[0].mxu0 %v551
          %v870 = vpop.f32.mrb[0].mxu0
          %v871 = vadd.f32 0.0, %v870
          %v872 = vpop.f32.mrb[0].mxu0
          %873 = vmatprep.mubr.f32.mxu0 0.0
          %874 = vmatmul.mubr.f32.gmra.mrb[0].mxu0 %v552
          %v875 = vpop.f32.mrb[0].mxu0
          %v876 = vadd.f32 0.0, %v875
          %v877 = vpop.f32.mrb[0].mxu0
          %878 = vmatprep.mubr.f32.mxu0 0.0
          %879 = vmatmul.mubr.f32.gmra.mrb[0].mxu0 %v553
          %v880 = vpop.f32.mrb[0].mxu0
          %v881 = vadd.f32 0.0, %v880
          %v882 = vpop.f32.mrb[0].mxu0
          %883 = vmatprep.mubr.f32.mxu0 0.0
          %884 = vmatmul.mubr.f32.gmra.mrb[0].mxu0 %v554
          %v885 = vpop.f32.mrb[0].mxu0
          %v886 = vadd.f32 0.0, %v885
          %v887 = vpop.f32.mrb[0].mxu0
          %888 = vmatprep.mubr.f32.mxu0 0.0
          %889 = vmatmul.mubr.f32.gmra.mrb[0].mxu0 %v555
          %v890 = vpop.f32.mrb[0].mxu0
          %v891 = vadd.f32 0.0, %v890
          %v892 = vpop.f32.mrb[0].mxu0
          %893 = vdwg.mxu0
          %894 = vst [vmem:[#allocation3] sm:$0xff] %v816
          %895 = vst [vmem:[#allocation3 + $0x8] sm:$0xff] %v821
          %896 = vst [vmem:[#allocation3 + $0x10] sm:$0xff] %v826
          %897 = vst [vmem:[#allocation3 + $0x18] sm:$0xff] %v831
          %898 = vst [vmem:[#allocation3 + $0x20] sm:$0xff] %v836
          %899 = vst [vmem:[#allocation3 + $0x28] sm:$0xff] %v841
          %900 = vst [vmem:[#allocation3 + $0x30] sm:$0xff] %v846
          %901 = vst [vmem:[#allocation3 + $0x38] sm:$0xff] %v851
          %902 = vst [vmem:[#allocation3 + $0x40] sm:$0xff] %v856
          %903 = vst [vmem:[#allocation3 + $0x48] sm:$0xff] %v861
          %904 = vst [vmem:[#allocation3 + $0x50] sm:$0xff] %v866
          %905 = vst [vmem:[#allocation3 + $0x58] sm:$0xff] %v871
          %906 = vst [vmem:[#allocation3 + $0x60] sm:$0xff] %v876
          %907 = vst [vmem:[#allocation3 + $0x68] sm:$0xff] %v881
          %908 = vst [vmem:[#allocation3 + $0x70] sm:$0xff] %v886
          %909 = vst [vmem:[#allocation3 + $0x78] sm:$0xff] %v891
        $region84: #{tpu_custom_call.1} parent=51 // pred_fallthru
          _
        %v910 = vld [vmem:[%s433] sm:$0xff]
        %v911 = vld [vmem:[%s433 + $0x8] sm:$0xff]
        %v912 = vld [vmem:[%s433 + $0x10] sm:$0xff]
        %v913 = vld [vmem:[%s433 + $0x18] sm:$0xff]
        %v914 = vld [vmem:[%s433 + $0x20] sm:$0xff]
        %v915 = vld [vmem:[%s433 + $0x28] sm:$0xff]
        %v916 = vld [vmem:[%s433 + $0x30] sm:$0xff]
        %v917 = vld [vmem:[%s433 + $0x38] sm:$0xff]
        %v918 = vld [vmem:[%s433 + $0x40] sm:$0xff]
        %v919 = vld [vmem:[%s433 + $0x48] sm:$0xff]
        %v920 = vld [vmem:[%s433 + $0x50] sm:$0xff]
        %v921 = vld [vmem:[%s433 + $0x58] sm:$0xff]
        %v922 = vld [vmem:[%s433 + $0x60] sm:$0xff]
        %v923 = vld [vmem:[%s433 + $0x68] sm:$0xff]
        %v924 = vld [vmem:[%s433 + $0x70] sm:$0xff]
        %v925 = vld [vmem:[%s433 + $0x78] sm:$0xff]
        %v926 = vld [vmem:[#allocation10] sm:$0xff]
        %v927 = vld [vmem:[#allocation10 + $0x8] sm:$0xff]
        %v928 = vld [vmem:[#allocation10 + $0x10] sm:$0xff]
        %v929 = vld [vmem:[#allocation10 + $0x18] sm:$0xff]
        %v930 = vld [vmem:[#allocation10 + $0x20] sm:$0xff]
        %v931 = vld [vmem:[#allocation10 + $0x28] sm:$0xff]
        %v932 = vld [vmem:[#allocation10 + $0x30] sm:$0xff]
        %v933 = vld [vmem:[#allocation10 + $0x38] sm:$0xff]
        %v934 = vld [vmem:[#allocation10 + $0x40] sm:$0xff]
        %v935 = vld [vmem:[#allocation10 + $0x48] sm:$0xff]
        %v936 = vld [vmem:[#allocation10 + $0x50] sm:$0xff]
        %v937 = vld [vmem:[#allocation10 + $0x58] sm:$0xff]
        %v938 = vld [vmem:[#allocation10 + $0x60] sm:$0xff]
        %v939 = vld [vmem:[#allocation10 + $0x68] sm:$0xff]
        %v940 = vld [vmem:[#allocation10 + $0x70] sm:$0xff]
        %v941 = vld [vmem:[#allocation10 + $0x78] sm:$0xff]
        %942 = vmatprep.subr.mxu0 0.0
        %943 = vmatpush1.msra.mxu0 %v926
        %944 = vmatprep.subr.mxu0 0.0
        %945 = vmatpush1.msra.mxu0 %v927
        %946 = vmatprep.subr.mxu0 0.0
        %947 = vmatpush1.msra.mxu0 %v928
        %948 = vmatprep.subr.mxu0 0.0
        %949 = vmatpush1.msra.mxu0 %v929
        %950 = vmatprep.subr.mxu0 0.0
        %951 = vmatpush1.msra.mxu0 %v930
        %952 = vmatprep.subr.mxu0 0.0
        %953 = vmatpush1.msra.mxu0 %v931
        %954 = vmatprep.subr.mxu0 0.0
        %955 = vmatpush1.msra.mxu0 %v932
        %956 = vmatprep.subr.mxu0 0.0
        %957 = vmatpush1.msra.mxu0 %v933
        %958 = vmatprep.subr.mxu0 0.0
        %959 = vmatpush1.msra.mxu0 %v934
        %960 = vmatprep.subr.mxu0 0.0
        %961 = vmatpush1.msra.mxu0 %v935
        %962 = vmatprep.subr.mxu0 0.0
        %963 = vmatpush1.msra.mxu0 %v936
        %964 = vmatprep.subr.mxu0 0.0
        %965 = vmatpush1.msra.mxu0 %v937
        %966 = vmatprep.subr.mxu0 0.0
        %967 = vmatpush1.msra.mxu0 %v938
        %968 = vmatprep.subr.mxu0 0.0
        %969 = vmatpush1.msra.mxu0 %v939
        %970 = vmatprep.subr.mxu0 0.0
        %971 = vmatpush1.msra.mxu0 %v940
        %972 = vmatprep.subr.mxu0 0.0
        %973 = vmatpush1.msra.mxu0 %v941
        %974 = vmatprep.subr.mxu0 0.0
        %975 = vmatpush1.msra.mxu0 0.0
        %976 = vmatprep.subr.mxu0 0.0
        %977 = vmatpush1.msra.mxu0 0.0
        %978 = vmatprep.subr.mxu0 0.0
        %979 = vmatpush1.msra.mxu0 0.0
        %980 = vmatprep.subr.mxu0 0.0
        %981 = vmatpush1.msra.mxu0 0.0
        %982 = vmatprep.subr.mxu0 0.0
        %983 = vmatpush1.msra.mxu0 0.0
        %984 = vmatprep.subr.mxu0 0.0
        %985 = vmatpush1.msra.mxu0 0.0
        %986 = vmatprep.subr.mxu0 0.0
        %987 = vmatpush1.msra.mxu0 0.0
        %988 = vmatprep.subr.mxu0 0.0
        %989 = vmatpush1.msra.mxu0 0.0
        %990 = vmatprep.subr.mxu0 0.0
        %991 = vmatpush1.msra.mxu0 0.0
        %992 = vmatprep.subr.mxu0 0.0
        %993 = vmatpush1.msra.mxu0 0.0
        %994 = vmatprep.subr.mxu0 0.0
        %995 = vmatpush1.msra.mxu0 0.0
        %996 = vmatprep.subr.mxu0 0.0
        %997 = vmatpush1.msra.mxu0 0.0
        %998 = vmatprep.subr.mxu0 0.0
        %999 = vmatpush1.msra.mxu0 0.0
        %1000 = vmatprep.subr.mxu0 0.0
        %1001 = vmatpush1.msra.mxu0 0.0
        %1002 = vmatprep.subr.mxu0 0.0
        %1003 = vmatpush1.msra.mxu0 0.0
        %1004 = vmatprep.subr.mxu0 0.0
        %1005 = vmatpush1.msra.mxu0 0.0
        %1006 = vmatprep.mubr.f32.mxu0 0.0
        %1007 = vmatmul.mubr.f32.gmra.mrb[0].mxu0 %v910
        %v1008 = vpop.f32.mrb[0].mxu0
        %v1009 = vadd.f32 0.0, %v1008
        %v1010 = vpop.f32.mrb[0].mxu0
        %1011 = vmatprep.mubr.f32.mxu0 0.0
        %1012 = vmatmul.mubr.f32.gmra.mrb[0].mxu0 %v911
        %v1013 = vpop.f32.mrb[0].mxu0
        %v1014 = vadd.f32 0.0, %v1013
        %v1015 = vpop.f32.mrb[0].mxu0
        %1016 = vmatprep.mubr.f32.mxu0 0.0
        %1017 = vmatmul.mubr.f32.gmra.mrb[0].mxu0 %v912
        %v1018 = vpop.f32.mrb[0].mxu0
        %v1019 = vadd.f32 0.0, %v1018
        %v1020 = vpop.f32.mrb[0].mxu0
        %1021 = vmatprep.mubr.f32.mxu0 0.0
        %1022 = vmatmul.mubr.f32.gmra.mrb[0].mxu0 %v913
        %v1023 = vpop.f32.mrb[0].mxu0
        %v1024 = vadd.f32 0.0, %v1023
        %v1025 = vpop.f32.mrb[0].mxu0
        %1026 = vmatprep.mubr.f32.mxu0 0.0
        %1027 = vmatmul.mubr.f32.gmra.mrb[0].mxu0 %v914
        %v1028 = vpop.f32.mrb[0].mxu0
        %v1029 = vadd.f32 0.0, %v1028
        %v1030 = vpop.f32.mrb[0].mxu0
        %1031 = vmatprep.mubr.f32.mxu0 0.0
        %1032 = vmatmul.mubr.f32.gmra.mrb[0].mxu0 %v915
        %v1033 = vpop.f32.mrb[0].mxu0
        %v1034 = vadd.f32 0.0, %v1033
        %v1035 = vpop.f32.mrb[0].mxu0
        %1036 = vmatprep.mubr.f32.mxu0 0.0
        %1037 = vmatmul.mubr.f32.gmra.mrb[0].mxu0 %v916
        %v1038 = vpop.f32.mrb[0].mxu0
        %v1039 = vadd.f32 0.0, %v1038
        %v1040 = vpop.f32.mrb[0].mxu0
        %1041 = vmatprep.mubr.f32.mxu0 0.0
        %1042 = vmatmul.mubr.f32.gmra.mrb[0].mxu0 %v917
        %v1043 = vpop.f32.mrb[0].mxu0
        %v1044 = vadd.f32 0.0, %v1043
        %v1045 = vpop.f32.mrb[0].mxu0
        %1046 = vmatprep.mubr.f32.mxu0 0.0
        %1047 = vmatmul.mubr.f32.gmra.mrb[0].mxu0 %v918
        %v1048 = vpop.f32.mrb[0].mxu0
        %v1049 = vadd.f32 0.0, %v1048
        %v1050 = vpop.f32.mrb[0].mxu0
        %1051 = vmatprep.mubr.f32.mxu0 0.0
        %1052 = vmatmul.mubr.f32.gmra.mrb[0].mxu0 %v919
        %v1053 = vpop.f32.mrb[0].mxu0
        %v1054 = vadd.f32 0.0, %v1053
        %v1055 = vpop.f32.mrb[0].mxu0
        %1056 = vmatprep.mubr.f32.mxu0 0.0
        %1057 = vmatmul.mubr.f32.gmra.mrb[0].mxu0 %v920
        %v1058 = vpop.f32.mrb[0].mxu0
        %v1059 = vadd.f32 0.0, %v1058
        %v1060 = vpop.f32.mrb[0].mxu0
        %1061 = vmatprep.mubr.f32.mxu0 0.0
        %1062 = vmatmul.mubr.f32.gmra.mrb[0].mxu0 %v921
        %v1063 = vpop.f32.mrb[0].mxu0
        %v1064 = vadd.f32 0.0, %v1063
        %v1065 = vpop.f32.mrb[0].mxu0
        %1066 = vmatprep.mubr.f32.mxu0 0.0
        %1067 = vmatmul.mubr.f32.gmra.mrb[0].mxu0 %v922
        %v1068 = vpop.f32.mrb[0].mxu0
        %v1069 = vadd.f32 0.0, %v1068
        %v1070 = vpop.f32.mrb[0].mxu0
        %1071 = vmatprep.mubr.f32.mxu0 0.0
        %1072 = vmatmul.mubr.f32.gmra.mrb[0].mxu0 %v923
        %v1073 = vpop.f32.mrb[0].mxu0
        %v1074 = vadd.f32 0.0, %v1073
        %v1075 = vpop.f32.mrb[0].mxu0
        %1076 = vmatprep.mubr.f32.mxu0 0.0
        %1077 = vmatmul.mubr.f32.gmra.mrb[0].mxu0 %v924
        %v1078 = vpop.f32.mrb[0].mxu0
        %v1079 = vadd.f32 0.0, %v1078
        %v1080 = vpop.f32.mrb[0].mxu0
        %1081 = vmatprep.mubr.f32.mxu0 0.0
        %1082 = vmatmul.mubr.f32.gmra.mrb[0].mxu0 %v925
        %v1083 = vpop.f32.mrb[0].mxu0
        %v1084 = vadd.f32 0.0, %v1083
        %v1085 = vpop.f32.mrb[0].mxu0
        %1086 = vdwg.mxu0
        %v1087 = vmul.f32 %v1009, 0.17677669
        %v1088 = vmul.f32 %v1014, 0.17677669
        %v1089 = vmul.f32 %v1019, 0.17677669
        %v1090 = vmul.f32 %v1024, 0.17677669
        %v1091 = vmul.f32 %v1029, 0.17677669
        %v1092 = vmul.f32 %v1034, 0.17677669
        %v1093 = vmul.f32 %v1039, 0.17677669
        %v1094 = vmul.f32 %v1044, 0.17677669
        %v1095 = vmul.f32 %v1049, 0.17677669
        %v1096 = vmul.f32 %v1054, 0.17677669
        %v1097 = vmul.f32 %v1059, 0.17677669
        %v1098 = vmul.f32 %v1064, 0.17677669
        %v1099 = vmul.f32 %v1069, 0.17677669
        %v1100 = vmul.f32 %v1074, 0.17677669
        %v1101 = vmul.f32 %v1079, 0.17677669
        %v1102 = vmul.f32 %v1084, 0.17677669
        %v1103 = vld [vmem:[#allocation2] sm:$0xff]
        %v1104 = vld [vmem:[#allocation2 + $0x8] sm:$0xff]
        %v1105 = vld [vmem:[#allocation2 + $0x10] sm:$0xff]
        %v1106 = vld [vmem:[#allocation2 + $0x18] sm:$0xff]
        %v1107 = vld [vmem:[#allocation2 + $0x20] sm:$0xff]
        %v1108 = vld [vmem:[#allocation2 + $0x28] sm:$0xff]
        %v1109 = vld [vmem:[#allocation2 + $0x30] sm:$0xff]
        %v1110 = vld [vmem:[#allocation2 + $0x38] sm:$0xff]
        %v1111 = vld [vmem:[#allocation2 + $0x40] sm:$0xff]
        %v1112 = vld [vmem:[#allocation2 + $0x48] sm:$0xff]
        %v1113 = vld [vmem:[#allocation2 + $0x50] sm:$0xff]
        %v1114 = vld [vmem:[#allocation2 + $0x58] sm:$0xff]
        %v1115 = vld [vmem:[#allocation2 + $0x60] sm:$0xff]
        %v1116 = vld [vmem:[#allocation2 + $0x68] sm:$0xff]
        %v1117 = vld [vmem:[#allocation2 + $0x70] sm:$0xff]
        %v1118 = vld [vmem:[#allocation2 + $0x78] sm:$0xff]
        %v1119 = vld [vmem:[#allocation3] sm:$0xff]
        %v1120 = vld [vmem:[#allocation3 + $0x8] sm:$0xff]
        %v1121 = vld [vmem:[#allocation3 + $0x10] sm:$0xff]
        %v1122 = vld [vmem:[#allocation3 + $0x18] sm:$0xff]
        %v1123 = vld [vmem:[#allocation3 + $0x20] sm:$0xff]
        %v1124 = vld [vmem:[#allocation3 + $0x28] sm:$0xff]
        %v1125 = vld [vmem:[#allocation3 + $0x30] sm:$0xff]
        %v1126 = vld [vmem:[#allocation3 + $0x38] sm:$0xff]
        %v1127 = vld [vmem:[#allocation3 + $0x40] sm:$0xff]
        %v1128 = vld [vmem:[#allocation3 + $0x48] sm:$0xff]
        %v1129 = vld [vmem:[#allocation3 + $0x50] sm:$0xff]
        %v1130 = vld [vmem:[#allocation3 + $0x58] sm:$0xff]
        %v1131 = vld [vmem:[#allocation3 + $0x60] sm:$0xff]
        %v1132 = vld [vmem:[#allocation3 + $0x68] sm:$0xff]
        %v1133 = vld [vmem:[#allocation3 + $0x70] sm:$0xff]
        %v1134 = vld [vmem:[#allocation3 + $0x78] sm:$0xff]
        %vm1135 = vcmask 261120
        %v1137 = vsel %vm1135, %v1087, 0
        %v1140 = vsel %vm1135, %v1088, 0
        %v1143 = vsel %vm1135, %v1089, 0
        %v1146 = vsel %vm1135, %v1090, 0
        %v1149 = vsel %vm1135, %v1091, 0
        %v1152 = vsel %vm1135, %v1092, 0
        %v1155 = vsel %vm1135, %v1093, 0
        %v1158 = vsel %vm1135, %v1094, 0
        %v1161 = vsel %vm1135, %v1095, 0
        %v1164 = vsel %vm1135, %v1096, 0
        %v1167 = vsel %vm1135, %v1097, 0
        %v1170 = vsel %vm1135, %v1098, 0
        %v1173 = vsel %vm1135, %v1099, 0
        %v1176 = vsel %vm1135, %v1100, 0
        %v1179 = vsel %vm1135, %v1101, 0
        %v1182 = vsel %vm1135, %v1102, 0
        %v1185 = vsel %vm1135, %v1103, 0
        %v1188 = vsel %vm1135, %v1104, 0
        %v1191 = vsel %vm1135, %v1105, 0
        %v1194 = vsel %vm1135, %v1106, 0
        %v1197 = vsel %vm1135, %v1107, 0
        %v1200 = vsel %vm1135, %v1108, 0
        %v1203 = vsel %vm1135, %v1109, 0
        %v1206 = vsel %vm1135, %v1110, 0
        %v1209 = vsel %vm1135, %v1111, 0
        %v1212 = vsel %vm1135, %v1112, 0
        %v1215 = vsel %vm1135, %v1113, 0
        %v1218 = vsel %vm1135, %v1114, 0
        %v1221 = vsel %vm1135, %v1115, 0
        %v1224 = vsel %vm1135, %v1116, 0
        %v1227 = vsel %vm1135, %v1117, 0
        %v1230 = vsel %vm1135, %v1118, 0
        %1232 = vmatprep.subr.mxu0 0.0
        %1233 = vmatpush1.xpose.msra.mxu0 %v1185
        %1234 = vmatprep.subr.mxu0 0.0
        %1235 = vmatpush1.xpose.msra.mxu0 %v1188
        %1236 = vmatprep.subr.mxu0 0.0
        %1237 = vmatpush1.xpose.msra.mxu0 %v1191
        %1238 = vmatprep.subr.mxu0 0.0
        %1239 = vmatpush1.xpose.msra.mxu0 %v1194
        %1240 = vmatprep.subr.mxu0 0.0
        %1241 = vmatpush1.xpose.msra.mxu0 %v1197
        %1242 = vmatprep.subr.mxu0 0.0
        %1243 = vmatpush1.xpose.msra.mxu0 %v1200
        %1244 = vmatprep.subr.mxu0 0.0
        %1245 = vmatpush1.xpose.msra.mxu0 %v1203
        %1246 = vmatprep.subr.mxu0 0.0
        %1247 = vmatpush1.xpose.msra.mxu0 %v1206
        %1248 = vmatprep.subr.mxu0 0.0
        %1249 = vmatpush1.xpose.msra.mxu0 %v1209
        %1250 = vmatprep.subr.mxu0 0.0
        %1251 = vmatpush1.xpose.msra.mxu0 %v1212
        %1252 = vmatprep.subr.mxu0 0.0
        %1253 = vmatpush1.xpose.msra.mxu0 %v1215
        %1254 = vmatprep.subr.mxu0 0.0
        %1255 = vmatpush1.xpose.msra.mxu0 %v1218
        %1256 = vmatprep.subr.mxu0 0.0
        %1257 = vmatpush1.xpose.msra.mxu0 %v1221
        %1258 = vmatprep.subr.mxu0 0.0
        %1259 = vmatpush1.xpose.msra.mxu0 %v1224
        %1260 = vmatprep.subr.mxu0 0.0
        %1261 = vmatpush1.xpose.msra.mxu0 %v1227
        %1262 = vmatprep.subr.mxu0 0.0
        %1263 = vmatpush1.xpose.msra.mxu0 %v1230
        %1264 = vmatprep.subr.mxu0 0.0
        %1265 = vmatpush1.xpose.msra.mxu0 0.0
        %1266 = vmatprep.subr.mxu0 0.0
        %1267 = vmatpush1.xpose.msra.mxu0 0.0
        %1268 = vmatprep.subr.mxu0 0.0
        %1269 = vmatpush1.xpose.msra.mxu0 0.0
        %1270 = vmatprep.subr.mxu0 0.0
        %1271 = vmatpush1.xpose.msra.mxu0 0.0
        %1272 = vmatprep.subr.mxu0 0.0
        %1273 = vmatpush1.xpose.msra.mxu0 0.0
        %1274 = vmatprep.subr.mxu0 0.0
        %1275 = vmatpush1.xpose.msra.mxu0 0.0
        %1276 = vmatprep.subr.mxu0 0.0
        %1277 = vmatpush1.xpose.msra.mxu0 0.0
        %1278 = vmatprep.subr.mxu0 0.0
        %1279 = vmatpush1.xpose.msra.mxu0 0.0
        %1280 = vmatprep.subr.mxu0 0.0
        %1281 = vmatpush1.xpose.msra.mxu0 0.0
        %1282 = vmatprep.subr.mxu0 0.0
        %1283 = vmatpush1.xpose.msra.mxu0 0.0
        %1284 = vmatprep.subr.mxu0 0.0
        %1285 = vmatpush1.xpose.msra.mxu0 0.0
        %1286 = vmatprep.subr.mxu0 0.0
        %1287 = vmatpush1.xpose.msra.mxu0 0.0
        %1288 = vmatprep.subr.mxu0 0.0
        %1289 = vmatpush1.xpose.msra.mxu0 0.0
        %1290 = vmatprep.subr.mxu0 0.0
        %1291 = vmatpush1.xpose.msra.mxu0 0.0
        %1292 = vmatprep.subr.mxu0 0.0
        %1293 = vmatpush1.xpose.msra.mxu0 0.0
        %1294 = vmatprep.subr.mxu0 0.0
        %1295 = vmatpush1.xpose.msra.mxu0 0.0
        %1296 = vmatprep.mubr.f32.mxu0 0.0
        %1297 = vmatmul.mubr.f32.gmra.mrb[0].mxu0 %v1137
        %v1298 = vpop.f32.mrb[0].mxu0
        %v1299 = vadd.f32 0.0, %v1298
        %v1300 = vpop.f32.mrb[0].mxu0
        %1301 = vmatprep.mubr.f32.mxu0 0.0
        %1302 = vmatmul.mubr.f32.gmra.mrb[0].mxu0 %v1140
        %v1303 = vpop.f32.mrb[0].mxu0
        %v1304 = vadd.f32 0.0, %v1303
        %v1305 = vpop.f32.mrb[0].mxu0
        %1306 = vmatprep.mubr.f32.mxu0 0.0
        %1307 = vmatmul.mubr.f32.gmra.mrb[0].mxu0 %v1143
        %v1308 = vpop.f32.mrb[0].mxu0
        %v1309 = vadd.f32 0.0, %v1308
        %v1310 = vpop.f32.mrb[0].mxu0
        %1311 = vmatprep.mubr.f32.mxu0 0.0
        %1312 = vmatmul.mubr.f32.gmra.mrb[0].mxu0 %v1146
        %v1313 = vpop.f32.mrb[0].mxu0
        %v1314 = vadd.f32 0.0, %v1313
        %v1315 = vpop.f32.mrb[0].mxu0
        %1316 = vmatprep.mubr.f32.mxu0 0.0
        %1317 = vmatmul.mubr.f32.gmra.mrb[0].mxu0 %v1149
        %v1318 = vpop.f32.mrb[0].mxu0
        %v1319 = vadd.f32 0.0, %v1318
        %v1320 = vpop.f32.mrb[0].mxu0
        %1321 = vmatprep.mubr.f32.mxu0 0.0
        %1322 = vmatmul.mubr.f32.gmra.mrb[0].mxu0 %v1152
        %v1323 = vpop.f32.mrb[0].mxu0
        %v1324 = vadd.f32 0.0, %v1323
        %v1325 = vpop.f32.mrb[0].mxu0
        %1326 = vmatprep.mubr.f32.mxu0 0.0
        %1327 = vmatmul.mubr.f32.gmra.mrb[0].mxu0 %v1155
        %v1328 = vpop.f32.mrb[0].mxu0
        %v1329 = vadd.f32 0.0, %v1328
        %v1330 = vpop.f32.mrb[0].mxu0
        %1331 = vmatprep.mubr.f32.mxu0 0.0
        %1332 = vmatmul.mubr.f32.gmra.mrb[0].mxu0 %v1158
        %v1333 = vpop.f32.mrb[0].mxu0
        %v1334 = vadd.f32 0.0, %v1333
        %v1335 = vpop.f32.mrb[0].mxu0
        %1336 = vmatprep.mubr.f32.mxu0 0.0
        %1337 = vmatmul.mubr.f32.gmra.mrb[0].mxu0 %v1161
        %v1338 = vpop.f32.mrb[0].mxu0
        %v1339 = vadd.f32 0.0, %v1338
        %v1340 = vpop.f32.mrb[0].mxu0
        %1341 = vmatprep.mubr.f32.mxu0 0.0
        %1342 = vmatmul.mubr.f32.gmra.mrb[0].mxu0 %v1164
        %v1343 = vpop.f32.mrb[0].mxu0
        %v1344 = vadd.f32 0.0, %v1343
        %v1345 = vpop.f32.mrb[0].mxu0
        %1346 = vmatprep.mubr.f32.mxu0 0.0
        %1347 = vmatmul.mubr.f32.gmra.mrb[0].mxu0 %v1167
        %v1348 = vpop.f32.mrb[0].mxu0
        %v1349 = vadd.f32 0.0, %v1348
        %v1350 = vpop.f32.mrb[0].mxu0
        %1351 = vmatprep.mubr.f32.mxu0 0.0
        %1352 = vmatmul.mubr.f32.gmra.mrb[0].mxu0 %v1170
        %v1353 = vpop.f32.mrb[0].mxu0
        %v1354 = vadd.f32 0.0, %v1353
        %v1355 = vpop.f32.mrb[0].mxu0
        %1356 = vmatprep.mubr.f32.mxu0 0.0
        %1357 = vmatmul.mubr.f32.gmra.mrb[0].mxu0 %v1173
        %v1358 = vpop.f32.mrb[0].mxu0
        %v1359 = vadd.f32 0.0, %v1358
        %v1360 = vpop.f32.mrb[0].mxu0
        %1361 = vmatprep.mubr.f32.mxu0 0.0
        %1362 = vmatmul.mubr.f32.gmra.mrb[0].mxu0 %v1176
        %v1363 = vpop.f32.mrb[0].mxu0
        %v1364 = vadd.f32 0.0, %v1363
        %v1365 = vpop.f32.mrb[0].mxu0
        %1366 = vmatprep.mubr.f32.mxu0 0.0
        %1367 = vmatmul.mubr.f32.gmra.mrb[0].mxu0 %v1179
        %v1368 = vpop.f32.mrb[0].mxu0
        %v1369 = vadd.f32 0.0, %v1368
        %v1370 = vpop.f32.mrb[0].mxu0
        %1371 = vmatprep.mubr.f32.mxu0 0.0
        %1372 = vmatmul.mubr.f32.gmra.mrb[0].mxu0 %v1182
        %v1373 = vpop.f32.mrb[0].mxu0
        %v1374 = vadd.f32 0.0, %v1373
        %v1375 = vpop.f32.mrb[0].mxu0
        %1376 = vdwg.mxu0
        %1377 = vmax.xlane.f32.xlu0 %v1299
        %v1378 = vpop.xlane.xlu0 %1377
        %1379 = vmax.xlane.f32.xlu0 %v1304
        %v1380 = vpop.xlane.xlu0 %1379
        %1381 = vmax.xlane.f32.xlu0 %v1309
        %v1382 = vpop.xlane.xlu0 %1381
        %1383 = vmax.xlane.f32.xlu0 %v1314
        %v1384 = vpop.xlane.xlu0 %1383
        %1385 = vmax.xlane.f32.xlu0 %v1319
        %v1386 = vpop.xlane.xlu0 %1385
        %1387 = vmax.xlane.f32.xlu0 %v1324
        %v1388 = vpop.xlane.xlu0 %1387
        %1389 = vmax.xlane.f32.xlu0 %v1329
        %v1390 = vpop.xlane.xlu0 %1389
        %1391 = vmax.xlane.f32.xlu0 %v1334
        %v1392 = vpop.xlane.xlu0 %1391
        %1393 = vmax.xlane.f32.xlu0 %v1339
        %v1394 = vpop.xlane.xlu0 %1393
        %1395 = vmax.xlane.f32.xlu0 %v1344
        %v1396 = vpop.xlane.xlu0 %1395
        %1397 = vmax.xlane.f32.xlu0 %v1349
        %v1398 = vpop.xlane.xlu0 %1397
        %1399 = vmax.xlane.f32.xlu0 %v1354
        %v1400 = vpop.xlane.xlu0 %1399
        %1401 = vmax.xlane.f32.xlu0 %v1359
        %v1402 = vpop.xlane.xlu0 %1401
        %1403 = vmax.xlane.f32.xlu0 %v1364
        %v1404 = vpop.xlane.xlu0 %1403
        %1405 = vmax.xlane.f32.xlu0 %v1369
        %v1406 = vpop.xlane.xlu0 %1405
        %1407 = vmax.xlane.f32.xlu0 %v1374
        %v1408 = vpop.xlane.xlu0 %1407
        %v1409 = vsub.f32 %v1299, %v1378
        %v1410 = vsub.f32 %v1304, %v1380
        %v1411 = vsub.f32 %v1309, %v1382
        %v1412 = vsub.f32 %v1314, %v1384
        %v1413 = vsub.f32 %v1319, %v1386
        %v1414 = vsub.f32 %v1324, %v1388
        %v1415 = vsub.f32 %v1329, %v1390
        %v1416 = vsub.f32 %v1334, %v1392
        %v1417 = vsub.f32 %v1339, %v1394
        %v1418 = vsub.f32 %v1344, %v1396
        %v1419 = vsub.f32 %v1349, %v1398
        %v1420 = vsub.f32 %v1354, %v1400
        %v1421 = vsub.f32 %v1359, %v1402
        %v1422 = vsub.f32 %v1364, %v1404
        %v1423 = vsub.f32 %v1369, %v1406
        %v1424 = vsub.f32 %v1374, %v1408
        %v1425 = vmul.f32 %v1409, 1.442695
        %v1426 = vpow.pop %v1425
        %v1427 = vmul.f32 %v1410, 1.442695
        %v1428 = vpow.pop %v1427
        %v1429 = vmul.f32 %v1411, 1.442695
        %v1430 = vpow.pop %v1429
        %v1431 = vmul.f32 %v1412, 1.442695
        %v1432 = vpow.pop %v1431
        %v1433 = vmul.f32 %v1413, 1.442695
        %v1434 = vpow.pop %v1433
        %v1435 = vmul.f32 %v1414, 1.442695
        %v1436 = vpow.pop %v1435
        %v1437 = vmul.f32 %v1415, 1.442695
        %v1438 = vpow.pop %v1437
        %v1439 = vmul.f32 %v1416, 1.442695
        %v1440 = vpow.pop %v1439
        %v1441 = vmul.f32 %v1417, 1.442695
        %v1442 = vpow.pop %v1441
        %v1443 = vmul.f32 %v1418, 1.442695
        %v1444 = vpow.pop %v1443
        %v1445 = vmul.f32 %v1419, 1.442695
        %v1446 = vpow.pop %v1445
        %v1447 = vmul.f32 %v1420, 1.442695
        %v1448 = vpow.pop %v1447
        %v1449 = vmul.f32 %v1421, 1.442695
        %v1450 = vpow.pop %v1449
        %v1451 = vmul.f32 %v1422, 1.442695
        %v1452 = vpow.pop %v1451
        %v1453 = vmul.f32 %v1423, 1.442695
        %v1454 = vpow.pop %v1453
        %v1455 = vmul.f32 %v1424, 1.442695
        %v1456 = vpow.pop %v1455
        %1457 = vadd.xlane.f32.xlu0 %v1426
        %v1458 = vpop.xlane.xlu0 %1457
        %1459 = vadd.xlane.f32.xlu0 %v1428
        %v1460 = vpop.xlane.xlu0 %1459
        %1461 = vadd.xlane.f32.xlu0 %v1430
        %v1462 = vpop.xlane.xlu0 %1461
        %1463 = vadd.xlane.f32.xlu0 %v1432
        %v1464 = vpop.xlane.xlu0 %1463
        %1465 = vadd.xlane.f32.xlu0 %v1434
        %v1466 = vpop.xlane.xlu0 %1465
        %1467 = vadd.xlane.f32.xlu0 %v1436
        %v1468 = vpop.xlane.xlu0 %1467
        %1469 = vadd.xlane.f32.xlu0 %v1438
        %v1470 = vpop.xlane.xlu0 %1469
        %1471 = vadd.xlane.f32.xlu0 %v1440
        %v1472 = vpop.xlane.xlu0 %1471
        %1473 = vadd.xlane.f32.xlu0 %v1442
        %v1474 = vpop.xlane.xlu0 %1473
        %1475 = vadd.xlane.f32.xlu0 %v1444
        %v1476 = vpop.xlane.xlu0 %1475
        %1477 = vadd.xlane.f32.xlu0 %v1446
        %v1478 = vpop.xlane.xlu0 %1477
        %1479 = vadd.xlane.f32.xlu0 %v1448
        %v1480 = vpop.xlane.xlu0 %1479
        %1481 = vadd.xlane.f32.xlu0 %v1450
        %v1482 = vpop.xlane.xlu0 %1481
        %1483 = vadd.xlane.f32.xlu0 %v1452
        %v1484 = vpop.xlane.xlu0 %1483
        %1485 = vadd.xlane.f32.xlu0 %v1454
        %v1486 = vpop.xlane.xlu0 %1485
        %1487 = vadd.xlane.f32.xlu0 %v1456
        %v1488 = vpop.xlane.xlu0 %1487
        %v1489 = vrcp.pop %v1458
        %v1490 = vrcp.pop %v1460
        %v1491 = vrcp.pop %v1462
        %v1492 = vrcp.pop %v1464
        %v1493 = vrcp.pop %v1466
        %v1494 = vrcp.pop %v1468
        %v1495 = vrcp.pop %v1470
        %v1496 = vrcp.pop %v1472
        %v1497 = vrcp.pop %v1474
        %v1498 = vrcp.pop %v1476
        %v1499 = vrcp.pop %v1478
        %v1500 = vrcp.pop %v1480
        %v1501 = vrcp.pop %v1482
        %v1502 = vrcp.pop %v1484
        %v1503 = vrcp.pop %v1486
        %v1504 = vrcp.pop %v1488
        %v1505 = vmul.f32 %v1426, %v1489
        %v1506 = vmul.f32 %v1428, %v1490
        %v1507 = vmul.f32 %v1430, %v1491
        %v1508 = vmul.f32 %v1432, %v1492
        %v1509 = vmul.f32 %v1434, %v1493
        %v1510 = vmul.f32 %v1436, %v1494
        %v1511 = vmul.f32 %v1438, %v1495
        %v1512 = vmul.f32 %v1440, %v1496
        %v1513 = vmul.f32 %v1442, %v1497
        %v1514 = vmul.f32 %v1444, %v1498
        %v1515 = vmul.f32 %v1446, %v1499
        %v1516 = vmul.f32 %v1448, %v1500
        %v1517 = vmul.f32 %v1450, %v1501
        %v1518 = vmul.f32 %v1452, %v1502
        %v1519 = vmul.f32 %v1454, %v1503
        %v1520 = vmul.f32 %v1456, %v1504
        %1521 = vst [vmem:[%s509] sm:$0xff] %v1505
        %1522 = vst [vmem:[%s509 + $0x8] sm:$0xff] %v1506
        %1523 = vst [vmem:[%s509 + $0x10] sm:$0xff] %v1507
        %1524 = vst [vmem:[%s509 + $0x18] sm:$0xff] %v1508
        %1525 = vst [vmem:[%s509 + $0x20] sm:$0xff] %v1509
        %1526 = vst [vmem:[%s509 + $0x28] sm:$0xff] %v1510
        %1527 = vst [vmem:[%s509 + $0x30] sm:$0xff] %v1511
        %1528 = vst [vmem:[%s509 + $0x38] sm:$0xff] %v1512
        %1529 = vst [vmem:[%s509 + $0x40] sm:$0xff] %v1513
        %1530 = vst [vmem:[%s509 + $0x48] sm:$0xff] %v1514
        %1531 = vst [vmem:[%s509 + $0x50] sm:$0xff] %v1515
        %1532 = vst [vmem:[%s509 + $0x58] sm:$0xff] %v1516
        %1533 = vst [vmem:[%s509 + $0x60] sm:$0xff] %v1517
        %1534 = vst [vmem:[%s509 + $0x68] sm:$0xff] %v1518
        %1535 = vst [vmem:[%s509 + $0x70] sm:$0xff] %v1519
        %1536 = vst [vmem:[%s509 + $0x78] sm:$0xff] %v1520
        %1537 = vmatprep.subr.mxu0 0.0
        %1538 = vmatpush1.msra.mxu0 %v1119
        %1539 = vmatprep.subr.mxu0 0.0
        %1540 = vmatpush1.msra.mxu0 %v1120
        %1541 = vmatprep.subr.mxu0 0.0
        %1542 = vmatpush1.msra.mxu0 %v1121
        %1543 = vmatprep.subr.mxu0 0.0
        %1544 = vmatpush1.msra.mxu0 %v1122
        %1545 = vmatprep.subr.mxu0 0.0
        %1546 = vmatpush1.msra.mxu0 %v1123
        %1547 = vmatprep.subr.mxu0 0.0
        %1548 = vmatpush1.msra.mxu0 %v1124
        %1549 = vmatprep.subr.mxu0 0.0
        %1550 = vmatpush1.msra.mxu0 %v1125
        %1551 = vmatprep.subr.mxu0 0.0
        %1552 = vmatpush1.msra.mxu0 %v1126
        %1553 = vmatprep.subr.mxu0 0.0
        %1554 = vmatpush1.msra.mxu0 %v1127
        %1555 = vmatprep.subr.mxu0 0.0
        %1556 = vmatpush1.msra.mxu0 %v1128
        %1557 = vmatprep.subr.mxu0 0.0
        %1558 = vmatpush1.msra.mxu0 %v1129
        %1559 = vmatprep.subr.mxu0 0.0
        %1560 = vmatpush1.msra.mxu0 %v1130
        %1561 = vmatprep.subr.mxu0 0.0
        %1562 = vmatpush1.msra.mxu0 %v1131
        %1563 = vmatprep.subr.mxu0 0.0
        %1564 = vmatpush1.msra.mxu0 %v1132
        %1565 = vmatprep.subr.mxu0 0.0
        %1566 = vmatpush1.msra.mxu0 %v1133
        %1567 = vmatprep.subr.mxu0 0.0
        %1568 = vmatpush1.msra.mxu0 %v1134
        %1569 = vmatprep.subr.mxu0 0.0
        %1570 = vmatpush1.msra.mxu0 0.0
        %1571 = vmatprep.subr.mxu0 0.0
        %1572 = vmatpush1.msra.mxu0 0.0
        %1573 = vmatprep.subr.mxu0 0.0
        %1574 = vmatpush1.msra.mxu0 0.0
        %1575 = vmatprep.subr.mxu0 0.0
        %1576 = vmatpush1.msra.mxu0 0.0
        %1577 = vmatprep.subr.mxu0 0.0
        %1578 = vmatpush1.msra.mxu0 0.0
        %1579 = vmatprep.subr.mxu0 0.0
        %1580 = vmatpush1.msra.mxu0 0.0
        %1581 = vmatprep.subr.mxu0 0.0
        %1582 = vmatpush1.msra.mxu0 0.0
        %1583 = vmatprep.subr.mxu0 0.0
        %1584 = vmatpush1.msra.mxu0 0.0
        %1585 = vmatprep.subr.mxu0 0.0
        %1586 = vmatpush1.msra.mxu0 0.0
        %1587 = vmatprep.subr.mxu0 0.0
        %1588 = vmatpush1.msra.mxu0 0.0
        %1589 = vmatprep.subr.mxu0 0.0
        %1590 = vmatpush1.msra.mxu0 0.0
        %1591 = vmatprep.subr.mxu0 0.0
        %1592 = vmatpush1.msra.mxu0 0.0
        %1593 = vmatprep.subr.mxu0 0.0
        %1594 = vmatpush1.msra.mxu0 0.0
        %1595 = vmatprep.subr.mxu0 0.0
        %1596 = vmatpush1.msra.mxu0 0.0
        %1597 = vmatprep.subr.mxu0 0.0
        %1598 = vmatpush1.msra.mxu0 0.0
        %1599 = vmatprep.subr.mxu0 0.0
        %1600 = vmatpush1.msra.mxu0 0.0
        %1601 = vmatprep.mubr.f32.mxu0 0.0
        %1602 = vmatmul.mubr.f32.gmra.mrb[0].mxu0 %v1505
        %v1603 = vpop.f32.mrb[0].mxu0
        %v1604 = vadd.f32 0.0, %v1603
        %v1605 = vpop.f32.mrb[0].mxu0
        %1606 = vmatprep.mubr.f32.mxu0 0.0
        %1607 = vmatmul.mubr.f32.gmra.mrb[0].mxu0 %v1506
        %v1608 = vpop.f32.mrb[0].mxu0
        %v1609 = vadd.f32 0.0, %v1608
        %v1610 = vpop.f32.mrb[0].mxu0
        %1611 = vmatprep.mubr.f32.mxu0 0.0
        %1612 = vmatmul.mubr.f32.gmra.mrb[0].mxu0 %v1507
        %v1613 = vpop.f32.mrb[0].mxu0
        %v1614 = vadd.f32 0.0, %v1613
        %v1615 = vpop.f32.mrb[0].mxu0
        %1616 = vmatprep.mubr.f32.mxu0 0.0
        %1617 = vmatmul.mubr.f32.gmra.mrb[0].mxu0 %v1508
        %v1618 = vpop.f32.mrb[0].mxu0
        %v1619 = vadd.f32 0.0, %v1618
        %v1620 = vpop.f32.mrb[0].mxu0
        %1621 = vmatprep.mubr.f32.mxu0 0.0
        %1622 = vmatmul.mubr.f32.gmra.mrb[0].mxu0 %v1509
        %v1623 = vpop.f32.mrb[0].mxu0
        %v1624 = vadd.f32 0.0, %v1623
        %v1625 = vpop.f32.mrb[0].mxu0
        %1626 = vmatprep.mubr.f32.mxu0 0.0
        %1627 = vmatmul.mubr.f32.gmra.mrb[0].mxu0 %v1510
        %v1628 = vpop.f32.mrb[0].mxu0
        %v1629 = vadd.f32 0.0, %v1628
        %v1630 = vpop.f32.mrb[0].mxu0
        %1631 = vmatprep.mubr.f32.mxu0 0.0
        %1632 = vmatmul.mubr.f32.gmra.mrb[0].mxu0 %v1511
        %v1633 = vpop.f32.mrb[0].mxu0
        %v1634 = vadd.f32 0.0, %v1633
        %v1635 = vpop.f32.mrb[0].mxu0
        %1636 = vmatprep.mubr.f32.mxu0 0.0
        %1637 = vmatmul.mubr.f32.gmra.mrb[0].mxu0 %v1512
        %v1638 = vpop.f32.mrb[0].mxu0
        %v1639 = vadd.f32 0.0, %v1638
        %v1640 = vpop.f32.mrb[0].mxu0
        %1641 = vmatprep.mubr.f32.mxu0 0.0
        %1642 = vmatmul.mubr.f32.gmra.mrb[0].mxu0 %v1513
        %v1643 = vpop.f32.mrb[0].mxu0
        %v1644 = vadd.f32 0.0, %v1643
        %v1645 = vpop.f32.mrb[0].mxu0
        %1646 = vmatprep.mubr.f32.mxu0 0.0
        %1647 = vmatmul.mubr.f32.gmra.mrb[0].mxu0 %v1514
        %v1648 = vpop.f32.mrb[0].mxu0
        %v1649 = vadd.f32 0.0, %v1648
        %v1650 = vpop.f32.mrb[0].mxu0
        %1651 = vmatprep.mubr.f32.mxu0 0.0
        %1652 = vmatmul.mubr.f32.gmra.mrb[0].mxu0 %v1515
        %v1653 = vpop.f32.mrb[0].mxu0
        %v1654 = vadd.f32 0.0, %v1653
        %v1655 = vpop.f32.mrb[0].mxu0
        %1656 = vmatprep.mubr.f32.mxu0 0.0
        %1657 = vmatmul.mubr.f32.gmra.mrb[0].mxu0 %v1516
        %v1658 = vpop.f32.mrb[0].mxu0
        %v1659 = vadd.f32 0.0, %v1658
        %v1660 = vpop.f32.mrb[0].mxu0
        %1661 = vmatprep.mubr.f32.mxu0 0.0
        %1662 = vmatmul.mubr.f32.gmra.mrb[0].mxu0 %v1517
        %v1663 = vpop.f32.mrb[0].mxu0
        %v1664 = vadd.f32 0.0, %v1663
        %v1665 = vpop.f32.mrb[0].mxu0
        %1666 = vmatprep.mubr.f32.mxu0 0.0
        %1667 = vmatmul.mubr.f32.gmra.mrb[0].mxu0 %v1518
        %v1668 = vpop.f32.mrb[0].mxu0
        %v1669 = vadd.f32 0.0, %v1668
        %v1670 = vpop.f32.mrb[0].mxu0
        %1671 = vmatprep.mubr.f32.mxu0 0.0
        %1672 = vmatmul.mubr.f32.gmra.mrb[0].mxu0 %v1519
        %v1673 = vpop.f32.mrb[0].mxu0
        %v1674 = vadd.f32 0.0, %v1673
        %v1675 = vpop.f32.mrb[0].mxu0
        %1676 = vmatprep.mubr.f32.mxu0 0.0
        %1677 = vmatmul.mubr.f32.gmra.mrb[0].mxu0 %v1520
        %v1678 = vpop.f32.mrb[0].mxu0
        %v1679 = vadd.f32 0.0, %v1678
        %v1680 = vpop.f32.mrb[0].mxu0
        %1681 = vdwg.mxu0
        %v1682 = vld [vmem:[#allocation15] sm:$0xff]
        %v1683 = vld [vmem:[#allocation15 + $0x8] sm:$0xff]
        %v1684 = vld [vmem:[#allocation15 + $0x10] sm:$0xff]
        %v1685 = vld [vmem:[#allocation15 + $0x18] sm:$0xff]
        %v1686 = vld [vmem:[#allocation2] sm:$0xff]
        %v1687 = vld [vmem:[#allocation2 + $0x8] sm:$0xff]
        %v1688 = vld [vmem:[#allocation2 + $0x10] sm:$0xff]
        %v1689 = vld [vmem:[#allocation2 + $0x18] sm:$0xff]
        %v1690 = vld [vmem:[#allocation2 + $0x20] sm:$0xff]
        %v1691 = vld [vmem:[#allocation2 + $0x28] sm:$0xff]
        %v1692 = vld [vmem:[#allocation2 + $0x30] sm:$0xff]
        %v1693 = vld [vmem:[#allocation2 + $0x38] sm:$0xff]
        %v1694 = vld [vmem:[#allocation2 + $0x40] sm:$0xff]
        %v1695 = vld [vmem:[#allocation2 + $0x48] sm:$0xff]
        %v1696 = vld [vmem:[#allocation2 + $0x50] sm:$0xff]
        %v1697 = vld [vmem:[#allocation2 + $0x58] sm:$0xff]
        %v1698 = vld [vmem:[#allocation2 + $0x60] sm:$0xff]
        %v1699 = vld [vmem:[#allocation2 + $0x68] sm:$0xff]
        %v1700 = vld [vmem:[#allocation2 + $0x70] sm:$0xff]
        %v1701 = vld [vmem:[#allocation2 + $0x78] sm:$0xff]
        %v1702 = vld [vmem:[#allocation3] sm:$0xff]
        %v1703 = vld [vmem:[#allocation3 + $0x8] sm:$0xff]
        %v1704 = vld [vmem:[#allocation3 + $0x10] sm:$0xff]
        %v1705 = vld [vmem:[#allocation3 + $0x18] sm:$0xff]
        %v1706 = vld [vmem:[#allocation3 + $0x20] sm:$0xff]
        %v1707 = vld [vmem:[#allocation3 + $0x28] sm:$0xff]
        %v1708 = vld [vmem:[#allocation3 + $0x30] sm:$0xff]
        %v1709 = vld [vmem:[#allocation3 + $0x38] sm:$0xff]
        %v1710 = vld [vmem:[#allocation3 + $0x40] sm:$0xff]
        %v1711 = vld [vmem:[#allocation3 + $0x48] sm:$0xff]
        %v1712 = vld [vmem:[#allocation3 + $0x50] sm:$0xff]
        %v1713 = vld [vmem:[#allocation3 + $0x58] sm:$0xff]
        %v1714 = vld [vmem:[#allocation3 + $0x60] sm:$0xff]
        %v1715 = vld [vmem:[#allocation3 + $0x68] sm:$0xff]
        %v1716 = vld [vmem:[#allocation3 + $0x70] sm:$0xff]
        %v1717 = vld [vmem:[#allocation3 + $0x78] sm:$0xff]
        %1718 = vrot.lane.b32.xlu0 %v1087, 96
        %v1719 = vpop.permute.xlu0 %1718
        %1720 = vrot.lane.b32.xlu0 %v1088, 96
        %v1721 = vpop.permute.xlu0 %1720
        %1722 = vrot.lane.b32.xlu0 %v1089, 96
        %v1723 = vpop.permute.xlu0 %1722
        %1724 = vrot.lane.b32.xlu0 %v1090, 96
        %v1725 = vpop.permute.xlu0 %1724
        %1726 = vrot.lane.b32.xlu0 %v1091, 96
        %v1727 = vpop.permute.xlu0 %1726
        %1728 = vrot.lane.b32.xlu0 %v1092, 96
        %v1729 = vpop.permute.xlu0 %1728
        %1730 = vrot.lane.b32.xlu0 %v1093, 96
        %v1731 = vpop.permute.xlu0 %1730
        %1732 = vrot.lane.b32.xlu0 %v1094, 96
        %v1733 = vpop.permute.xlu0 %1732
        %1734 = vrot.lane.b32.xlu0 %v1095, 96
        %v1735 = vpop.permute.xlu0 %1734
        %1736 = vrot.lane.b32.xlu0 %v1096, 96
        %v1737 = vpop.permute.xlu0 %1736
        %1738 = vrot.lane.b32.xlu0 %v1097, 96
        %v1739 = vpop.permute.xlu0 %1738
        %1740 = vrot.lane.b32.xlu0 %v1098, 96
        %v1741 = vpop.permute.xlu0 %1740
        %1742 = vrot.lane.b32.xlu0 %v1099, 96
        %v1743 = vpop.permute.xlu0 %1742
        %1744 = vrot.lane.b32.xlu0 %v1100, 96
        %v1745 = vpop.permute.xlu0 %1744
        %1746 = vrot.lane.b32.xlu0 %v1101, 96
        %v1747 = vpop.permute.xlu0 %1746
        %1748 = vrot.lane.b32.xlu0 %v1102, 96
        %v1749 = vpop.permute.xlu0 %1748
        %1766 = vrot.lane.b32.xlu0 %v1686, 96
        %v1767 = vpop.permute.xlu0 %1766
        %1768 = vrot.lane.b32.xlu0 %v1687, 96
        %v1769 = vpop.permute.xlu0 %1768
        %1770 = vrot.lane.b32.xlu0 %v1688, 96
        %v1771 = vpop.permute.xlu0 %1770
        %1772 = vrot.lane.b32.xlu0 %v1689, 96
        %v1773 = vpop.permute.xlu0 %1772
        %1774 = vrot.lane.b32.xlu0 %v1690, 96
        %v1775 = vpop.permute.xlu0 %1774
        %1776 = vrot.lane.b32.xlu0 %v1691, 96
        %v1777 = vpop.permute.xlu0 %1776
        %1778 = vrot.lane.b32.xlu0 %v1692, 96
        %v1779 = vpop.permute.xlu0 %1778
        %1780 = vrot.lane.b32.xlu0 %v1693, 96
        %v1781 = vpop.permute.xlu0 %1780
        %1782 = vrot.lane.b32.xlu0 %v1694, 96
        %v1783 = vpop.permute.xlu0 %1782
        %1784 = vrot.lane.b32.xlu0 %v1695, 96
        %v1785 = vpop.permute.xlu0 %1784
        %1786 = vrot.lane.b32.xlu0 %v1696, 96
        %v1787 = vpop.permute.xlu0 %1786
        %1788 = vrot.lane.b32.xlu0 %v1697, 96
        %v1789 = vpop.permute.xlu0 %1788
        %1790 = vrot.lane.b32.xlu0 %v1698, 96
        %v1791 = vpop.permute.xlu0 %1790
        %1792 = vrot.lane.b32.xlu0 %v1699, 96
        %v1793 = vpop.permute.xlu0 %1792
        %1794 = vrot.lane.b32.xlu0 %v1700, 96
        %v1795 = vpop.permute.xlu0 %1794
        %1796 = vrot.lane.b32.xlu0 %v1701, 96
        %v1797 = vpop.permute.xlu0 %1796
        %v1798 = vsel %vm1135, %v1719, 0
        %v1800 = vsel %vm1135, %v1721, 0
        %v1802 = vsel %vm1135, %v1723, 0
        %v1804 = vsel %vm1135, %v1725, 0
        %v1806 = vsel %vm1135, %v1727, 0
        %v1808 = vsel %vm1135, %v1729, 0
        %v1810 = vsel %vm1135, %v1731, 0
        %v1812 = vsel %vm1135, %v1733, 0
        %v1814 = vsel %vm1135, %v1735, 0
        %v1816 = vsel %vm1135, %v1737, 0
        %v1818 = vsel %vm1135, %v1739, 0
        %v1820 = vsel %vm1135, %v1741, 0
        %v1822 = vsel %vm1135, %v1743, 0
        %v1824 = vsel %vm1135, %v1745, 0
        %v1826 = vsel %vm1135, %v1747, 0
        %v1828 = vsel %vm1135, %v1749, 0
        %v1830 = vsel %vm1135, %v1767, 0
        %v1832 = vsel %vm1135, %v1769, 0
        %v1834 = vsel %vm1135, %v1771, 0
        %v1836 = vsel %vm1135, %v1773, 0
        %v1838 = vsel %vm1135, %v1775, 0
        %v1840 = vsel %vm1135, %v1777, 0
        %v1842 = vsel %vm1135, %v1779, 0
        %v1844 = vsel %vm1135, %v1781, 0
        %v1846 = vsel %vm1135, %v1783, 0
        %v1848 = vsel %vm1135, %v1785, 0
        %v1850 = vsel %vm1135, %v1787, 0
        %v1852 = vsel %vm1135, %v1789, 0
        %v1854 = vsel %vm1135, %v1791, 0
        %v1856 = vsel %vm1135, %v1793, 0
        %v1858 = vsel %vm1135, %v1795, 0
        %v1860 = vsel %vm1135, %v1797, 0
        %1862 = vmatprep.subr.mxu0 0.0
        %1863 = vmatpush1.xpose.msra.mxu0 %v1830
        %1864 = vmatprep.subr.mxu0 0.0
        %1865 = vmatpush1.xpose.msra.mxu0 %v1832
        %1866 = vmatprep.subr.mxu0 0.0
        %1867 = vmatpush1.xpose.msra.mxu0 %v1834
        %1868 = vmatprep.subr.mxu0 0.0
        %1869 = vmatpush1.xpose.msra.mxu0 %v1836
        %1870 = vmatprep.subr.mxu0 0.0
        %1871 = vmatpush1.xpose.msra.mxu0 %v1838
        %1872 = vmatprep.subr.mxu0 0.0
        %1873 = vmatpush1.xpose.msra.mxu0 %v1840
        %1874 = vmatprep.subr.mxu0 0.0
        %1875 = vmatpush1.xpose.msra.mxu0 %v1842
        %1876 = vmatprep.subr.mxu0 0.0
        %1877 = vmatpush1.xpose.msra.mxu0 %v1844
        %1878 = vmatprep.subr.mxu0 0.0
        %1879 = vmatpush1.xpose.msra.mxu0 %v1846
        %1880 = vmatprep.subr.mxu0 0.0
        %1881 = vmatpush1.xpose.msra.mxu0 %v1848
        %1882 = vmatprep.subr.mxu0 0.0
        %1883 = vmatpush1.xpose.msra.mxu0 %v1850
        %1884 = vmatprep.subr.mxu0 0.0
        %1885 = vmatpush1.xpose.msra.mxu0 %v1852
        %1886 = vmatprep.subr.mxu0 0.0
        %1887 = vmatpush1.xpose.msra.mxu0 %v1854
        %1888 = vmatprep.subr.mxu0 0.0
        %1889 = vmatpush1.xpose.msra.mxu0 %v1856
        %1890 = vmatprep.subr.mxu0 0.0
        %1891 = vmatpush1.xpose.msra.mxu0 %v1858
        %1892 = vmatprep.subr.mxu0 0.0
        %1893 = vmatpush1.xpose.msra.mxu0 %v1860
        %1894 = vmatprep.subr.mxu0 0.0
        %1895 = vmatpush1.xpose.msra.mxu0 0.0
        %1896 = vmatprep.subr.mxu0 0.0
        %1897 = vmatpush1.xpose.msra.mxu0 0.0
        %1898 = vmatprep.subr.mxu0 0.0
        %1899 = vmatpush1.xpose.msra.mxu0 0.0
        %1900 = vmatprep.subr.mxu0 0.0
        %1901 = vmatpush1.xpose.msra.mxu0 0.0
        %1902 = vmatprep.subr.mxu0 0.0
        %1903 = vmatpush1.xpose.msra.mxu0 0.0
        %1904 = vmatprep.subr.mxu0 0.0
        %1905 = vmatpush1.xpose.msra.mxu0 0.0
        %1906 = vmatprep.subr.mxu0 0.0
        %1907 = vmatpush1.xpose.msra.mxu0 0.0
        %1908 = vmatprep.subr.mxu0 0.0
        %1909 = vmatpush1.xpose.msra.mxu0 0.0
        %1910 = vmatprep.subr.mxu0 0.0
        %1911 = vmatpush1.xpose.msra.mxu0 0.0
        %1912 = vmatprep.subr.mxu0 0.0
        %1913 = vmatpush1.xpose.msra.mxu0 0.0
        %1914 = vmatprep.subr.mxu0 0.0
        %1915 = vmatpush1.xpose.msra.mxu0 0.0
        %1916 = vmatprep.subr.mxu0 0.0
        %1917 = vmatpush1.xpose.msra.mxu0 0.0
        %1918 = vmatprep.subr.mxu0 0.0
        %1919 = vmatpush1.xpose.msra.mxu0 0.0
        %1920 = vmatprep.subr.mxu0 0.0
        %1921 = vmatpush1.xpose.msra.mxu0 0.0
        %1922 = vmatprep.subr.mxu0 0.0
        %1923 = vmatpush1.xpose.msra.mxu0 0.0
        %1924 = vmatprep.subr.mxu0 0.0
        %1925 = vmatpush1.xpose.msra.mxu0 0.0
        %1926 = vmatprep.mubr.f32.mxu0 0.0
        %1927 = vmatmul.mubr.f32.gmra.mrb[0].mxu0 %v1798
        %v1928 = vpop.f32.mrb[0].mxu0
        %v1929 = vadd.f32 0.0, %v1928
        %v1930 = vpop.f32.mrb[0].mxu0
        %1931 = vmatprep.mubr.f32.mxu0 0.0
        %1932 = vmatmul.mubr.f32.gmra.mrb[0].mxu0 %v1800
        %v1933 = vpop.f32.mrb[0].mxu0
        %v1934 = vadd.f32 0.0, %v1933
        %v1935 = vpop.f32.mrb[0].mxu0
        %1936 = vmatprep.mubr.f32.mxu0 0.0
        %1937 = vmatmul.mubr.f32.gmra.mrb[0].mxu0 %v1802
        %v1938 = vpop.f32.mrb[0].mxu0
        %v1939 = vadd.f32 0.0, %v1938
        %v1940 = vpop.f32.mrb[0].mxu0
        %1941 = vmatprep.mubr.f32.mxu0 0.0
        %1942 = vmatmul.mubr.f32.gmra.mrb[0].mxu0 %v1804
        %v1943 = vpop.f32.mrb[0].mxu0
        %v1944 = vadd.f32 0.0, %v1943
        %v1945 = vpop.f32.mrb[0].mxu0
        %1946 = vmatprep.mubr.f32.mxu0 0.0
        %1947 = vmatmul.mubr.f32.gmra.mrb[0].mxu0 %v1806
        %v1948 = vpop.f32.mrb[0].mxu0
        %v1949 = vadd.f32 0.0, %v1948
        %v1950 = vpop.f32.mrb[0].mxu0
        %1951 = vmatprep.mubr.f32.mxu0 0.0
        %1952 = vmatmul.mubr.f32.gmra.mrb[0].mxu0 %v1808
        %v1953 = vpop.f32.mrb[0].mxu0
        %v1954 = vadd.f32 0.0, %v1953
        %v1955 = vpop.f32.mrb[0].mxu0
        %1956 = vmatprep.mubr.f32.mxu0 0.0
        %1957 = vmatmul.mubr.f32.gmra.mrb[0].mxu0 %v1810
        %v1958 = vpop.f32.mrb[0].mxu0
        %v1959 = vadd.f32 0.0, %v1958
        %v1960 = vpop.f32.mrb[0].mxu0
        %1961 = vmatprep.mubr.f32.mxu0 0.0
        %1962 = vmatmul.mubr.f32.gmra.mrb[0].mxu0 %v1812
        %v1963 = vpop.f32.mrb[0].mxu0
        %v1964 = vadd.f32 0.0, %v1963
        %v1965 = vpop.f32.mrb[0].mxu0
        %1966 = vmatprep.mubr.f32.mxu0 0.0
        %1967 = vmatmul.mubr.f32.gmra.mrb[0].mxu0 %v1814
        %v1968 = vpop.f32.mrb[0].mxu0
        %v1969 = vadd.f32 0.0, %v1968
        %v1970 = vpop.f32.mrb[0].mxu0
        %1971 = vmatprep.mubr.f32.mxu0 0.0
        %1972 = vmatmul.mubr.f32.gmra.mrb[0].mxu0 %v1816
        %v1973 = vpop.f32.mrb[0].mxu0
        %v1974 = vadd.f32 0.0, %v1973
        %v1975 = vpop.f32.mrb[0].mxu0
        %1976 = vmatprep.mubr.f32.mxu0 0.0
        %1977 = vmatmul.mubr.f32.gmra.mrb[0].mxu0 %v1818
        %v1978 = vpop.f32.mrb[0].mxu0
        %v1979 = vadd.f32 0.0, %v1978
        %v1980 = vpop.f32.mrb[0].mxu0
        %1981 = vmatprep.mubr.f32.mxu0 0.0
        %1982 = vmatmul.mubr.f32.gmra.mrb[0].mxu0 %v1820
        %v1983 = vpop.f32.mrb[0].mxu0
        %v1984 = vadd.f32 0.0, %v1983
        %v1985 = vpop.f32.mrb[0].mxu0
        %1986 = vmatprep.mubr.f32.mxu0 0.0
        %1987 = vmatmul.mubr.f32.gmra.mrb[0].mxu0 %v1822
        %v1988 = vpop.f32.mrb[0].mxu0
        %v1989 = vadd.f32 0.0, %v1988
        %v1990 = vpop.f32.mrb[0].mxu0
        %1991 = vmatprep.mubr.f32.mxu0 0.0
        %1992 = vmatmul.mubr.f32.gmra.mrb[0].mxu0 %v1824
        %v1993 = vpop.f32.mrb[0].mxu0
        %v1994 = vadd.f32 0.0, %v1993
        %v1995 = vpop.f32.mrb[0].mxu0
        %1996 = vmatprep.mubr.f32.mxu0 0.0
        %1997 = vmatmul.mubr.f32.gmra.mrb[0].mxu0 %v1826
        %v1998 = vpop.f32.mrb[0].mxu0
        %v1999 = vadd.f32 0.0, %v1998
        %v2000 = vpop.f32.mrb[0].mxu0
        %2001 = vmatprep.mubr.f32.mxu0 0.0
        %2002 = vmatmul.mubr.f32.gmra.mrb[0].mxu0 %v1828
        %v2003 = vpop.f32.mrb[0].mxu0
        %v2004 = vadd.f32 0.0, %v2003
        %v2005 = vpop.f32.mrb[0].mxu0
        %2006 = vdwg.mxu0
        %2007 = vmax.xlane.f32.xlu0 %v1929
        %v2008 = vpop.xlane.xlu0 %2007
        %2009 = vmax.xlane.f32.xlu0 %v1934
        %v2010 = vpop.xlane.xlu0 %2009
        %2011 = vmax.xlane.f32.xlu0 %v1939
        %v2012 = vpop.xlane.xlu0 %2011
        %2013 = vmax.xlane.f32.xlu0 %v1944
        %v2014 = vpop.xlane.xlu0 %2013
        %2015 = vmax.xlane.f32.xlu0 %v1949
        %v2016 = vpop.xlane.xlu0 %2015
        %2017 = vmax.xlane.f32.xlu0 %v1954
        %v2018 = vpop.xlane.xlu0 %2017
        %2019 = vmax.xlane.f32.xlu0 %v1959
        %v2020 = vpop.xlane.xlu0 %2019
        %2021 = vmax.xlane.f32.xlu0 %v1964
        %v2022 = vpop.xlane.xlu0 %2021
        %2023 = vmax.xlane.f32.xlu0 %v1969
        %v2024 = vpop.xlane.xlu0 %2023
        %2025 = vmax.xlane.f32.xlu0 %v1974
        %v2026 = vpop.xlane.xlu0 %2025
        %2027 = vmax.xlane.f32.xlu0 %v1979
        %v2028 = vpop.xlane.xlu0 %2027
        %2029 = vmax.xlane.f32.xlu0 %v1984
        %v2030 = vpop.xlane.xlu0 %2029
        %2031 = vmax.xlane.f32.xlu0 %v1989
        %v2032 = vpop.xlane.xlu0 %2031
        %2033 = vmax.xlane.f32.xlu0 %v1994
        %v2034 = vpop.xlane.xlu0 %2033
        %2035 = vmax.xlane.f32.xlu0 %v1999
        %v2036 = vpop.xlane.xlu0 %2035
        %2037 = vmax.xlane.f32.xlu0 %v2004
        %v2038 = vpop.xlane.xlu0 %2037
        %v2039 = vsub.f32 %v1929, %v2008
        %v2040 = vsub.f32 %v1934, %v2010
        %v2041 = vsub.f32 %v1939, %v2012
        %v2042 = vsub.f32 %v1944, %v2014
        %v2043 = vsub.f32 %v1949, %v2016
        %v2044 = vsub.f32 %v1954, %v2018
        %v2045 = vsub.f32 %v1959, %v2020
        %v2046 = vsub.f32 %v1964, %v2022
        %v2047 = vsub.f32 %v1969, %v2024
        %v2048 = vsub.f32 %v1974, %v2026
        %v2049 = vsub.f32 %v1979, %v2028
        %v2050 = vsub.f32 %v1984, %v2030
        %v2051 = vsub.f32 %v1989, %v2032
        %v2052 = vsub.f32 %v1994, %v2034
        %v2053 = vsub.f32 %v1999, %v2036
        %v2054 = vsub.f32 %v2004, %v2038
        %v2055 = vmul.f32 %v2039, 1.442695
        %v2056 = vpow.pop %v2055
        %v2057 = vmul.f32 %v2040, 1.442695
        %v2058 = vpow.pop %v2057
        %v2059 = vmul.f32 %v2041, 1.442695
        %v2060 = vpow.pop %v2059
        %v2061 = vmul.f32 %v2042, 1.442695
        %v2062 = vpow.pop %v2061
        %v2063 = vmul.f32 %v2043, 1.442695
        %v2064 = vpow.pop %v2063
        %v2065 = vmul.f32 %v2044, 1.442695
        %v2066 = vpow.pop %v2065
        %v2067 = vmul.f32 %v2045, 1.442695
        %v2068 = vpow.pop %v2067
        %v2069 = vmul.f32 %v2046, 1.442695
        %v2070 = vpow.pop %v2069
        %v2071 = vmul.f32 %v2047, 1.442695
        %v2072 = vpow.pop %v2071
        %v2073 = vmul.f32 %v2048, 1.442695
        %v2074 = vpow.pop %v2073
        %v2075 = vmul.f32 %v2049, 1.442695
        %v2076 = vpow.pop %v2075
        %v2077 = vmul.f32 %v2050, 1.442695
        %v2078 = vpow.pop %v2077
        %v2079 = vmul.f32 %v2051, 1.442695
        %v2080 = vpow.pop %v2079
        %v2081 = vmul.f32 %v2052, 1.442695
        %v2082 = vpow.pop %v2081
        %v2083 = vmul.f32 %v2053, 1.442695
        %v2084 = vpow.pop %v2083
        %v2085 = vmul.f32 %v2054, 1.442695
        %v2086 = vpow.pop %v2085
        %2087 = vadd.xlane.f32.xlu0 %v2056
        %v2088 = vpop.xlane.xlu0 %2087
        %2089 = vadd.xlane.f32.xlu0 %v2058
        %v2090 = vpop.xlane.xlu0 %2089
        %2091 = vadd.xlane.f32.xlu0 %v2060
        %v2092 = vpop.xlane.xlu0 %2091
        %2093 = vadd.xlane.f32.xlu0 %v2062
        %v2094 = vpop.xlane.xlu0 %2093
        %2095 = vadd.xlane.f32.xlu0 %v2064
        %v2096 = vpop.xlane.xlu0 %2095
        %2097 = vadd.xlane.f32.xlu0 %v2066
        %v2098 = vpop.xlane.xlu0 %2097
        %2099 = vadd.xlane.f32.xlu0 %v2068
        %v2100 = vpop.xlane.xlu0 %2099
        %2101 = vadd.xlane.f32.xlu0 %v2070
        %v2102 = vpop.xlane.xlu0 %2101
        %2103 = vadd.xlane.f32.xlu0 %v2072
        %v2104 = vpop.xlane.xlu0 %2103
        %2105 = vadd.xlane.f32.xlu0 %v2074
        %v2106 = vpop.xlane.xlu0 %2105
        %2107 = vadd.xlane.f32.xlu0 %v2076
        %v2108 = vpop.xlane.xlu0 %2107
        %2109 = vadd.xlane.f32.xlu0 %v2078
        %v2110 = vpop.xlane.xlu0 %2109
        %2111 = vadd.xlane.f32.xlu0 %v2080
        %v2112 = vpop.xlane.xlu0 %2111
        %2113 = vadd.xlane.f32.xlu0 %v2082
        %v2114 = vpop.xlane.xlu0 %2113
        %2115 = vadd.xlane.f32.xlu0 %v2084
        %v2116 = vpop.xlane.xlu0 %2115
        %2117 = vadd.xlane.f32.xlu0 %v2086
        %v2118 = vpop.xlane.xlu0 %2117
        %v2119 = vrcp.pop %v2088
        %v2120 = vrcp.pop %v2090
        %v2121 = vrcp.pop %v2092
        %v2122 = vrcp.pop %v2094
        %v2123 = vrcp.pop %v2096
        %v2124 = vrcp.pop %v2098
        %v2125 = vrcp.pop %v2100
        %v2126 = vrcp.pop %v2102
        %v2127 = vrcp.pop %v2104
        %v2128 = vrcp.pop %v2106
        %v2129 = vrcp.pop %v2108
        %v2130 = vrcp.pop %v2110
        %v2131 = vrcp.pop %v2112
        %v2132 = vrcp.pop %v2114
        %v2133 = vrcp.pop %v2116
        %v2134 = vrcp.pop %v2118
        %v2135 = vmul.f32 %v2056, %v2119
        %v2136 = vmul.f32 %v2058, %v2120
        %v2137 = vmul.f32 %v2060, %v2121
        %v2138 = vmul.f32 %v2062, %v2122
        %v2139 = vmul.f32 %v2064, %v2123
        %v2140 = vmul.f32 %v2066, %v2124
        %v2141 = vmul.f32 %v2068, %v2125
        %v2142 = vmul.f32 %v2070, %v2126
        %v2143 = vmul.f32 %v2072, %v2127
        %v2144 = vmul.f32 %v2074, %v2128
        %v2145 = vmul.f32 %v2076, %v2129
        %v2146 = vmul.f32 %v2078, %v2130
        %v2147 = vmul.f32 %v2080, %v2131
        %v2148 = vmul.f32 %v2082, %v2132
        %v2149 = vmul.f32 %v2084, %v2133
        %v2150 = vmul.f32 %v2086, %v2134
        %s2151 = scalar_lea.vmem %s509, 128 [#allocation16]
        %2152 = vst [vmem:[%s2151] sm:$0xff] %v2135
        %2153 = vst [vmem:[%s2151 + $0x8] sm:$0xff] %v2136
        %2154 = vst [vmem:[%s2151 + $0x10] sm:$0xff] %v2137
        %2155 = vst [vmem:[%s2151 + $0x18] sm:$0xff] %v2138
        %2156 = vst [vmem:[%s2151 + $0x20] sm:$0xff] %v2139
        %2157 = vst [vmem:[%s2151 + $0x28] sm:$0xff] %v2140
        %2158 = vst [vmem:[%s2151 + $0x30] sm:$0xff] %v2141
        %2159 = vst [vmem:[%s2151 + $0x38] sm:$0xff] %v2142
        %2160 = vst [vmem:[%s2151 + $0x40] sm:$0xff] %v2143
        %2161 = vst [vmem:[%s2151 + $0x48] sm:$0xff] %v2144
        %2162 = vst [vmem:[%s2151 + $0x50] sm:$0xff] %v2145
        %2163 = vst [vmem:[%s2151 + $0x58] sm:$0xff] %v2146
        %2164 = vst [vmem:[%s2151 + $0x60] sm:$0xff] %v2147
        %2165 = vst [vmem:[%s2151 + $0x68] sm:$0xff] %v2148
        %2166 = vst [vmem:[%s2151 + $0x70] sm:$0xff] %v2149
        %2167 = vst [vmem:[%s2151 + $0x78] sm:$0xff] %v2150
        %2184 = vrot.lane.b32.xlu0 %v1702, 96
        %v2185 = vpop.permute.xlu0 %2184
        %2186 = vrot.lane.b32.xlu0 %v1703, 96
        %v2187 = vpop.permute.xlu0 %2186
        %2188 = vrot.lane.b32.xlu0 %v1704, 96
        %v2189 = vpop.permute.xlu0 %2188
        %2190 = vrot.lane.b32.xlu0 %v1705, 96
        %v2191 = vpop.permute.xlu0 %2190
        %2192 = vrot.lane.b32.xlu0 %v1706, 96
        %v2193 = vpop.permute.xlu0 %2192
        %2194 = vrot.lane.b32.xlu0 %v1707, 96
        %v2195 = vpop.permute.xlu0 %2194
        %2196 = vrot.lane.b32.xlu0 %v1708, 96
        %v2197 = vpop.permute.xlu0 %2196
        %2198 = vrot.lane.b32.xlu0 %v1709, 96
        %v2199 = vpop.permute.xlu0 %2198
        %2200 = vrot.lane.b32.xlu0 %v1710, 96
        %v2201 = vpop.permute.xlu0 %2200
        %2202 = vrot.lane.b32.xlu0 %v1711, 96
        %v2203 = vpop.permute.xlu0 %2202
        %2204 = vrot.lane.b32.xlu0 %v1712, 96
        %v2205 = vpop.permute.xlu0 %2204
        %2206 = vrot.lane.b32.xlu0 %v1713, 96
        %v2207 = vpop.permute.xlu0 %2206
        %2208 = vrot.lane.b32.xlu0 %v1714, 96
        %v2209 = vpop.permute.xlu0 %2208
        %2210 = vrot.lane.b32.xlu0 %v1715, 96
        %v2211 = vpop.permute.xlu0 %2210
        %2212 = vrot.lane.b32.xlu0 %v1716, 96
        %v2213 = vpop.permute.xlu0 %2212
        %2214 = vrot.lane.b32.xlu0 %v1717, 96
        %v2215 = vpop.permute.xlu0 %2214
        %2232 = vmatprep.subr.mxu0 0.0
        %2233 = vmatpush1.msra.mxu0 %v2185
        %2234 = vmatprep.subr.mxu0 0.0
        %2235 = vmatpush1.msra.mxu0 %v2187
        %2236 = vmatprep.subr.mxu0 0.0
        %2237 = vmatpush1.msra.mxu0 %v2189
        %2238 = vmatprep.subr.mxu0 0.0
        %2239 = vmatpush1.msra.mxu0 %v2191
        %2240 = vmatprep.subr.mxu0 0.0
        %2241 = vmatpush1.msra.mxu0 %v2193
        %2242 = vmatprep.subr.mxu0 0.0
        %2243 = vmatpush1.msra.mxu0 %v2195
        %2244 = vmatprep.subr.mxu0 0.0
        %2245 = vmatpush1.msra.mxu0 %v2197
        %2246 = vmatprep.subr.mxu0 0.0
        %2247 = vmatpush1.msra.mxu0 %v2199
        %2248 = vmatprep.subr.mxu0 0.0
        %2249 = vmatpush1.msra.mxu0 %v2201
        %2250 = vmatprep.subr.mxu0 0.0
        %2251 = vmatpush1.msra.mxu0 %v2203
        %2252 = vmatprep.subr.mxu0 0.0
        %2253 = vmatpush1.msra.mxu0 %v2205
        %2254 = vmatprep.subr.mxu0 0.0
        %2255 = vmatpush1.msra.mxu0 %v2207
        %2256 = vmatprep.subr.mxu0 0.0
        %2257 = vmatpush1.msra.mxu0 %v2209
        %2258 = vmatprep.subr.mxu0 0.0
        %2259 = vmatpush1.msra.mxu0 %v2211
        %2260 = vmatprep.subr.mxu0 0.0
        %2261 = vmatpush1.msra.mxu0 %v2213
        %2262 = vmatprep.subr.mxu0 0.0
        %2263 = vmatpush1.msra.mxu0 %v2215
        %2264 = vmatprep.subr.mxu0 0.0
        %2265 = vmatpush1.msra.mxu0 0.0
        %2266 = vmatprep.subr.mxu0 0.0
        %2267 = vmatpush1.msra.mxu0 0.0
        %2268 = vmatprep.subr.mxu0 0.0
        %2269 = vmatpush1.msra.mxu0 0.0
        %2270 = vmatprep.subr.mxu0 0.0
        %2271 = vmatpush1.msra.mxu0 0.0
        %2272 = vmatprep.subr.mxu0 0.0
        %2273 = vmatpush1.msra.mxu0 0.0
        %2274 = vmatprep.subr.mxu0 0.0
        %2275 = vmatpush1.msra.mxu0 0.0
        %2276 = vmatprep.subr.mxu0 0.0
        %2277 = vmatpush1.msra.mxu0 0.0
        %2278 = vmatprep.subr.mxu0 0.0
        %2279 = vmatpush1.msra.mxu0 0.0
        %2280 = vmatprep.subr.mxu0 0.0
        %2281 = vmatpush1.msra.mxu0 0.0
        %2282 = vmatprep.subr.mxu0 0.0
        %2283 = vmatpush1.msra.mxu0 0.0
        %2284 = vmatprep.subr.mxu0 0.0
        %2285 = vmatpush1.msra.mxu0 0.0
        %2286 = vmatprep.subr.mxu0 0.0
        %2287 = vmatpush1.msra.mxu0 0.0
        %2288 = vmatprep.subr.mxu0 0.0
        %2289 = vmatpush1.msra.mxu0 0.0
        %2290 = vmatprep.subr.mxu0 0.0
        %2291 = vmatpush1.msra.mxu0 0.0
        %2292 = vmatprep.subr.mxu0 0.0
        %2293 = vmatpush1.msra.mxu0 0.0
        %2294 = vmatprep.subr.mxu0 0.0
        %2295 = vmatpush1.msra.mxu0 0.0
        %2296 = vmatprep.mubr.f32.mxu0 0.0
        %2297 = vmatmul.mubr.f32.gmra.mrb[0].mxu0 %v2135
        %v2298 = vpop.f32.mrb[0].mxu0
        %v2299 = vadd.f32 0.0, %v2298
        %v2300 = vpop.f32.mrb[0].mxu0
        %2301 = vmatprep.mubr.f32.mxu0 0.0
        %2302 = vmatmul.mubr.f32.gmra.mrb[0].mxu0 %v2136
        %v2303 = vpop.f32.mrb[0].mxu0
        %v2304 = vadd.f32 0.0, %v2303
        %v2305 = vpop.f32.mrb[0].mxu0
        %2306 = vmatprep.mubr.f32.mxu0 0.0
        %2307 = vmatmul.mubr.f32.gmra.mrb[0].mxu0 %v2137
        %v2308 = vpop.f32.mrb[0].mxu0
        %v2309 = vadd.f32 0.0, %v2308
        %v2310 = vpop.f32.mrb[0].mxu0
        %2311 = vmatprep.mubr.f32.mxu0 0.0
        %2312 = vmatmul.mubr.f32.gmra.mrb[0].mxu0 %v2138
        %v2313 = vpop.f32.mrb[0].mxu0
        %v2314 = vadd.f32 0.0, %v2313
        %v2315 = vpop.f32.mrb[0].mxu0
        %2316 = vmatprep.mubr.f32.mxu0 0.0
        %2317 = vmatmul.mubr.f32.gmra.mrb[0].mxu0 %v2139
        %v2318 = vpop.f32.mrb[0].mxu0
        %v2319 = vadd.f32 0.0, %v2318
        %v2320 = vpop.f32.mrb[0].mxu0
        %2321 = vmatprep.mubr.f32.mxu0 0.0
        %2322 = vmatmul.mubr.f32.gmra.mrb[0].mxu0 %v2140
        %v2323 = vpop.f32.mrb[0].mxu0
        %v2324 = vadd.f32 0.0, %v2323
        %v2325 = vpop.f32.mrb[0].mxu0
        %2326 = vmatprep.mubr.f32.mxu0 0.0
        %2327 = vmatmul.mubr.f32.gmra.mrb[0].mxu0 %v2141
        %v2328 = vpop.f32.mrb[0].mxu0
        %v2329 = vadd.f32 0.0, %v2328
        %v2330 = vpop.f32.mrb[0].mxu0
        %2331 = vmatprep.mubr.f32.mxu0 0.0
        %2332 = vmatmul.mubr.f32.gmra.mrb[0].mxu0 %v2142
        %v2333 = vpop.f32.mrb[0].mxu0
        %v2334 = vadd.f32 0.0, %v2333
        %v2335 = vpop.f32.mrb[0].mxu0
        %2336 = vmatprep.mubr.f32.mxu0 0.0
        %2337 = vmatmul.mubr.f32.gmra.mrb[0].mxu0 %v2143
        %v2338 = vpop.f32.mrb[0].mxu0
        %v2339 = vadd.f32 0.0, %v2338
        %v2340 = vpop.f32.mrb[0].mxu0
        %2341 = vmatprep.mubr.f32.mxu0 0.0
        %2342 = vmatmul.mubr.f32.gmra.mrb[0].mxu0 %v2144
        %v2343 = vpop.f32.mrb[0].mxu0
        %v2344 = vadd.f32 0.0, %v2343
        %v2345 = vpop.f32.mrb[0].mxu0
        %2346 = vmatprep.mubr.f32.mxu0 0.0
        %2347 = vmatmul.mubr.f32.gmra.mrb[0].mxu0 %v2145
        %v2348 = vpop.f32.mrb[0].mxu0
        %v2349 = vadd.f32 0.0, %v2348
        %v2350 = vpop.f32.mrb[0].mxu0
        %2351 = vmatprep.mubr.f32.mxu0 0.0
        %2352 = vmatmul.mubr.f32.gmra.mrb[0].mxu0 %v2146
        %v2353 = vpop.f32.mrb[0].mxu0
        %v2354 = vadd.f32 0.0, %v2353
        %v2355 = vpop.f32.mrb[0].mxu0
        %2356 = vmatprep.mubr.f32.mxu0 0.0
        %2357 = vmatmul.mubr.f32.gmra.mrb[0].mxu0 %v2147
        %v2358 = vpop.f32.mrb[0].mxu0
        %v2359 = vadd.f32 0.0, %v2358
        %v2360 = vpop.f32.mrb[0].mxu0
        %2361 = vmatprep.mubr.f32.mxu0 0.0
        %2362 = vmatmul.mubr.f32.gmra.mrb[0].mxu0 %v2148
        %v2363 = vpop.f32.mrb[0].mxu0
        %v2364 = vadd.f32 0.0, %v2363
        %v2365 = vpop.f32.mrb[0].mxu0
        %2366 = vmatprep.mubr.f32.mxu0 0.0
        %2367 = vmatmul.mubr.f32.gmra.mrb[0].mxu0 %v2149
        %v2368 = vpop.f32.mrb[0].mxu0
        %v2369 = vadd.f32 0.0, %v2368
        %v2370 = vpop.f32.mrb[0].mxu0
        %2371 = vmatprep.mubr.f32.mxu0 0.0
        %2372 = vmatmul.mubr.f32.gmra.mrb[0].mxu0 %v2150
        %v2373 = vpop.f32.mrb[0].mxu0
        %v2374 = vadd.f32 0.0, %v2373
        %v2375 = vpop.f32.mrb[0].mxu0
        %2376 = vdwg.mxu0
        %v2377 = vld [vmem:[#allocation15 + $0x20] sm:$0xff]
        %v2378 = vld [vmem:[#allocation15 + $0x28] sm:$0xff]
        %v2379 = vld [vmem:[#allocation15 + $0x30] sm:$0xff]
        %v2380 = vld [vmem:[#allocation15 + $0x38] sm:$0xff]
        %v2382 = vsel %vm1135, %v2299, 0
        %v2385 = vsel %vm1135, %v2304, 0
        %v2388 = vsel %vm1135, %v2309, 0
        %v2391 = vsel %vm1135, %v2314, 0
        %v2394 = vsel %vm1135, %v2319, 0
        %v2397 = vsel %vm1135, %v2324, 0
        %v2400 = vsel %vm1135, %v2329, 0
        %v2403 = vsel %vm1135, %v2334, 0
        %v2406 = vsel %vm1135, %v2339, 0
        %v2409 = vsel %vm1135, %v2344, 0
        %v2412 = vsel %vm1135, %v2349, 0
        %v2415 = vsel %vm1135, %v2354, 0
        %v2418 = vsel %vm1135, %v2359, 0
        %v2421 = vsel %vm1135, %v2364, 0
        %v2424 = vsel %vm1135, %v2369, 0
        %v2427 = vsel %vm1135, %v2374, 0
        %2429 = vmatprep.subr.mxu0 0.0
        %2430 = vmatpush1.msra.mxu0 %v2377
        %2431 = vmatprep.subr.mxu0 0.0
        %2432 = vmatpush1.msra.mxu0 %v2378
        %2433 = vmatprep.subr.mxu0 0.0
        %2434 = vmatpush1.msra.mxu0 %v2379
        %2435 = vmatprep.subr.mxu0 0.0
        %2436 = vmatpush1.msra.mxu0 %v2380
        %2437 = vmatprep.subr.mxu0 0.0
        %2438 = vmatpush1.msra.mxu0 0.0
        %2439 = vmatprep.subr.mxu0 0.0
        %2440 = vmatpush1.msra.mxu0 0.0
        %2441 = vmatprep.subr.mxu0 0.0
        %2442 = vmatpush1.msra.mxu0 0.0
        %2443 = vmatprep.subr.mxu0 0.0
        %2444 = vmatpush1.msra.mxu0 0.0
        %2445 = vmatprep.subr.mxu0 0.0
        %2446 = vmatpush1.msra.mxu0 0.0
        %2447 = vmatprep.subr.mxu0 0.0
        %2448 = vmatpush1.msra.mxu0 0.0
        %2449 = vmatprep.subr.mxu0 0.0
        %2450 = vmatpush1.msra.mxu0 0.0
        %2451 = vmatprep.subr.mxu0 0.0
        %2452 = vmatpush1.msra.mxu0 0.0
        %2453 = vmatprep.subr.mxu0 0.0
        %2454 = vmatpush1.msra.mxu0 0.0
        %2455 = vmatprep.subr.mxu0 0.0
        %2456 = vmatpush1.msra.mxu0 0.0
        %2457 = vmatprep.subr.mxu0 0.0
        %2458 = vmatpush1.msra.mxu0 0.0
        %2459 = vmatprep.subr.mxu0 0.0
        %2460 = vmatpush1.msra.mxu0 0.0
        %2461 = vmatprep.subr.mxu0 0.0
        %2462 = vmatpush1.msra.mxu0 0.0
        %2463 = vmatprep.subr.mxu0 0.0
        %2464 = vmatpush1.msra.mxu0 0.0
        %2465 = vmatprep.subr.mxu0 0.0
        %2466 = vmatpush1.msra.mxu0 0.0
        %2467 = vmatprep.subr.mxu0 0.0
        %2468 = vmatpush1.msra.mxu0 0.0
        %2469 = vmatprep.subr.mxu0 0.0
        %2470 = vmatpush1.msra.mxu0 0.0
        %2471 = vmatprep.subr.mxu0 0.0
        %2472 = vmatpush1.msra.mxu0 0.0
        %2473 = vmatprep.subr.mxu0 0.0
        %2474 = vmatpush1.msra.mxu0 0.0
        %2475 = vmatprep.subr.mxu0 0.0
        %2476 = vmatpush1.msra.mxu0 0.0
        %2477 = vmatprep.subr.mxu0 0.0
        %2478 = vmatpush1.msra.mxu0 0.0
        %2479 = vmatprep.subr.mxu0 0.0
        %2480 = vmatpush1.msra.mxu0 0.0
        %2481 = vmatprep.subr.mxu0 0.0
        %2482 = vmatpush1.msra.mxu0 0.0
        %2483 = vmatprep.subr.mxu0 0.0
        %2484 = vmatpush1.msra.mxu0 0.0
        %2485 = vmatprep.subr.mxu0 0.0
        %2486 = vmatpush1.msra.mxu0 0.0
        %2487 = vmatprep.subr.mxu0 0.0
        %2488 = vmatpush1.msra.mxu0 0.0
        %2489 = vmatprep.subr.mxu0 0.0
        %2490 = vmatpush1.msra.mxu0 0.0
        %2491 = vmatprep.subr.mxu0 0.0
        %2492 = vmatpush1.msra.mxu0 0.0
        %2493 = vmatprep.mubr.f32.mxu0 0.0
        %2494 = vmatmul.mubr.f32.gmra.mrb[0].mxu0 %v2382
        %v2495 = vpop.f32.mrb[0].mxu0
        %v2496 = vadd.f32 0.0, %v2495
        %v2497 = vpop.f32.mrb[0].mxu0
        %2498 = vmatprep.mubr.f32.mxu0 0.0
        %2499 = vmatmul.mubr.f32.gmra.mrb[0].mxu0 %v2385
        %v2500 = vpop.f32.mrb[0].mxu0
        %v2501 = vadd.f32 0.0, %v2500
        %v2502 = vpop.f32.mrb[0].mxu0
        %2503 = vmatprep.mubr.f32.mxu0 0.0
        %2504 = vmatmul.mubr.f32.gmra.mrb[0].mxu0 %v2388
        %v2505 = vpop.f32.mrb[0].mxu0
        %v2506 = vadd.f32 0.0, %v2505
        %v2507 = vpop.f32.mrb[0].mxu0
        %2508 = vmatprep.mubr.f32.mxu0 0.0
        %2509 = vmatmul.mubr.f32.gmra.mrb[0].mxu0 %v2391
        %v2510 = vpop.f32.mrb[0].mxu0
        %v2511 = vadd.f32 0.0, %v2510
        %v2512 = vpop.f32.mrb[0].mxu0
        %2513 = vmatprep.mubr.f32.mxu0 0.0
        %2514 = vmatmul.mubr.f32.gmra.mrb[0].mxu0 %v2394
        %v2515 = vpop.f32.mrb[0].mxu0
        %v2516 = vadd.f32 0.0, %v2515
        %v2517 = vpop.f32.mrb[0].mxu0
        %2518 = vmatprep.mubr.f32.mxu0 0.0
        %2519 = vmatmul.mubr.f32.gmra.mrb[0].mxu0 %v2397
        %v2520 = vpop.f32.mrb[0].mxu0
        %v2521 = vadd.f32 0.0, %v2520
        %v2522 = vpop.f32.mrb[0].mxu0
        %2523 = vmatprep.mubr.f32.mxu0 0.0
        %2524 = vmatmul.mubr.f32.gmra.mrb[0].mxu0 %v2400
        %v2525 = vpop.f32.mrb[0].mxu0
        %v2526 = vadd.f32 0.0, %v2525
        %v2527 = vpop.f32.mrb[0].mxu0
        %2528 = vmatprep.mubr.f32.mxu0 0.0
        %2529 = vmatmul.mubr.f32.gmra.mrb[0].mxu0 %v2403
        %v2530 = vpop.f32.mrb[0].mxu0
        %v2531 = vadd.f32 0.0, %v2530
        %v2532 = vpop.f32.mrb[0].mxu0
        %2533 = vmatprep.mubr.f32.mxu0 0.0
        %2534 = vmatmul.mubr.f32.gmra.mrb[0].mxu0 %v2406
        %v2535 = vpop.f32.mrb[0].mxu0
        %v2536 = vadd.f32 0.0, %v2535
        %v2537 = vpop.f32.mrb[0].mxu0
        %2538 = vmatprep.mubr.f32.mxu0 0.0
        %2539 = vmatmul.mubr.f32.gmra.mrb[0].mxu0 %v2409
        %v2540 = vpop.f32.mrb[0].mxu0
        %v2541 = vadd.f32 0.0, %v2540
        %v2542 = vpop.f32.mrb[0].mxu0
        %2543 = vmatprep.mubr.f32.mxu0 0.0
        %2544 = vmatmul.mubr.f32.gmra.mrb[0].mxu0 %v2412
        %v2545 = vpop.f32.mrb[0].mxu0
        %v2546 = vadd.f32 0.0, %v2545
        %v2547 = vpop.f32.mrb[0].mxu0
        %2548 = vmatprep.mubr.f32.mxu0 0.0
        %2549 = vmatmul.mubr.f32.gmra.mrb[0].mxu0 %v2415
        %v2550 = vpop.f32.mrb[0].mxu0
        %v2551 = vadd.f32 0.0, %v2550
        %v2552 = vpop.f32.mrb[0].mxu0
        %2553 = vmatprep.mubr.f32.mxu0 0.0
        %2554 = vmatmul.mubr.f32.gmra.mrb[0].mxu0 %v2418
        %v2555 = vpop.f32.mrb[0].mxu0
        %v2556 = vadd.f32 0.0, %v2555
        %v2557 = vpop.f32.mrb[0].mxu0
        %2558 = vmatprep.mubr.f32.mxu0 0.0
        %2559 = vmatmul.mubr.f32.gmra.mrb[0].mxu0 %v2421
        %v2560 = vpop.f32.mrb[0].mxu0
        %v2561 = vadd.f32 0.0, %v2560
        %v2562 = vpop.f32.mrb[0].mxu0
        %2563 = vmatprep.mubr.f32.mxu0 0.0
        %2564 = vmatmul.mubr.f32.gmra.mrb[0].mxu0 %v2424
        %v2565 = vpop.f32.mrb[0].mxu0
        %v2566 = vadd.f32 0.0, %v2565
        %v2567 = vpop.f32.mrb[0].mxu0
        %2568 = vmatprep.mubr.f32.mxu0 0.0
        %2569 = vmatmul.mubr.f32.gmra.mrb[0].mxu0 %v2427
        %v2570 = vpop.f32.mrb[0].mxu0
        %v2571 = vadd.f32 0.0, %v2570
        %v2572 = vpop.f32.mrb[0].mxu0
        %2573 = vdwg.mxu0
        %v2575 = vsel %vm1135, %v1604, 0
        %v2578 = vsel %vm1135, %v1609, 0
        %v2581 = vsel %vm1135, %v1614, 0
        %v2584 = vsel %vm1135, %v1619, 0
        %v2587 = vsel %vm1135, %v1624, 0
        %v2590 = vsel %vm1135, %v1629, 0
        %v2593 = vsel %vm1135, %v1634, 0
        %v2596 = vsel %vm1135, %v1639, 0
        %v2599 = vsel %vm1135, %v1644, 0
        %v2602 = vsel %vm1135, %v1649, 0
        %v2605 = vsel %vm1135, %v1654, 0
        %v2608 = vsel %vm1135, %v1659, 0
        %v2611 = vsel %vm1135, %v1664, 0
        %v2614 = vsel %vm1135, %v1669, 0
        %v2617 = vsel %vm1135, %v1674, 0
        %v2620 = vsel %vm1135, %v1679, 0
        %2622 = vmatprep.subr.mxu0 0.0
        %2623 = vmatpush1.msra.mxu0 %v1682
        %2624 = vmatprep.subr.mxu0 0.0
        %2625 = vmatpush1.msra.mxu0 %v1683
        %2626 = vmatprep.subr.mxu0 0.0
        %2627 = vmatpush1.msra.mxu0 %v1684
        %2628 = vmatprep.subr.mxu0 0.0
        %2629 = vmatpush1.msra.mxu0 %v1685
        %2630 = vmatprep.subr.mxu0 0.0
        %2631 = vmatpush1.msra.mxu0 0.0
        %2632 = vmatprep.subr.mxu0 0.0
        %2633 = vmatpush1.msra.mxu0 0.0
        %2634 = vmatprep.subr.mxu0 0.0
        %2635 = vmatpush1.msra.mxu0 0.0
        %2636 = vmatprep.subr.mxu0 0.0
        %2637 = vmatpush1.msra.mxu0 0.0
        %2638 = vmatprep.subr.mxu0 0.0
        %2639 = vmatpush1.msra.mxu0 0.0
        %2640 = vmatprep.subr.mxu0 0.0
        %2641 = vmatpush1.msra.mxu0 0.0
        %2642 = vmatprep.subr.mxu0 0.0
        %2643 = vmatpush1.msra.mxu0 0.0
        %2644 = vmatprep.subr.mxu0 0.0
        %2645 = vmatpush1.msra.mxu0 0.0
        %2646 = vmatprep.subr.mxu0 0.0
        %2647 = vmatpush1.msra.mxu0 0.0
        %2648 = vmatprep.subr.mxu0 0.0
        %2649 = vmatpush1.msra.mxu0 0.0
        %2650 = vmatprep.subr.mxu0 0.0
        %2651 = vmatpush1.msra.mxu0 0.0
        %2652 = vmatprep.subr.mxu0 0.0
        %2653 = vmatpush1.msra.mxu0 0.0
        %2654 = vmatprep.subr.mxu0 0.0
        %2655 = vmatpush1.msra.mxu0 0.0
        %2656 = vmatprep.subr.mxu0 0.0
        %2657 = vmatpush1.msra.mxu0 0.0
        %2658 = vmatprep.subr.mxu0 0.0
        %2659 = vmatpush1.msra.mxu0 0.0
        %2660 = vmatprep.subr.mxu0 0.0
        %2661 = vmatpush1.msra.mxu0 0.0
        %2662 = vmatprep.subr.mxu0 0.0
        %2663 = vmatpush1.msra.mxu0 0.0
        %2664 = vmatprep.subr.mxu0 0.0
        %2665 = vmatpush1.msra.mxu0 0.0
        %2666 = vmatprep.subr.mxu0 0.0
        %2667 = vmatpush1.msra.mxu0 0.0
        %2668 = vmatprep.subr.mxu0 0.0
        %2669 = vmatpush1.msra.mxu0 0.0
        %2670 = vmatprep.subr.mxu0 0.0
        %2671 = vmatpush1.msra.mxu0 0.0
        %2672 = vmatprep.subr.mxu0 0.0
        %2673 = vmatpush1.msra.mxu0 0.0
        %2674 = vmatprep.subr.mxu0 0.0
        %2675 = vmatpush1.msra.mxu0 0.0
        %2676 = vmatprep.subr.mxu0 0.0
        %2677 = vmatpush1.msra.mxu0 0.0
        %2678 = vmatprep.subr.mxu0 0.0
        %2679 = vmatpush1.msra.mxu0 0.0
        %2680 = vmatprep.subr.mxu0 0.0
        %2681 = vmatpush1.msra.mxu0 0.0
        %2682 = vmatprep.subr.mxu0 0.0
        %2683 = vmatpush1.msra.mxu0 0.0
        %2684 = vmatprep.subr.mxu0 0.0
        %2685 = vmatpush1.msra.mxu0 0.0
        %2686 = vmatprep.mubr.f32.mxu0 0.0
        %2687 = vmatmul.mubr.f32.gmra.mrb[0].mxu0 %v2575
        %v2688 = vpop.f32.mrb[0].mxu0
        %v2689 = vadd.f32 %v2496, %v2688
        %v2690 = vpop.f32.mrb[0].mxu0
        %2691 = vmatprep.mubr.f32.mxu0 0.0
        %2692 = vmatmul.mubr.f32.gmra.mrb[0].mxu0 %v2578
        %v2693 = vpop.f32.mrb[0].mxu0
        %v2694 = vadd.f32 %v2501, %v2693
        %v2695 = vpop.f32.mrb[0].mxu0
        %2696 = vmatprep.mubr.f32.mxu0 0.0
        %2697 = vmatmul.mubr.f32.gmra.mrb[0].mxu0 %v2581
        %v2698 = vpop.f32.mrb[0].mxu0
        %v2699 = vadd.f32 %v2506, %v2698
        %v2700 = vpop.f32.mrb[0].mxu0
        %2701 = vmatprep.mubr.f32.mxu0 0.0
        %2702 = vmatmul.mubr.f32.gmra.mrb[0].mxu0 %v2584
        %v2703 = vpop.f32.mrb[0].mxu0
        %v2704 = vadd.f32 %v2511, %v2703
        %v2705 = vpop.f32.mrb[0].mxu0
        %2706 = vmatprep.mubr.f32.mxu0 0.0
        %2707 = vmatmul.mubr.f32.gmra.mrb[0].mxu0 %v2587
        %v2708 = vpop.f32.mrb[0].mxu0
        %v2709 = vadd.f32 %v2516, %v2708
        %v2710 = vpop.f32.mrb[0].mxu0
        %2711 = vmatprep.mubr.f32.mxu0 0.0
        %2712 = vmatmul.mubr.f32.gmra.mrb[0].mxu0 %v2590
        %v2713 = vpop.f32.mrb[0].mxu0
        %v2714 = vadd.f32 %v2521, %v2713
        %v2715 = vpop.f32.mrb[0].mxu0
        %2716 = vmatprep.mubr.f32.mxu0 0.0
        %2717 = vmatmul.mubr.f32.gmra.mrb[0].mxu0 %v2593
        %v2718 = vpop.f32.mrb[0].mxu0
        %v2719 = vadd.f32 %v2526, %v2718
        %v2720 = vpop.f32.mrb[0].mxu0
        %2721 = vmatprep.mubr.f32.mxu0 0.0
        %2722 = vmatmul.mubr.f32.gmra.mrb[0].mxu0 %v2596
        %v2723 = vpop.f32.mrb[0].mxu0
        %v2724 = vadd.f32 %v2531, %v2723
        %v2725 = vpop.f32.mrb[0].mxu0
        %2726 = vmatprep.mubr.f32.mxu0 0.0
        %2727 = vmatmul.mubr.f32.gmra.mrb[0].mxu0 %v2599
        %v2728 = vpop.f32.mrb[0].mxu0
        %v2729 = vadd.f32 %v2536, %v2728
        %v2730 = vpop.f32.mrb[0].mxu0
        %2731 = vmatprep.mubr.f32.mxu0 0.0
        %2732 = vmatmul.mubr.f32.gmra.mrb[0].mxu0 %v2602
        %v2733 = vpop.f32.mrb[0].mxu0
        %v2734 = vadd.f32 %v2541, %v2733
        %v2735 = vpop.f32.mrb[0].mxu0
        %2736 = vmatprep.mubr.f32.mxu0 0.0
        %2737 = vmatmul.mubr.f32.gmra.mrb[0].mxu0 %v2605
        %v2738 = vpop.f32.mrb[0].mxu0
        %v2739 = vadd.f32 %v2546, %v2738
        %v2740 = vpop.f32.mrb[0].mxu0
        %2741 = vmatprep.mubr.f32.mxu0 0.0
        %2742 = vmatmul.mubr.f32.gmra.mrb[0].mxu0 %v2608
        %v2743 = vpop.f32.mrb[0].mxu0
        %v2744 = vadd.f32 %v2551, %v2743
        %v2745 = vpop.f32.mrb[0].mxu0
        %2746 = vmatprep.mubr.f32.mxu0 0.0
        %2747 = vmatmul.mubr.f32.gmra.mrb[0].mxu0 %v2611
        %v2748 = vpop.f32.mrb[0].mxu0
        %v2749 = vadd.f32 %v2556, %v2748
        %v2750 = vpop.f32.mrb[0].mxu0
        %2751 = vmatprep.mubr.f32.mxu0 0.0
        %2752 = vmatmul.mubr.f32.gmra.mrb[0].mxu0 %v2614
        %v2753 = vpop.f32.mrb[0].mxu0
        %v2754 = vadd.f32 %v2561, %v2753
        %v2755 = vpop.f32.mrb[0].mxu0
        %2756 = vmatprep.mubr.f32.mxu0 0.0
        %2757 = vmatmul.mubr.f32.gmra.mrb[0].mxu0 %v2617
        %v2758 = vpop.f32.mrb[0].mxu0
        %v2759 = vadd.f32 %v2566, %v2758
        %v2760 = vpop.f32.mrb[0].mxu0
        %2761 = vmatprep.mubr.f32.mxu0 0.0
        %2762 = vmatmul.mubr.f32.gmra.mrb[0].mxu0 %v2620
        %v2763 = vpop.f32.mrb[0].mxu0
        %v2764 = vadd.f32 %v2571, %v2763
        %v2765 = vpop.f32.mrb[0].mxu0
        %2766 = vdwg.mxu0
        %v2767 = vld [vmem:[#allocation2] sm:$0xff]
        %v2768 = vld [vmem:[#allocation2 + $0x8] sm:$0xff]
        %v2769 = vld [vmem:[#allocation2 + $0x10] sm:$0xff]
        %v2770 = vld [vmem:[#allocation2 + $0x18] sm:$0xff]
        %v2771 = vld [vmem:[#allocation2 + $0x20] sm:$0xff]
        %v2772 = vld [vmem:[#allocation2 + $0x28] sm:$0xff]
        %v2773 = vld [vmem:[#allocation2 + $0x30] sm:$0xff]
        %v2774 = vld [vmem:[#allocation2 + $0x38] sm:$0xff]
        %v2775 = vld [vmem:[#allocation2 + $0x40] sm:$0xff]
        %v2776 = vld [vmem:[#allocation2 + $0x48] sm:$0xff]
        %v2777 = vld [vmem:[#allocation2 + $0x50] sm:$0xff]
        %v2778 = vld [vmem:[#allocation2 + $0x58] sm:$0xff]
        %v2779 = vld [vmem:[#allocation2 + $0x60] sm:$0xff]
        %v2780 = vld [vmem:[#allocation2 + $0x68] sm:$0xff]
        %v2781 = vld [vmem:[#allocation2 + $0x70] sm:$0xff]
        %v2782 = vld [vmem:[#allocation2 + $0x78] sm:$0xff]
        %v2783 = vld [vmem:[#allocation3] sm:$0xff]
        %v2784 = vld [vmem:[#allocation3 + $0x8] sm:$0xff]
        %v2785 = vld [vmem:[#allocation3 + $0x10] sm:$0xff]
        %v2786 = vld [vmem:[#allocation3 + $0x18] sm:$0xff]
        %v2787 = vld [vmem:[#allocation3 + $0x20] sm:$0xff]
        %v2788 = vld [vmem:[#allocation3 + $0x28] sm:$0xff]
        %v2789 = vld [vmem:[#allocation3 + $0x30] sm:$0xff]
        %v2790 = vld [vmem:[#allocation3 + $0x38] sm:$0xff]
        %v2791 = vld [vmem:[#allocation3 + $0x40] sm:$0xff]
        %v2792 = vld [vmem:[#allocation3 + $0x48] sm:$0xff]
        %v2793 = vld [vmem:[#allocation3 + $0x50] sm:$0xff]
        %v2794 = vld [vmem:[#allocation3 + $0x58] sm:$0xff]
        %v2795 = vld [vmem:[#allocation3 + $0x60] sm:$0xff]
        %v2796 = vld [vmem:[#allocation3 + $0x68] sm:$0xff]
        %v2797 = vld [vmem:[#allocation3 + $0x70] sm:$0xff]
        %v2798 = vld [vmem:[#allocation3 + $0x78] sm:$0xff]
        %2799 = vrot.lane.b32.xlu0 %v1087, 64
        %v2800 = vpop.permute.xlu0 %2799
        %2801 = vrot.lane.b32.xlu0 %v1088, 64
        %v2802 = vpop.permute.xlu0 %2801
        %2803 = vrot.lane.b32.xlu0 %v1089, 64
        %v2804 = vpop.permute.xlu0 %2803
        %2805 = vrot.lane.b32.xlu0 %v1090, 64
        %v2806 = vpop.permute.xlu0 %2805
        %2807 = vrot.lane.b32.xlu0 %v1091, 64
        %v2808 = vpop.permute.xlu0 %2807
        %2809 = vrot.lane.b32.xlu0 %v1092, 64
        %v2810 = vpop.permute.xlu0 %2809
        %2811 = vrot.lane.b32.xlu0 %v1093, 64
        %v2812 = vpop.permute.xlu0 %2811
        %2813 = vrot.lane.b32.xlu0 %v1094, 64
        %v2814 = vpop.permute.xlu0 %2813
        %2815 = vrot.lane.b32.xlu0 %v1095, 64
        %v2816 = vpop.permute.xlu0 %2815
        %2817 = vrot.lane.b32.xlu0 %v1096, 64
        %v2818 = vpop.permute.xlu0 %2817
        %2819 = vrot.lane.b32.xlu0 %v1097, 64
        %v2820 = vpop.permute.xlu0 %2819
        %2821 = vrot.lane.b32.xlu0 %v1098, 64
        %v2822 = vpop.permute.xlu0 %2821
        %2823 = vrot.lane.b32.xlu0 %v1099, 64
        %v2824 = vpop.permute.xlu0 %2823
        %2825 = vrot.lane.b32.xlu0 %v1100, 64
        %v2826 = vpop.permute.xlu0 %2825
        %2827 = vrot.lane.b32.xlu0 %v1101, 64
        %v2828 = vpop.permute.xlu0 %2827
        %2829 = vrot.lane.b32.xlu0 %v1102, 64
        %v2830 = vpop.permute.xlu0 %2829
        %2847 = vrot.lane.b32.xlu0 %v2767, 64
        %v2848 = vpop.permute.xlu0 %2847
        %2849 = vrot.lane.b32.xlu0 %v2768, 64
        %v2850 = vpop.permute.xlu0 %2849
        %2851 = vrot.lane.b32.xlu0 %v2769, 64
        %v2852 = vpop.permute.xlu0 %2851
        %2853 = vrot.lane.b32.xlu0 %v2770, 64
        %v2854 = vpop.permute.xlu0 %2853
        %2855 = vrot.lane.b32.xlu0 %v2771, 64
        %v2856 = vpop.permute.xlu0 %2855
        %2857 = vrot.lane.b32.xlu0 %v2772, 64
        %v2858 = vpop.permute.xlu0 %2857
        %2859 = vrot.lane.b32.xlu0 %v2773, 64
        %v2860 = vpop.permute.xlu0 %2859
        %2861 = vrot.lane.b32.xlu0 %v2774, 64
        %v2862 = vpop.permute.xlu0 %2861
        %2863 = vrot.lane.b32.xlu0 %v2775, 64
        %v2864 = vpop.permute.xlu0 %2863
        %2865 = vrot.lane.b32.xlu0 %v2776, 64
        %v2866 = vpop.permute.xlu0 %2865
        %2867 = vrot.lane.b32.xlu0 %v2777, 64
        %v2868 = vpop.permute.xlu0 %2867
        %2869 = vrot.lane.b32.xlu0 %v2778, 64
        %v2870 = vpop.permute.xlu0 %2869
        %2871 = vrot.lane.b32.xlu0 %v2779, 64
        %v2872 = vpop.permute.xlu0 %2871
        %2873 = vrot.lane.b32.xlu0 %v2780, 64
        %v2874 = vpop.permute.xlu0 %2873
        %2875 = vrot.lane.b32.xlu0 %v2781, 64
        %v2876 = vpop.permute.xlu0 %2875
        %2877 = vrot.lane.b32.xlu0 %v2782, 64
        %v2878 = vpop.permute.xlu0 %2877
        %v2879 = vsel %vm1135, %v2800, 0
        %v2881 = vsel %vm1135, %v2802, 0
        %v2883 = vsel %vm1135, %v2804, 0
        %v2885 = vsel %vm1135, %v2806, 0
        %v2887 = vsel %vm1135, %v2808, 0
        %v2889 = vsel %vm1135, %v2810, 0
        %v2891 = vsel %vm1135, %v2812, 0
        %v2893 = vsel %vm1135, %v2814, 0
        %v2895 = vsel %vm1135, %v2816, 0
        %v2897 = vsel %vm1135, %v2818, 0
        %v2899 = vsel %vm1135, %v2820, 0
        %v2901 = vsel %vm1135, %v2822, 0
        %v2903 = vsel %vm1135, %v2824, 0
        %v2905 = vsel %vm1135, %v2826, 0
        %v2907 = vsel %vm1135, %v2828, 0
        %v2909 = vsel %vm1135, %v2830, 0
        %v2911 = vsel %vm1135, %v2848, 0
        %v2913 = vsel %vm1135, %v2850, 0
        %v2915 = vsel %vm1135, %v2852, 0
        %v2917 = vsel %vm1135, %v2854, 0
        %v2919 = vsel %vm1135, %v2856, 0
        %v2921 = vsel %vm1135, %v2858, 0
        %v2923 = vsel %vm1135, %v2860, 0
        %v2925 = vsel %vm1135, %v2862, 0
        %v2927 = vsel %vm1135, %v2864, 0
        %v2929 = vsel %vm1135, %v2866, 0
        %v2931 = vsel %vm1135, %v2868, 0
        %v2933 = vsel %vm1135, %v2870, 0
        %v2935 = vsel %vm1135, %v2872, 0
        %v2937 = vsel %vm1135, %v2874, 0
        %v2939 = vsel %vm1135, %v2876, 0
        %v2941 = vsel %vm1135, %v2878, 0
        %2943 = vmatprep.subr.mxu0 0.0
        %2944 = vmatpush1.xpose.msra.mxu0 %v2911
        %2945 = vmatprep.subr.mxu0 0.0
        %2946 = vmatpush1.xpose.msra.mxu0 %v2913
        %2947 = vmatprep.subr.mxu0 0.0
        %2948 = vmatpush1.xpose.msra.mxu0 %v2915
        %2949 = vmatprep.subr.mxu0 0.0
        %2950 = vmatpush1.xpose.msra.mxu0 %v2917
        %2951 = vmatprep.subr.mxu0 0.0
        %2952 = vmatpush1.xpose.msra.mxu0 %v2919
        %2953 = vmatprep.subr.mxu0 0.0
        %2954 = vmatpush1.xpose.msra.mxu0 %v2921
        %2955 = vmatprep.subr.mxu0 0.0
        %2956 = vmatpush1.xpose.msra.mxu0 %v2923
        %2957 = vmatprep.subr.mxu0 0.0
        %2958 = vmatpush1.xpose.msra.mxu0 %v2925
        %2959 = vmatprep.subr.mxu0 0.0
        %2960 = vmatpush1.xpose.msra.mxu0 %v2927
        %2961 = vmatprep.subr.mxu0 0.0
        %2962 = vmatpush1.xpose.msra.mxu0 %v2929
        %2963 = vmatprep.subr.mxu0 0.0
        %2964 = vmatpush1.xpose.msra.mxu0 %v2931
        %2965 = vmatprep.subr.mxu0 0.0
        %2966 = vmatpush1.xpose.msra.mxu0 %v2933
        %2967 = vmatprep.subr.mxu0 0.0
        %2968 = vmatpush1.xpose.msra.mxu0 %v2935
        %2969 = vmatprep.subr.mxu0 0.0
        %2970 = vmatpush1.xpose.msra.mxu0 %v2937
        %2971 = vmatprep.subr.mxu0 0.0
        %2972 = vmatpush1.xpose.msra.mxu0 %v2939
        %2973 = vmatprep.subr.mxu0 0.0
        %2974 = vmatpush1.xpose.msra.mxu0 %v2941
        %2975 = vmatprep.subr.mxu0 0.0
        %2976 = vmatpush1.xpose.msra.mxu0 0.0
        %2977 = vmatprep.subr.mxu0 0.0
        %2978 = vmatpush1.xpose.msra.mxu0 0.0
        %2979 = vmatprep.subr.mxu0 0.0
        %2980 = vmatpush1.xpose.msra.mxu0 0.0
        %2981 = vmatprep.subr.mxu0 0.0
        %2982 = vmatpush1.xpose.msra.mxu0 0.0
        %2983 = vmatprep.subr.mxu0 0.0
        %2984 = vmatpush1.xpose.msra.mxu0 0.0
        %2985 = vmatprep.subr.mxu0 0.0
        %2986 = vmatpush1.xpose.msra.mxu0 0.0
        %2987 = vmatprep.subr.mxu0 0.0
        %2988 = vmatpush1.xpose.msra.mxu0 0.0
        %2989 = vmatprep.subr.mxu0 0.0
        %2990 = vmatpush1.xpose.msra.mxu0 0.0
        %2991 = vmatprep.subr.mxu0 0.0
        %2992 = vmatpush1.xpose.msra.mxu0 0.0
        %2993 = vmatprep.subr.mxu0 0.0
        %2994 = vmatpush1.xpose.msra.mxu0 0.0
        %2995 = vmatprep.subr.mxu0 0.0
        %2996 = vmatpush1.xpose.msra.mxu0 0.0
        %2997 = vmatprep.subr.mxu0 0.0
        %2998 = vmatpush1.xpose.msra.mxu0 0.0
        %2999 = vmatprep.subr.mxu0 0.0
        %3000 = vmatpush1.xpose.msra.mxu0 0.0
        %3001 = vmatprep.subr.mxu0 0.0
        %3002 = vmatpush1.xpose.msra.mxu0 0.0
        %3003 = vmatprep.subr.mxu0 0.0
        %3004 = vmatpush1.xpose.msra.mxu0 0.0
        %3005 = vmatprep.subr.mxu0 0.0
        %3006 = vmatpush1.xpose.msra.mxu0 0.0
        %3007 = vmatprep.mubr.f32.mxu0 0.0
        %3008 = vmatmul.mubr.f32.gmra.mrb[0].mxu0 %v2879
        %v3009 = vpop.f32.mrb[0].mxu0
        %v3010 = vadd.f32 0.0, %v3009
        %v3011 = vpop.f32.mrb[0].mxu0
        %3012 = vmatprep.mubr.f32.mxu0 0.0
        %3013 = vmatmul.mubr.f32.gmra.mrb[0].mxu0 %v2881
        %v3014 = vpop.f32.mrb[0].mxu0
        %v3015 = vadd.f32 0.0, %v3014
        %v3016 = vpop.f32.mrb[0].mxu0
        %3017 = vmatprep.mubr.f32.mxu0 0.0
        %3018 = vmatmul.mubr.f32.gmra.mrb[0].mxu0 %v2883
        %v3019 = vpop.f32.mrb[0].mxu0
        %v3020 = vadd.f32 0.0, %v3019
        %v3021 = vpop.f32.mrb[0].mxu0
        %3022 = vmatprep.mubr.f32.mxu0 0.0
        %3023 = vmatmul.mubr.f32.gmra.mrb[0].mxu0 %v2885
        %v3024 = vpop.f32.mrb[0].mxu0
        %v3025 = vadd.f32 0.0, %v3024
        %v3026 = vpop.f32.mrb[0].mxu0
        %3027 = vmatprep.mubr.f32.mxu0 0.0
        %3028 = vmatmul.mubr.f32.gmra.mrb[0].mxu0 %v2887
        %v3029 = vpop.f32.mrb[0].mxu0
        %v3030 = vadd.f32 0.0, %v3029
        %v3031 = vpop.f32.mrb[0].mxu0
        %3032 = vmatprep.mubr.f32.mxu0 0.0
        %3033 = vmatmul.mubr.f32.gmra.mrb[0].mxu0 %v2889
        %v3034 = vpop.f32.mrb[0].mxu0
        %v3035 = vadd.f32 0.0, %v3034
        %v3036 = vpop.f32.mrb[0].mxu0
        %3037 = vmatprep.mubr.f32.mxu0 0.0
        %3038 = vmatmul.mubr.f32.gmra.mrb[0].mxu0 %v2891
        %v3039 = vpop.f32.mrb[0].mxu0
        %v3040 = vadd.f32 0.0, %v3039
        %v3041 = vpop.f32.mrb[0].mxu0
        %3042 = vmatprep.mubr.f32.mxu0 0.0
        %3043 = vmatmul.mubr.f32.gmra.mrb[0].mxu0 %v2893
        %v3044 = vpop.f32.mrb[0].mxu0
        %v3045 = vadd.f32 0.0, %v3044
        %v3046 = vpop.f32.mrb[0].mxu0
        %3047 = vmatprep.mubr.f32.mxu0 0.0
        %3048 = vmatmul.mubr.f32.gmra.mrb[0].mxu0 %v2895
        %v3049 = vpop.f32.mrb[0].mxu0
        %v3050 = vadd.f32 0.0, %v3049
        %v3051 = vpop.f32.mrb[0].mxu0
        %3052 = vmatprep.mubr.f32.mxu0 0.0
        %3053 = vmatmul.mubr.f32.gmra.mrb[0].mxu0 %v2897
        %v3054 = vpop.f32.mrb[0].mxu0
        %v3055 = vadd.f32 0.0, %v3054
        %v3056 = vpop.f32.mrb[0].mxu0
        %3057 = vmatprep.mubr.f32.mxu0 0.0
        %3058 = vmatmul.mubr.f32.gmra.mrb[0].mxu0 %v2899
        %v3059 = vpop.f32.mrb[0].mxu0
        %v3060 = vadd.f32 0.0, %v3059
        %v3061 = vpop.f32.mrb[0].mxu0
        %3062 = vmatprep.mubr.f32.mxu0 0.0
        %3063 = vmatmul.mubr.f32.gmra.mrb[0].mxu0 %v2901
        %v3064 = vpop.f32.mrb[0].mxu0
        %v3065 = vadd.f32 0.0, %v3064
        %v3066 = vpop.f32.mrb[0].mxu0
        %3067 = vmatprep.mubr.f32.mxu0 0.0
        %3068 = vmatmul.mubr.f32.gmra.mrb[0].mxu0 %v2903
        %v3069 = vpop.f32.mrb[0].mxu0
        %v3070 = vadd.f32 0.0, %v3069
        %v3071 = vpop.f32.mrb[0].mxu0
        %3072 = vmatprep.mubr.f32.mxu0 0.0
        %3073 = vmatmul.mubr.f32.gmra.mrb[0].mxu0 %v2905
        %v3074 = vpop.f32.mrb[0].mxu0
        %v3075 = vadd.f32 0.0, %v3074
        %v3076 = vpop.f32.mrb[0].mxu0
        %3077 = vmatprep.mubr.f32.mxu0 0.0
        %3078 = vmatmul.mubr.f32.gmra.mrb[0].mxu0 %v2907
        %v3079 = vpop.f32.mrb[0].mxu0
        %v3080 = vadd.f32 0.0, %v3079
        %v3081 = vpop.f32.mrb[0].mxu0
        %3082 = vmatprep.mubr.f32.mxu0 0.0
        %3083 = vmatmul.mubr.f32.gmra.mrb[0].mxu0 %v2909
        %v3084 = vpop.f32.mrb[0].mxu0
        %v3085 = vadd.f32 0.0, %v3084
        %v3086 = vpop.f32.mrb[0].mxu0
        %3087 = vdwg.mxu0
        %3088 = vmax.xlane.f32.xlu0 %v3010
        %v3089 = vpop.xlane.xlu0 %3088
        %3090 = vmax.xlane.f32.xlu0 %v3015
        %v3091 = vpop.xlane.xlu0 %3090
        %3092 = vmax.xlane.f32.xlu0 %v3020
        %v3093 = vpop.xlane.xlu0 %3092
        %3094 = vmax.xlane.f32.xlu0 %v3025
        %v3095 = vpop.xlane.xlu0 %3094
        %3096 = vmax.xlane.f32.xlu0 %v3030
        %v3097 = vpop.xlane.xlu0 %3096
        %3098 = vmax.xlane.f32.xlu0 %v3035
        %v3099 = vpop.xlane.xlu0 %3098
        %3100 = vmax.xlane.f32.xlu0 %v3040
        %v3101 = vpop.xlane.xlu0 %3100
        %3102 = vmax.xlane.f32.xlu0 %v3045
        %v3103 = vpop.xlane.xlu0 %3102
        %3104 = vmax.xlane.f32.xlu0 %v3050
        %v3105 = vpop.xlane.xlu0 %3104
        %3106 = vmax.xlane.f32.xlu0 %v3055
        %v3107 = vpop.xlane.xlu0 %3106
        %3108 = vmax.xlane.f32.xlu0 %v3060
        %v3109 = vpop.xlane.xlu0 %3108
        %3110 = vmax.xlane.f32.xlu0 %v3065
        %v3111 = vpop.xlane.xlu0 %3110
        %3112 = vmax.xlane.f32.xlu0 %v3070
        %v3113 = vpop.xlane.xlu0 %3112
        %3114 = vmax.xlane.f32.xlu0 %v3075
        %v3115 = vpop.xlane.xlu0 %3114
        %3116 = vmax.xlane.f32.xlu0 %v3080
        %v3117 = vpop.xlane.xlu0 %3116
        %3118 = vmax.xlane.f32.xlu0 %v3085
        %v3119 = vpop.xlane.xlu0 %3118
        %v3120 = vsub.f32 %v3010, %v3089
        %v3121 = vsub.f32 %v3015, %v3091
        %v3122 = vsub.f32 %v3020, %v3093
        %v3123 = vsub.f32 %v3025, %v3095
        %v3124 = vsub.f32 %v3030, %v3097
        %v3125 = vsub.f32 %v3035, %v3099
        %v3126 = vsub.f32 %v3040, %v3101
        %v3127 = vsub.f32 %v3045, %v3103
        %v3128 = vsub.f32 %v3050, %v3105
        %v3129 = vsub.f32 %v3055, %v3107
        %v3130 = vsub.f32 %v3060, %v3109
        %v3131 = vsub.f32 %v3065, %v3111
        %v3132 = vsub.f32 %v3070, %v3113
        %v3133 = vsub.f32 %v3075, %v3115
        %v3134 = vsub.f32 %v3080, %v3117
        %v3135 = vsub.f32 %v3085, %v3119
        %v3136 = vmul.f32 %v3120, 1.442695
        %v3137 = vpow.pop %v3136
        %v3138 = vmul.f32 %v3121, 1.442695
        %v3139 = vpow.pop %v3138
        %v3140 = vmul.f32 %v3122, 1.442695
        %v3141 = vpow.pop %v3140
        %v3142 = vmul.f32 %v3123, 1.442695
        %v3143 = vpow.pop %v3142
        %v3144 = vmul.f32 %v3124, 1.442695
        %v3145 = vpow.pop %v3144
        %v3146 = vmul.f32 %v3125, 1.442695
        %v3147 = vpow.pop %v3146
        %v3148 = vmul.f32 %v3126, 1.442695
        %v3149 = vpow.pop %v3148
        %v3150 = vmul.f32 %v3127, 1.442695
        %v3151 = vpow.pop %v3150
        %v3152 = vmul.f32 %v3128, 1.442695
        %v3153 = vpow.pop %v3152
        %v3154 = vmul.f32 %v3129, 1.442695
        %v3155 = vpow.pop %v3154
        %v3156 = vmul.f32 %v3130, 1.442695
        %v3157 = vpow.pop %v3156
        %v3158 = vmul.f32 %v3131, 1.442695
        %v3159 = vpow.pop %v3158
        %v3160 = vmul.f32 %v3132, 1.442695
        %v3161 = vpow.pop %v3160
        %v3162 = vmul.f32 %v3133, 1.442695
        %v3163 = vpow.pop %v3162
        %v3164 = vmul.f32 %v3134, 1.442695
        %v3165 = vpow.pop %v3164
        %v3166 = vmul.f32 %v3135, 1.442695
        %v3167 = vpow.pop %v3166
        %3168 = vadd.xlane.f32.xlu0 %v3137
        %v3169 = vpop.xlane.xlu0 %3168
        %3170 = vadd.xlane.f32.xlu0 %v3139
        %v3171 = vpop.xlane.xlu0 %3170
        %3172 = vadd.xlane.f32.xlu0 %v3141
        %v3173 = vpop.xlane.xlu0 %3172
        %3174 = vadd.xlane.f32.xlu0 %v3143
        %v3175 = vpop.xlane.xlu0 %3174
        %3176 = vadd.xlane.f32.xlu0 %v3145
        %v3177 = vpop.xlane.xlu0 %3176
        %3178 = vadd.xlane.f32.xlu0 %v3147
        %v3179 = vpop.xlane.xlu0 %3178
        %3180 = vadd.xlane.f32.xlu0 %v3149
        %v3181 = vpop.xlane.xlu0 %3180
        %3182 = vadd.xlane.f32.xlu0 %v3151
        %v3183 = vpop.xlane.xlu0 %3182
        %3184 = vadd.xlane.f32.xlu0 %v3153
        %v3185 = vpop.xlane.xlu0 %3184
        %3186 = vadd.xlane.f32.xlu0 %v3155
        %v3187 = vpop.xlane.xlu0 %3186
        %3188 = vadd.xlane.f32.xlu0 %v3157
        %v3189 = vpop.xlane.xlu0 %3188
        %3190 = vadd.xlane.f32.xlu0 %v3159
        %v3191 = vpop.xlane.xlu0 %3190
        %3192 = vadd.xlane.f32.xlu0 %v3161
        %v3193 = vpop.xlane.xlu0 %3192
        %3194 = vadd.xlane.f32.xlu0 %v3163
        %v3195 = vpop.xlane.xlu0 %3194
        %3196 = vadd.xlane.f32.xlu0 %v3165
        %v3197 = vpop.xlane.xlu0 %3196
        %3198 = vadd.xlane.f32.xlu0 %v3167
        %v3199 = vpop.xlane.xlu0 %3198
        %v3200 = vrcp.pop %v3169
        %v3201 = vrcp.pop %v3171
        %v3202 = vrcp.pop %v3173
        %v3203 = vrcp.pop %v3175
        %v3204 = vrcp.pop %v3177
        %v3205 = vrcp.pop %v3179
        %v3206 = vrcp.pop %v3181
        %v3207 = vrcp.pop %v3183
        %v3208 = vrcp.pop %v3185
        %v3209 = vrcp.pop %v3187
        %v3210 = vrcp.pop %v3189
        %v3211 = vrcp.pop %v3191
        %v3212 = vrcp.pop %v3193
        %v3213 = vrcp.pop %v3195
        %v3214 = vrcp.pop %v3197
        %v3215 = vrcp.pop %v3199
        %v3216 = vmul.f32 %v3137, %v3200
        %v3217 = vmul.f32 %v3139, %v3201
        %v3218 = vmul.f32 %v3141, %v3202
        %v3219 = vmul.f32 %v3143, %v3203
        %v3220 = vmul.f32 %v3145, %v3204
        %v3221 = vmul.f32 %v3147, %v3205
        %v3222 = vmul.f32 %v3149, %v3206
        %v3223 = vmul.f32 %v3151, %v3207
        %v3224 = vmul.f32 %v3153, %v3208
        %v3225 = vmul.f32 %v3155, %v3209
        %v3226 = vmul.f32 %v3157, %v3210
        %v3227 = vmul.f32 %v3159, %v3211
        %v3228 = vmul.f32 %v3161, %v3212
        %v3229 = vmul.f32 %v3163, %v3213
        %v3230 = vmul.f32 %v3165, %v3214
        %v3231 = vmul.f32 %v3167, %v3215
        %s3232 = scalar_lea.vmem %s509, 256 [#allocation16]
        %3233 = vst [vmem:[%s3232] sm:$0xff] %v3216
        %3234 = vst [vmem:[%s3232 + $0x8] sm:$0xff] %v3217
        %3235 = vst [vmem:[%s3232 + $0x10] sm:$0xff] %v3218
        %3236 = vst [vmem:[%s3232 + $0x18] sm:$0xff] %v3219
        %3237 = vst [vmem:[%s3232 + $0x20] sm:$0xff] %v3220
        %3238 = vst [vmem:[%s3232 + $0x28] sm:$0xff] %v3221
        %3239 = vst [vmem:[%s3232 + $0x30] sm:$0xff] %v3222
        %3240 = vst [vmem:[%s3232 + $0x38] sm:$0xff] %v3223
        %3241 = vst [vmem:[%s3232 + $0x40] sm:$0xff] %v3224
        %3242 = vst [vmem:[%s3232 + $0x48] sm:$0xff] %v3225
        %3243 = vst [vmem:[%s3232 + $0x50] sm:$0xff] %v3226
        %3244 = vst [vmem:[%s3232 + $0x58] sm:$0xff] %v3227
        %3245 = vst [vmem:[%s3232 + $0x60] sm:$0xff] %v3228
        %3246 = vst [vmem:[%s3232 + $0x68] sm:$0xff] %v3229
        %3247 = vst [vmem:[%s3232 + $0x70] sm:$0xff] %v3230
        %3248 = vst [vmem:[%s3232 + $0x78] sm:$0xff] %v3231
        %3265 = vrot.lane.b32.xlu0 %v2783, 64
        %v3266 = vpop.permute.xlu0 %3265
        %3267 = vrot.lane.b32.xlu0 %v2784, 64
        %v3268 = vpop.permute.xlu0 %3267
        %3269 = vrot.lane.b32.xlu0 %v2785, 64
        %v3270 = vpop.permute.xlu0 %3269
        %3271 = vrot.lane.b32.xlu0 %v2786, 64
        %v3272 = vpop.permute.xlu0 %3271
        %3273 = vrot.lane.b32.xlu0 %v2787, 64
        %v3274 = vpop.permute.xlu0 %3273
        %3275 = vrot.lane.b32.xlu0 %v2788, 64
        %v3276 = vpop.permute.xlu0 %3275
        %3277 = vrot.lane.b32.xlu0 %v2789, 64
        %v3278 = vpop.permute.xlu0 %3277
        %3279 = vrot.lane.b32.xlu0 %v2790, 64
        %v3280 = vpop.permute.xlu0 %3279
        %3281 = vrot.lane.b32.xlu0 %v2791, 64
        %v3282 = vpop.permute.xlu0 %3281
        %3283 = vrot.lane.b32.xlu0 %v2792, 64
        %v3284 = vpop.permute.xlu0 %3283
        %3285 = vrot.lane.b32.xlu0 %v2793, 64
        %v3286 = vpop.permute.xlu0 %3285
        %3287 = vrot.lane.b32.xlu0 %v2794, 64
        %v3288 = vpop.permute.xlu0 %3287
        %3289 = vrot.lane.b32.xlu0 %v2795, 64
        %v3290 = vpop.permute.xlu0 %3289
        %3291 = vrot.lane.b32.xlu0 %v2796, 64
        %v3292 = vpop.permute.xlu0 %3291
        %3293 = vrot.lane.b32.xlu0 %v2797, 64
        %v3294 = vpop.permute.xlu0 %3293
        %3295 = vrot.lane.b32.xlu0 %v2798, 64
        %v3296 = vpop.permute.xlu0 %3295
        %3313 = vmatprep.subr.mxu0 0.0
        %3314 = vmatpush1.msra.mxu0 %v3266
        %3315 = vmatprep.subr.mxu0 0.0
        %3316 = vmatpush1.msra.mxu0 %v3268
        %3317 = vmatprep.subr.mxu0 0.0
        %3318 = vmatpush1.msra.mxu0 %v3270
        %3319 = vmatprep.subr.mxu0 0.0
        %3320 = vmatpush1.msra.mxu0 %v3272
        %3321 = vmatprep.subr.mxu0 0.0
        %3322 = vmatpush1.msra.mxu0 %v3274
        %3323 = vmatprep.subr.mxu0 0.0
        %3324 = vmatpush1.msra.mxu0 %v3276
        %3325 = vmatprep.subr.mxu0 0.0
        %3326 = vmatpush1.msra.mxu0 %v3278
        %3327 = vmatprep.subr.mxu0 0.0
        %3328 = vmatpush1.msra.mxu0 %v3280
        %3329 = vmatprep.subr.mxu0 0.0
        %3330 = vmatpush1.msra.mxu0 %v3282
        %3331 = vmatprep.subr.mxu0 0.0
        %3332 = vmatpush1.msra.mxu0 %v3284
        %3333 = vmatprep.subr.mxu0 0.0
        %3334 = vmatpush1.msra.mxu0 %v3286
        %3335 = vmatprep.subr.mxu0 0.0
        %3336 = vmatpush1.msra.mxu0 %v3288
        %3337 = vmatprep.subr.mxu0 0.0
        %3338 = vmatpush1.msra.mxu0 %v3290
        %3339 = vmatprep.subr.mxu0 0.0
        %3340 = vmatpush1.msra.mxu0 %v3292
        %3341 = vmatprep.subr.mxu0 0.0
        %3342 = vmatpush1.msra.mxu0 %v3294
        %3343 = vmatprep.subr.mxu0 0.0
        %3344 = vmatpush1.msra.mxu0 %v3296
        %3345 = vmatprep.subr.mxu0 0.0
        %3346 = vmatpush1.msra.mxu0 0.0
        %3347 = vmatprep.subr.mxu0 0.0
        %3348 = vmatpush1.msra.mxu0 0.0
        %3349 = vmatprep.subr.mxu0 0.0
        %3350 = vmatpush1.msra.mxu0 0.0
        %3351 = vmatprep.subr.mxu0 0.0
        %3352 = vmatpush1.msra.mxu0 0.0
        %3353 = vmatprep.subr.mxu0 0.0
        %3354 = vmatpush1.msra.mxu0 0.0
        %3355 = vmatprep.subr.mxu0 0.0
        %3356 = vmatpush1.msra.mxu0 0.0
        %3357 = vmatprep.subr.mxu0 0.0
        %3358 = vmatpush1.msra.mxu0 0.0
        %3359 = vmatprep.subr.mxu0 0.0
        %3360 = vmatpush1.msra.mxu0 0.0
        %3361 = vmatprep.subr.mxu0 0.0
        %3362 = vmatpush1.msra.mxu0 0.0
        %3363 = vmatprep.subr.mxu0 0.0
        %3364 = vmatpush1.msra.mxu0 0.0
        %3365 = vmatprep.subr.mxu0 0.0
        %3366 = vmatpush1.msra.mxu0 0.0
        %3367 = vmatprep.subr.mxu0 0.0
        %3368 = vmatpush1.msra.mxu0 0.0
        %3369 = vmatprep.subr.mxu0 0.0
        %3370 = vmatpush1.msra.mxu0 0.0
        %3371 = vmatprep.subr.mxu0 0.0
        %3372 = vmatpush1.msra.mxu0 0.0
        %3373 = vmatprep.subr.mxu0 0.0
        %3374 = vmatpush1.msra.mxu0 0.0
        %3375 = vmatprep.subr.mxu0 0.0
        %3376 = vmatpush1.msra.mxu0 0.0
        %3377 = vmatprep.mubr.f32.mxu0 0.0
        %3378 = vmatmul.mubr.f32.gmra.mrb[0].mxu0 %v3216
        %v3379 = vpop.f32.mrb[0].mxu0
        %v3380 = vadd.f32 0.0, %v3379
        %v3381 = vpop.f32.mrb[0].mxu0
        %3382 = vmatprep.mubr.f32.mxu0 0.0
        %3383 = vmatmul.mubr.f32.gmra.mrb[0].mxu0 %v3217
        %v3384 = vpop.f32.mrb[0].mxu0
        %v3385 = vadd.f32 0.0, %v3384
        %v3386 = vpop.f32.mrb[0].mxu0
        %3387 = vmatprep.mubr.f32.mxu0 0.0
        %3388 = vmatmul.mubr.f32.gmra.mrb[0].mxu0 %v3218
        %v3389 = vpop.f32.mrb[0].mxu0
        %v3390 = vadd.f32 0.0, %v3389
        %v3391 = vpop.f32.mrb[0].mxu0
        %3392 = vmatprep.mubr.f32.mxu0 0.0
        %3393 = vmatmul.mubr.f32.gmra.mrb[0].mxu0 %v3219
        %v3394 = vpop.f32.mrb[0].mxu0
        %v3395 = vadd.f32 0.0, %v3394
        %v3396 = vpop.f32.mrb[0].mxu0
        %3397 = vmatprep.mubr.f32.mxu0 0.0
        %3398 = vmatmul.mubr.f32.gmra.mrb[0].mxu0 %v3220
        %v3399 = vpop.f32.mrb[0].mxu0
        %v3400 = vadd.f32 0.0, %v3399
        %v3401 = vpop.f32.mrb[0].mxu0
        %3402 = vmatprep.mubr.f32.mxu0 0.0
        %3403 = vmatmul.mubr.f32.gmra.mrb[0].mxu0 %v3221
        %v3404 = vpop.f32.mrb[0].mxu0
        %v3405 = vadd.f32 0.0, %v3404
        %v3406 = vpop.f32.mrb[0].mxu0
        %3407 = vmatprep.mubr.f32.mxu0 0.0
        %3408 = vmatmul.mubr.f32.gmra.mrb[0].mxu0 %v3222
        %v3409 = vpop.f32.mrb[0].mxu0
        %v3410 = vadd.f32 0.0, %v3409
        %v3411 = vpop.f32.mrb[0].mxu0
        %3412 = vmatprep.mubr.f32.mxu0 0.0
        %3413 = vmatmul.mubr.f32.gmra.mrb[0].mxu0 %v3223
        %v3414 = vpop.f32.mrb[0].mxu0
        %v3415 = vadd.f32 0.0, %v3414
        %v3416 = vpop.f32.mrb[0].mxu0
        %3417 = vmatprep.mubr.f32.mxu0 0.0
        %3418 = vmatmul.mubr.f32.gmra.mrb[0].mxu0 %v3224
        %v3419 = vpop.f32.mrb[0].mxu0
        %v3420 = vadd.f32 0.0, %v3419
        %v3421 = vpop.f32.mrb[0].mxu0
        %3422 = vmatprep.mubr.f32.mxu0 0.0
        %3423 = vmatmul.mubr.f32.gmra.mrb[0].mxu0 %v3225
        %v3424 = vpop.f32.mrb[0].mxu0
        %v3425 = vadd.f32 0.0, %v3424
        %v3426 = vpop.f32.mrb[0].mxu0
        %3427 = vmatprep.mubr.f32.mxu0 0.0
        %3428 = vmatmul.mubr.f32.gmra.mrb[0].mxu0 %v3226
        %v3429 = vpop.f32.mrb[0].mxu0
        %v3430 = vadd.f32 0.0, %v3429
        %v3431 = vpop.f32.mrb[0].mxu0
        %3432 = vmatprep.mubr.f32.mxu0 0.0
        %3433 = vmatmul.mubr.f32.gmra.mrb[0].mxu0 %v3227
        %v3434 = vpop.f32.mrb[0].mxu0
        %v3435 = vadd.f32 0.0, %v3434
        %v3436 = vpop.f32.mrb[0].mxu0
        %3437 = vmatprep.mubr.f32.mxu0 0.0
        %3438 = vmatmul.mubr.f32.gmra.mrb[0].mxu0 %v3228
        %v3439 = vpop.f32.mrb[0].mxu0
        %v3440 = vadd.f32 0.0, %v3439
        %v3441 = vpop.f32.mrb[0].mxu0
        %3442 = vmatprep.mubr.f32.mxu0 0.0
        %3443 = vmatmul.mubr.f32.gmra.mrb[0].mxu0 %v3229
        %v3444 = vpop.f32.mrb[0].mxu0
        %v3445 = vadd.f32 0.0, %v3444
        %v3446 = vpop.f32.mrb[0].mxu0
        %3447 = vmatprep.mubr.f32.mxu0 0.0
        %3448 = vmatmul.mubr.f32.gmra.mrb[0].mxu0 %v3230
        %v3449 = vpop.f32.mrb[0].mxu0
        %v3450 = vadd.f32 0.0, %v3449
        %v3451 = vpop.f32.mrb[0].mxu0
        %3452 = vmatprep.mubr.f32.mxu0 0.0
        %3453 = vmatmul.mubr.f32.gmra.mrb[0].mxu0 %v3231
        %v3454 = vpop.f32.mrb[0].mxu0
        %v3455 = vadd.f32 0.0, %v3454
        %v3456 = vpop.f32.mrb[0].mxu0
        %3457 = vdwg.mxu0
        %v3458 = vld [vmem:[#allocation15 + $0x40] sm:$0xff]
        %v3459 = vld [vmem:[#allocation15 + $0x48] sm:$0xff]
        %v3460 = vld [vmem:[#allocation15 + $0x50] sm:$0xff]
        %v3461 = vld [vmem:[#allocation15 + $0x58] sm:$0xff]
        %v3463 = vsel %vm1135, %v3380, 0
        %v3466 = vsel %vm1135, %v3385, 0
        %v3469 = vsel %vm1135, %v3390, 0
        %v3472 = vsel %vm1135, %v3395, 0
        %v3475 = vsel %vm1135, %v3400, 0
        %v3478 = vsel %vm1135, %v3405, 0
        %v3481 = vsel %vm1135, %v3410, 0
        %v3484 = vsel %vm1135, %v3415, 0
        %v3487 = vsel %vm1135, %v3420, 0
        %v3490 = vsel %vm1135, %v3425, 0
        %v3493 = vsel %vm1135, %v3430, 0
        %v3496 = vsel %vm1135, %v3435, 0
        %v3499 = vsel %vm1135, %v3440, 0
        %v3502 = vsel %vm1135, %v3445, 0
        %v3505 = vsel %vm1135, %v3450, 0
        %v3508 = vsel %vm1135, %v3455, 0
        %3510 = vmatprep.subr.mxu0 0.0
        %3511 = vmatpush1.msra.mxu0 %v3458
        %3512 = vmatprep.subr.mxu0 0.0
        %3513 = vmatpush1.msra.mxu0 %v3459
        %3514 = vmatprep.subr.mxu0 0.0
        %3515 = vmatpush1.msra.mxu0 %v3460
        %3516 = vmatprep.subr.mxu0 0.0
        %3517 = vmatpush1.msra.mxu0 %v3461
        %3518 = vmatprep.subr.mxu0 0.0
        %3519 = vmatpush1.msra.mxu0 0.0
        %3520 = vmatprep.subr.mxu0 0.0
        %3521 = vmatpush1.msra.mxu0 0.0
        %3522 = vmatprep.subr.mxu0 0.0
        %3523 = vmatpush1.msra.mxu0 0.0
        %3524 = vmatprep.subr.mxu0 0.0
        %3525 = vmatpush1.msra.mxu0 0.0
        %3526 = vmatprep.subr.mxu0 0.0
        %3527 = vmatpush1.msra.mxu0 0.0
        %3528 = vmatprep.subr.mxu0 0.0
        %3529 = vmatpush1.msra.mxu0 0.0
        %3530 = vmatprep.subr.mxu0 0.0
        %3531 = vmatpush1.msra.mxu0 0.0
        %3532 = vmatprep.subr.mxu0 0.0
        %3533 = vmatpush1.msra.mxu0 0.0
        %3534 = vmatprep.subr.mxu0 0.0
        %3535 = vmatpush1.msra.mxu0 0.0
        %3536 = vmatprep.subr.mxu0 0.0
        %3537 = vmatpush1.msra.mxu0 0.0
        %3538 = vmatprep.subr.mxu0 0.0
        %3539 = vmatpush1.msra.mxu0 0.0
        %3540 = vmatprep.subr.mxu0 0.0
        %3541 = vmatpush1.msra.mxu0 0.0
        %3542 = vmatprep.subr.mxu0 0.0
        %3543 = vmatpush1.msra.mxu0 0.0
        %3544 = vmatprep.subr.mxu0 0.0
        %3545 = vmatpush1.msra.mxu0 0.0
        %3546 = vmatprep.subr.mxu0 0.0
        %3547 = vmatpush1.msra.mxu0 0.0
        %3548 = vmatprep.subr.mxu0 0.0
        %3549 = vmatpush1.msra.mxu0 0.0
        %3550 = vmatprep.subr.mxu0 0.0
        %3551 = vmatpush1.msra.mxu0 0.0
        %3552 = vmatprep.subr.mxu0 0.0
        %3553 = vmatpush1.msra.mxu0 0.0
        %3554 = vmatprep.subr.mxu0 0.0
        %3555 = vmatpush1.msra.mxu0 0.0
        %3556 = vmatprep.subr.mxu0 0.0
        %3557 = vmatpush1.msra.mxu0 0.0
        %3558 = vmatprep.subr.mxu0 0.0
        %3559 = vmatpush1.msra.mxu0 0.0
        %3560 = vmatprep.subr.mxu0 0.0
        %3561 = vmatpush1.msra.mxu0 0.0
        %3562 = vmatprep.subr.mxu0 0.0
        %3563 = vmatpush1.msra.mxu0 0.0
        %3564 = vmatprep.subr.mxu0 0.0
        %3565 = vmatpush1.msra.mxu0 0.0
        %3566 = vmatprep.subr.mxu0 0.0
        %3567 = vmatpush1.msra.mxu0 0.0
        %3568 = vmatprep.subr.mxu0 0.0
        %3569 = vmatpush1.msra.mxu0 0.0
        %3570 = vmatprep.subr.mxu0 0.0
        %3571 = vmatpush1.msra.mxu0 0.0
        %3572 = vmatprep.subr.mxu0 0.0
        %3573 = vmatpush1.msra.mxu0 0.0
        %3574 = vmatprep.mubr.f32.mxu0 0.0
        %3575 = vmatmul.mubr.f32.gmra.mrb[0].mxu0 %v3463
        %v3576 = vpop.f32.mrb[0].mxu0
        %v3577 = vadd.f32 0.0, %v3576
        %v3578 = vpop.f32.mrb[0].mxu0
        %3579 = vmatprep.mubr.f32.mxu0 0.0
        %3580 = vmatmul.mubr.f32.gmra.mrb[0].mxu0 %v3466
        %v3581 = vpop.f32.mrb[0].mxu0
        %v3582 = vadd.f32 0.0, %v3581
        %v3583 = vpop.f32.mrb[0].mxu0
        %3584 = vmatprep.mubr.f32.mxu0 0.0
        %3585 = vmatmul.mubr.f32.gmra.mrb[0].mxu0 %v3469
        %v3586 = vpop.f32.mrb[0].mxu0
        %v3587 = vadd.f32 0.0, %v3586
        %v3588 = vpop.f32.mrb[0].mxu0
        %3589 = vmatprep.mubr.f32.mxu0 0.0
        %3590 = vmatmul.mubr.f32.gmra.mrb[0].mxu0 %v3472
        %v3591 = vpop.f32.mrb[0].mxu0
        %v3592 = vadd.f32 0.0, %v3591
        %v3593 = vpop.f32.mrb[0].mxu0
        %3594 = vmatprep.mubr.f32.mxu0 0.0
        %3595 = vmatmul.mubr.f32.gmra.mrb[0].mxu0 %v3475
        %v3596 = vpop.f32.mrb[0].mxu0
        %v3597 = vadd.f32 0.0, %v3596
        %v3598 = vpop.f32.mrb[0].mxu0
        %3599 = vmatprep.mubr.f32.mxu0 0.0
        %3600 = vmatmul.mubr.f32.gmra.mrb[0].mxu0 %v3478
        %v3601 = vpop.f32.mrb[0].mxu0
        %v3602 = vadd.f32 0.0, %v3601
        %v3603 = vpop.f32.mrb[0].mxu0
        %3604 = vmatprep.mubr.f32.mxu0 0.0
        %3605 = vmatmul.mubr.f32.gmra.mrb[0].mxu0 %v3481
        %v3606 = vpop.f32.mrb[0].mxu0
        %v3607 = vadd.f32 0.0, %v3606
        %v3608 = vpop.f32.mrb[0].mxu0
        %3609 = vmatprep.mubr.f32.mxu0 0.0
        %3610 = vmatmul.mubr.f32.gmra.mrb[0].mxu0 %v3484
        %v3611 = vpop.f32.mrb[0].mxu0
        %v3612 = vadd.f32 0.0, %v3611
        %v3613 = vpop.f32.mrb[0].mxu0
        %3614 = vmatprep.mubr.f32.mxu0 0.0
        %3615 = vmatmul.mubr.f32.gmra.mrb[0].mxu0 %v3487
        %v3616 = vpop.f32.mrb[0].mxu0
        %v3617 = vadd.f32 0.0, %v3616
        %v3618 = vpop.f32.mrb[0].mxu0
        %3619 = vmatprep.mubr.f32.mxu0 0.0
        %3620 = vmatmul.mubr.f32.gmra.mrb[0].mxu0 %v3490
        %v3621 = vpop.f32.mrb[0].mxu0
        %v3622 = vadd.f32 0.0, %v3621
        %v3623 = vpop.f32.mrb[0].mxu0
        %3624 = vmatprep.mubr.f32.mxu0 0.0
        %3625 = vmatmul.mubr.f32.gmra.mrb[0].mxu0 %v3493
        %v3626 = vpop.f32.mrb[0].mxu0
        %v3627 = vadd.f32 0.0, %v3626
        %v3628 = vpop.f32.mrb[0].mxu0
        %3629 = vmatprep.mubr.f32.mxu0 0.0
        %3630 = vmatmul.mubr.f32.gmra.mrb[0].mxu0 %v3496
        %v3631 = vpop.f32.mrb[0].mxu0
        %v3632 = vadd.f32 0.0, %v3631
        %v3633 = vpop.f32.mrb[0].mxu0
        %3634 = vmatprep.mubr.f32.mxu0 0.0
        %3635 = vmatmul.mubr.f32.gmra.mrb[0].mxu0 %v3499
        %v3636 = vpop.f32.mrb[0].mxu0
        %v3637 = vadd.f32 0.0, %v3636
        %v3638 = vpop.f32.mrb[0].mxu0
        %3639 = vmatprep.mubr.f32.mxu0 0.0
        %3640 = vmatmul.mubr.f32.gmra.mrb[0].mxu0 %v3502
        %v3641 = vpop.f32.mrb[0].mxu0
        %v3642 = vadd.f32 0.0, %v3641
        %v3643 = vpop.f32.mrb[0].mxu0
        %3644 = vmatprep.mubr.f32.mxu0 0.0
        %3645 = vmatmul.mubr.f32.gmra.mrb[0].mxu0 %v3505
        %v3646 = vpop.f32.mrb[0].mxu0
        %v3647 = vadd.f32 0.0, %v3646
        %v3648 = vpop.f32.mrb[0].mxu0
        %3649 = vmatprep.mubr.f32.mxu0 0.0
        %3650 = vmatmul.mubr.f32.gmra.mrb[0].mxu0 %v3508
        %v3651 = vpop.f32.mrb[0].mxu0
        %v3652 = vadd.f32 0.0, %v3651
        %v3653 = vpop.f32.mrb[0].mxu0
        %3654 = vdwg.mxu0
        %v3655 = vadd.f32 %v2689, %v3577
        %v3656 = vadd.f32 %v2694, %v3582
        %v3657 = vadd.f32 %v2699, %v3587
        %v3658 = vadd.f32 %v2704, %v3592
        %v3659 = vadd.f32 %v2709, %v3597
        %v3660 = vadd.f32 %v2714, %v3602
        %v3661 = vadd.f32 %v2719, %v3607
        %v3662 = vadd.f32 %v2724, %v3612
        %v3663 = vadd.f32 %v2729, %v3617
        %v3664 = vadd.f32 %v2734, %v3622
        %v3665 = vadd.f32 %v2739, %v3627
        %v3666 = vadd.f32 %v2744, %v3632
        %v3667 = vadd.f32 %v2749, %v3637
        %v3668 = vadd.f32 %v2754, %v3642
        %v3669 = vadd.f32 %v2759, %v3647
        %v3670 = vadd.f32 %v2764, %v3652
        %v3671 = vld [vmem:[#allocation2] sm:$0xff]
        %v3672 = vld [vmem:[#allocation2 + $0x8] sm:$0xff]
        %v3673 = vld [vmem:[#allocation2 + $0x10] sm:$0xff]
        %v3674 = vld [vmem:[#allocation2 + $0x18] sm:$0xff]
        %v3675 = vld [vmem:[#allocation2 + $0x20] sm:$0xff]
        %v3676 = vld [vmem:[#allocation2 + $0x28] sm:$0xff]
        %v3677 = vld [vmem:[#allocation2 + $0x30] sm:$0xff]
        %v3678 = vld [vmem:[#allocation2 + $0x38] sm:$0xff]
        %v3679 = vld [vmem:[#allocation2 + $0x40] sm:$0xff]
        %v3680 = vld [vmem:[#allocation2 + $0x48] sm:$0xff]
        %v3681 = vld [vmem:[#allocation2 + $0x50] sm:$0xff]
        %v3682 = vld [vmem:[#allocation2 + $0x58] sm:$0xff]
        %v3683 = vld [vmem:[#allocation2 + $0x60] sm:$0xff]
        %v3684 = vld [vmem:[#allocation2 + $0x68] sm:$0xff]
        %v3685 = vld [vmem:[#allocation2 + $0x70] sm:$0xff]
        %v3686 = vld [vmem:[#allocation2 + $0x78] sm:$0xff]
        %v3687 = vld [vmem:[#allocation3] sm:$0xff]
        %v3688 = vld [vmem:[#allocation3 + $0x8] sm:$0xff]
        %v3689 = vld [vmem:[#allocation3 + $0x10] sm:$0xff]
        %v3690 = vld [vmem:[#allocation3 + $0x18] sm:$0xff]
        %v3691 = vld [vmem:[#allocation3 + $0x20] sm:$0xff]
        %v3692 = vld [vmem:[#allocation3 + $0x28] sm:$0xff]
        %v3693 = vld [vmem:[#allocation3 + $0x30] sm:$0xff]
        %v3694 = vld [vmem:[#allocation3 + $0x38] sm:$0xff]
        %v3695 = vld [vmem:[#allocation3 + $0x40] sm:$0xff]
        %v3696 = vld [vmem:[#allocation3 + $0x48] sm:$0xff]
        %v3697 = vld [vmem:[#allocation3 + $0x50] sm:$0xff]
        %v3698 = vld [vmem:[#allocation3 + $0x58] sm:$0xff]
        %v3699 = vld [vmem:[#allocation3 + $0x60] sm:$0xff]
        %v3700 = vld [vmem:[#allocation3 + $0x68] sm:$0xff]
        %v3701 = vld [vmem:[#allocation3 + $0x70] sm:$0xff]
        %v3702 = vld [vmem:[#allocation3 + $0x78] sm:$0xff]
        %3703 = vrot.lane.b32.xlu0 %v1087, 32
        %v3704 = vpop.permute.xlu0 %3703
        %3705 = vrot.lane.b32.xlu0 %v1088, 32
        %v3706 = vpop.permute.xlu0 %3705
        %3707 = vrot.lane.b32.xlu0 %v1089, 32
        %v3708 = vpop.permute.xlu0 %3707
        %3709 = vrot.lane.b32.xlu0 %v1090, 32
        %v3710 = vpop.permute.xlu0 %3709
        %3711 = vrot.lane.b32.xlu0 %v1091, 32
        %v3712 = vpop.permute.xlu0 %3711
        %3713 = vrot.lane.b32.xlu0 %v1092, 32
        %v3714 = vpop.permute.xlu0 %3713
        %3715 = vrot.lane.b32.xlu0 %v1093, 32
        %v3716 = vpop.permute.xlu0 %3715
        %3717 = vrot.lane.b32.xlu0 %v1094, 32
        %v3718 = vpop.permute.xlu0 %3717
        %3719 = vrot.lane.b32.xlu0 %v1095, 32
        %v3720 = vpop.permute.xlu0 %3719
        %3721 = vrot.lane.b32.xlu0 %v1096, 32
        %v3722 = vpop.permute.xlu0 %3721
        %3723 = vrot.lane.b32.xlu0 %v1097, 32
        %v3724 = vpop.permute.xlu0 %3723
        %3725 = vrot.lane.b32.xlu0 %v1098, 32
        %v3726 = vpop.permute.xlu0 %3725
        %3727 = vrot.lane.b32.xlu0 %v1099, 32
        %v3728 = vpop.permute.xlu0 %3727
        %3729 = vrot.lane.b32.xlu0 %v1100, 32
        %v3730 = vpop.permute.xlu0 %3729
        %3731 = vrot.lane.b32.xlu0 %v1101, 32
        %v3732 = vpop.permute.xlu0 %3731
        %3733 = vrot.lane.b32.xlu0 %v1102, 32
        %v3734 = vpop.permute.xlu0 %3733
        %3751 = vrot.lane.b32.xlu0 %v3671, 32
        %v3752 = vpop.permute.xlu0 %3751
        %3753 = vrot.lane.b32.xlu0 %v3672, 32
        %v3754 = vpop.permute.xlu0 %3753
        %3755 = vrot.lane.b32.xlu0 %v3673, 32
        %v3756 = vpop.permute.xlu0 %3755
        %3757 = vrot.lane.b32.xlu0 %v3674, 32
        %v3758 = vpop.permute.xlu0 %3757
        %3759 = vrot.lane.b32.xlu0 %v3675, 32
        %v3760 = vpop.permute.xlu0 %3759
        %3761 = vrot.lane.b32.xlu0 %v3676, 32
        %v3762 = vpop.permute.xlu0 %3761
        %3763 = vrot.lane.b32.xlu0 %v3677, 32
        %v3764 = vpop.permute.xlu0 %3763
        %3765 = vrot.lane.b32.xlu0 %v3678, 32
        %v3766 = vpop.permute.xlu0 %3765
        %3767 = vrot.lane.b32.xlu0 %v3679, 32
        %v3768 = vpop.permute.xlu0 %3767
        %3769 = vrot.lane.b32.xlu0 %v3680, 32
        %v3770 = vpop.permute.xlu0 %3769
        %3771 = vrot.lane.b32.xlu0 %v3681, 32
        %v3772 = vpop.permute.xlu0 %3771
        %3773 = vrot.lane.b32.xlu0 %v3682, 32
        %v3774 = vpop.permute.xlu0 %3773
        %3775 = vrot.lane.b32.xlu0 %v3683, 32
        %v3776 = vpop.permute.xlu0 %3775
        %3777 = vrot.lane.b32.xlu0 %v3684, 32
        %v3778 = vpop.permute.xlu0 %3777
        %3779 = vrot.lane.b32.xlu0 %v3685, 32
        %v3780 = vpop.permute.xlu0 %3779
        %3781 = vrot.lane.b32.xlu0 %v3686, 32
        %v3782 = vpop.permute.xlu0 %3781
        %v3783 = vsel %vm1135, %v3704, 0
        %v3785 = vsel %vm1135, %v3706, 0
        %v3787 = vsel %vm1135, %v3708, 0
        %v3789 = vsel %vm1135, %v3710, 0
        %v3791 = vsel %vm1135, %v3712, 0
        %v3793 = vsel %vm1135, %v3714, 0
        %v3795 = vsel %vm1135, %v3716, 0
        %v3797 = vsel %vm1135, %v3718, 0
        %v3799 = vsel %vm1135, %v3720, 0
        %v3801 = vsel %vm1135, %v3722, 0
        %v3803 = vsel %vm1135, %v3724, 0
        %v3805 = vsel %vm1135, %v3726, 0
        %v3807 = vsel %vm1135, %v3728, 0
        %v3809 = vsel %vm1135, %v3730, 0
        %v3811 = vsel %vm1135, %v3732, 0
        %v3813 = vsel %vm1135, %v3734, 0
        %v3815 = vsel %vm1135, %v3752, 0
        %v3817 = vsel %vm1135, %v3754, 0
        %v3819 = vsel %vm1135, %v3756, 0
        %v3821 = vsel %vm1135, %v3758, 0
        %v3823 = vsel %vm1135, %v3760, 0
        %v3825 = vsel %vm1135, %v3762, 0
        %v3827 = vsel %vm1135, %v3764, 0
        %v3829 = vsel %vm1135, %v3766, 0
        %v3831 = vsel %vm1135, %v3768, 0
        %v3833 = vsel %vm1135, %v3770, 0
        %v3835 = vsel %vm1135, %v3772, 0
        %v3837 = vsel %vm1135, %v3774, 0
        %v3839 = vsel %vm1135, %v3776, 0
        %v3841 = vsel %vm1135, %v3778, 0
        %v3843 = vsel %vm1135, %v3780, 0
        %v3845 = vsel %vm1135, %v3782, 0
        %3847 = vmatprep.subr.mxu0 0.0
        %3848 = vmatpush1.xpose.msra.mxu0 %v3815
        %3849 = vmatprep.subr.mxu0 0.0
        %3850 = vmatpush1.xpose.msra.mxu0 %v3817
        %3851 = vmatprep.subr.mxu0 0.0
        %3852 = vmatpush1.xpose.msra.mxu0 %v3819
        %3853 = vmatprep.subr.mxu0 0.0
        %3854 = vmatpush1.xpose.msra.mxu0 %v3821
        %3855 = vmatprep.subr.mxu0 0.0
        %3856 = vmatpush1.xpose.msra.mxu0 %v3823
        %3857 = vmatprep.subr.mxu0 0.0
        %3858 = vmatpush1.xpose.msra.mxu0 %v3825
        %3859 = vmatprep.subr.mxu0 0.0
        %3860 = vmatpush1.xpose.msra.mxu0 %v3827
        %3861 = vmatprep.subr.mxu0 0.0
        %3862 = vmatpush1.xpose.msra.mxu0 %v3829
        %3863 = vmatprep.subr.mxu0 0.0
        %3864 = vmatpush1.xpose.msra.mxu0 %v3831
        %3865 = vmatprep.subr.mxu0 0.0
        %3866 = vmatpush1.xpose.msra.mxu0 %v3833
        %3867 = vmatprep.subr.mxu0 0.0
        %3868 = vmatpush1.xpose.msra.mxu0 %v3835
        %3869 = vmatprep.subr.mxu0 0.0
        %3870 = vmatpush1.xpose.msra.mxu0 %v3837
        %3871 = vmatprep.subr.mxu0 0.0
        %3872 = vmatpush1.xpose.msra.mxu0 %v3839
        %3873 = vmatprep.subr.mxu0 0.0
        %3874 = vmatpush1.xpose.msra.mxu0 %v3841
        %3875 = vmatprep.subr.mxu0 0.0
        %3876 = vmatpush1.xpose.msra.mxu0 %v3843
        %3877 = vmatprep.subr.mxu0 0.0
        %3878 = vmatpush1.xpose.msra.mxu0 %v3845
        %3879 = vmatprep.subr.mxu0 0.0
        %3880 = vmatpush1.xpose.msra.mxu0 0.0
        %3881 = vmatprep.subr.mxu0 0.0
        %3882 = vmatpush1.xpose.msra.mxu0 0.0
        %3883 = vmatprep.subr.mxu0 0.0
        %3884 = vmatpush1.xpose.msra.mxu0 0.0
        %3885 = vmatprep.subr.mxu0 0.0
        %3886 = vmatpush1.xpose.msra.mxu0 0.0
        %3887 = vmatprep.subr.mxu0 0.0
        %3888 = vmatpush1.xpose.msra.mxu0 0.0
        %3889 = vmatprep.subr.mxu0 0.0
        %3890 = vmatpush1.xpose.msra.mxu0 0.0
        %3891 = vmatprep.subr.mxu0 0.0
        %3892 = vmatpush1.xpose.msra.mxu0 0.0
        %3893 = vmatprep.subr.mxu0 0.0
        %3894 = vmatpush1.xpose.msra.mxu0 0.0
        %3895 = vmatprep.subr.mxu0 0.0
        %3896 = vmatpush1.xpose.msra.mxu0 0.0
        %3897 = vmatprep.subr.mxu0 0.0
        %3898 = vmatpush1.xpose.msra.mxu0 0.0
        %3899 = vmatprep.subr.mxu0 0.0
        %3900 = vmatpush1.xpose.msra.mxu0 0.0
        %3901 = vmatprep.subr.mxu0 0.0
        %3902 = vmatpush1.xpose.msra.mxu0 0.0
        %3903 = vmatprep.subr.mxu0 0.0
        %3904 = vmatpush1.xpose.msra.mxu0 0.0
        %3905 = vmatprep.subr.mxu0 0.0
        %3906 = vmatpush1.xpose.msra.mxu0 0.0
        %3907 = vmatprep.subr.mxu0 0.0
        %3908 = vmatpush1.xpose.msra.mxu0 0.0
        %3909 = vmatprep.subr.mxu0 0.0
        %3910 = vmatpush1.xpose.msra.mxu0 0.0
        %3911 = vmatprep.mubr.f32.mxu0 0.0
        %3912 = vmatmul.mubr.f32.gmra.mrb[0].mxu0 %v3783
        %v3913 = vpop.f32.mrb[0].mxu0
        %v3914 = vadd.f32 0.0, %v3913
        %v3915 = vpop.f32.mrb[0].mxu0
        %3916 = vmatprep.mubr.f32.mxu0 0.0
        %3917 = vmatmul.mubr.f32.gmra.mrb[0].mxu0 %v3785
        %v3918 = vpop.f32.mrb[0].mxu0
        %v3919 = vadd.f32 0.0, %v3918
        %v3920 = vpop.f32.mrb[0].mxu0
        %3921 = vmatprep.mubr.f32.mxu0 0.0
        %3922 = vmatmul.mubr.f32.gmra.mrb[0].mxu0 %v3787
        %v3923 = vpop.f32.mrb[0].mxu0
        %v3924 = vadd.f32 0.0, %v3923
        %v3925 = vpop.f32.mrb[0].mxu0
        %3926 = vmatprep.mubr.f32.mxu0 0.0
        %3927 = vmatmul.mubr.f32.gmra.mrb[0].mxu0 %v3789
        %v3928 = vpop.f32.mrb[0].mxu0
        %v3929 = vadd.f32 0.0, %v3928
        %v3930 = vpop.f32.mrb[0].mxu0
        %3931 = vmatprep.mubr.f32.mxu0 0.0
        %3932 = vmatmul.mubr.f32.gmra.mrb[0].mxu0 %v3791
        %v3933 = vpop.f32.mrb[0].mxu0
        %v3934 = vadd.f32 0.0, %v3933
        %v3935 = vpop.f32.mrb[0].mxu0
        %3936 = vmatprep.mubr.f32.mxu0 0.0
        %3937 = vmatmul.mubr.f32.gmra.mrb[0].mxu0 %v3793
        %v3938 = vpop.f32.mrb[0].mxu0
        %v3939 = vadd.f32 0.0, %v3938
        %v3940 = vpop.f32.mrb[0].mxu0
        %3941 = vmatprep.mubr.f32.mxu0 0.0
        %3942 = vmatmul.mubr.f32.gmra.mrb[0].mxu0 %v3795
        %v3943 = vpop.f32.mrb[0].mxu0
        %v3944 = vadd.f32 0.0, %v3943
        %v3945 = vpop.f32.mrb[0].mxu0
        %3946 = vmatprep.mubr.f32.mxu0 0.0
        %3947 = vmatmul.mubr.f32.gmra.mrb[0].mxu0 %v3797
        %v3948 = vpop.f32.mrb[0].mxu0
        %v3949 = vadd.f32 0.0, %v3948
        %v3950 = vpop.f32.mrb[0].mxu0
        %3951 = vmatprep.mubr.f32.mxu0 0.0
        %3952 = vmatmul.mubr.f32.gmra.mrb[0].mxu0 %v3799
        %v3953 = vpop.f32.mrb[0].mxu0
        %v3954 = vadd.f32 0.0, %v3953
        %v3955 = vpop.f32.mrb[0].mxu0
        %3956 = vmatprep.mubr.f32.mxu0 0.0
        %3957 = vmatmul.mubr.f32.gmra.mrb[0].mxu0 %v3801
        %v3958 = vpop.f32.mrb[0].mxu0
        %v3959 = vadd.f32 0.0, %v3958
        %v3960 = vpop.f32.mrb[0].mxu0
        %3961 = vmatprep.mubr.f32.mxu0 0.0
        %3962 = vmatmul.mubr.f32.gmra.mrb[0].mxu0 %v3803
        %v3963 = vpop.f32.mrb[0].mxu0
        %v3964 = vadd.f32 0.0, %v3963
        %v3965 = vpop.f32.mrb[0].mxu0
        %3966 = vmatprep.mubr.f32.mxu0 0.0
        %3967 = vmatmul.mubr.f32.gmra.mrb[0].mxu0 %v3805
        %v3968 = vpop.f32.mrb[0].mxu0
        %v3969 = vadd.f32 0.0, %v3968
        %v3970 = vpop.f32.mrb[0].mxu0
        %3971 = vmatprep.mubr.f32.mxu0 0.0
        %3972 = vmatmul.mubr.f32.gmra.mrb[0].mxu0 %v3807
        %v3973 = vpop.f32.mrb[0].mxu0
        %v3974 = vadd.f32 0.0, %v3973
        %v3975 = vpop.f32.mrb[0].mxu0
        %3976 = vmatprep.mubr.f32.mxu0 0.0
        %3977 = vmatmul.mubr.f32.gmra.mrb[0].mxu0 %v3809
        %v3978 = vpop.f32.mrb[0].mxu0
        %v3979 = vadd.f32 0.0, %v3978
        %v3980 = vpop.f32.mrb[0].mxu0
        %3981 = vmatprep.mubr.f32.mxu0 0.0
        %3982 = vmatmul.mubr.f32.gmra.mrb[0].mxu0 %v3811
        %v3983 = vpop.f32.mrb[0].mxu0
        %v3984 = vadd.f32 0.0, %v3983
        %v3985 = vpop.f32.mrb[0].mxu0
        %3986 = vmatprep.mubr.f32.mxu0 0.0
        %3987 = vmatmul.mubr.f32.gmra.mrb[0].mxu0 %v3813
        %v3988 = vpop.f32.mrb[0].mxu0
        %v3989 = vadd.f32 0.0, %v3988
        %v3990 = vpop.f32.mrb[0].mxu0
        %3991 = vdwg.mxu0
        %3992 = vmax.xlane.f32.xlu0 %v3914
        %v3993 = vpop.xlane.xlu0 %3992
        %3994 = vmax.xlane.f32.xlu0 %v3919
        %v3995 = vpop.xlane.xlu0 %3994
        %3996 = vmax.xlane.f32.xlu0 %v3924
        %v3997 = vpop.xlane.xlu0 %3996
        %3998 = vmax.xlane.f32.xlu0 %v3929
        %v3999 = vpop.xlane.xlu0 %3998
        %4000 = vmax.xlane.f32.xlu0 %v3934
        %v4001 = vpop.xlane.xlu0 %4000
        %4002 = vmax.xlane.f32.xlu0 %v3939
        %v4003 = vpop.xlane.xlu0 %4002
        %4004 = vmax.xlane.f32.xlu0 %v3944
        %v4005 = vpop.xlane.xlu0 %4004
        %4006 = vmax.xlane.f32.xlu0 %v3949
        %v4007 = vpop.xlane.xlu0 %4006
        %4008 = vmax.xlane.f32.xlu0 %v3954
        %v4009 = vpop.xlane.xlu0 %4008
        %4010 = vmax.xlane.f32.xlu0 %v3959
        %v4011 = vpop.xlane.xlu0 %4010
        %4012 = vmax.xlane.f32.xlu0 %v3964
        %v4013 = vpop.xlane.xlu0 %4012
        %4014 = vmax.xlane.f32.xlu0 %v3969
        %v4015 = vpop.xlane.xlu0 %4014
        %4016 = vmax.xlane.f32.xlu0 %v3974
        %v4017 = vpop.xlane.xlu0 %4016
        %4018 = vmax.xlane.f32.xlu0 %v3979
        %v4019 = vpop.xlane.xlu0 %4018
        %4020 = vmax.xlane.f32.xlu0 %v3984
        %v4021 = vpop.xlane.xlu0 %4020
        %4022 = vmax.xlane.f32.xlu0 %v3989
        %v4023 = vpop.xlane.xlu0 %4022
        %v4024 = vsub.f32 %v3914, %v3993
        %v4025 = vsub.f32 %v3919, %v3995
        %v4026 = vsub.f32 %v3924, %v3997
        %v4027 = vsub.f32 %v3929, %v3999
        %v4028 = vsub.f32 %v3934, %v4001
        %v4029 = vsub.f32 %v3939, %v4003
        %v4030 = vsub.f32 %v3944, %v4005
        %v4031 = vsub.f32 %v3949, %v4007
        %v4032 = vsub.f32 %v3954, %v4009
        %v4033 = vsub.f32 %v3959, %v4011
        %v4034 = vsub.f32 %v3964, %v4013
        %v4035 = vsub.f32 %v3969, %v4015
        %v4036 = vsub.f32 %v3974, %v4017
        %v4037 = vsub.f32 %v3979, %v4019
        %v4038 = vsub.f32 %v3984, %v4021
        %v4039 = vsub.f32 %v3989, %v4023
        %v4040 = vmul.f32 %v4024, 1.442695
        %v4041 = vpow.pop %v4040
        %v4042 = vmul.f32 %v4025, 1.442695
        %v4043 = vpow.pop %v4042
        %v4044 = vmul.f32 %v4026, 1.442695
        %v4045 = vpow.pop %v4044
        %v4046 = vmul.f32 %v4027, 1.442695
        %v4047 = vpow.pop %v4046
        %v4048 = vmul.f32 %v4028, 1.442695
        %v4049 = vpow.pop %v4048
        %v4050 = vmul.f32 %v4029, 1.442695
        %v4051 = vpow.pop %v4050
        %v4052 = vmul.f32 %v4030, 1.442695
        %v4053 = vpow.pop %v4052
        %v4054 = vmul.f32 %v4031, 1.442695
        %v4055 = vpow.pop %v4054
        %v4056 = vmul.f32 %v4032, 1.442695
        %v4057 = vpow.pop %v4056
        %v4058 = vmul.f32 %v4033, 1.442695
        %v4059 = vpow.pop %v4058
        %v4060 = vmul.f32 %v4034, 1.442695
        %v4061 = vpow.pop %v4060
        %v4062 = vmul.f32 %v4035, 1.442695
        %v4063 = vpow.pop %v4062
        %v4064 = vmul.f32 %v4036, 1.442695
        %v4065 = vpow.pop %v4064
        %v4066 = vmul.f32 %v4037, 1.442695
        %v4067 = vpow.pop %v4066
        %v4068 = vmul.f32 %v4038, 1.442695
        %v4069 = vpow.pop %v4068
        %v4070 = vmul.f32 %v4039, 1.442695
        %v4071 = vpow.pop %v4070
        %4072 = vadd.xlane.f32.xlu0 %v4041
        %v4073 = vpop.xlane.xlu0 %4072
        %4074 = vadd.xlane.f32.xlu0 %v4043
        %v4075 = vpop.xlane.xlu0 %4074
        %4076 = vadd.xlane.f32.xlu0 %v4045
        %v4077 = vpop.xlane.xlu0 %4076
        %4078 = vadd.xlane.f32.xlu0 %v4047
        %v4079 = vpop.xlane.xlu0 %4078
        %4080 = vadd.xlane.f32.xlu0 %v4049
        %v4081 = vpop.xlane.xlu0 %4080
        %4082 = vadd.xlane.f32.xlu0 %v4051
        %v4083 = vpop.xlane.xlu0 %4082
        %4084 = vadd.xlane.f32.xlu0 %v4053
        %v4085 = vpop.xlane.xlu0 %4084
        %4086 = vadd.xlane.f32.xlu0 %v4055
        %v4087 = vpop.xlane.xlu0 %4086
        %4088 = vadd.xlane.f32.xlu0 %v4057
        %v4089 = vpop.xlane.xlu0 %4088
        %4090 = vadd.xlane.f32.xlu0 %v4059
        %v4091 = vpop.xlane.xlu0 %4090
        %4092 = vadd.xlane.f32.xlu0 %v4061
        %v4093 = vpop.xlane.xlu0 %4092
        %4094 = vadd.xlane.f32.xlu0 %v4063
        %v4095 = vpop.xlane.xlu0 %4094
        %4096 = vadd.xlane.f32.xlu0 %v4065
        %v4097 = vpop.xlane.xlu0 %4096
        %4098 = vadd.xlane.f32.xlu0 %v4067
        %v4099 = vpop.xlane.xlu0 %4098
        %4100 = vadd.xlane.f32.xlu0 %v4069
        %v4101 = vpop.xlane.xlu0 %4100
        %4102 = vadd.xlane.f32.xlu0 %v4071
        %v4103 = vpop.xlane.xlu0 %4102
        %v4104 = vrcp.pop %v4073
        %v4105 = vrcp.pop %v4075
        %v4106 = vrcp.pop %v4077
        %v4107 = vrcp.pop %v4079
        %v4108 = vrcp.pop %v4081
        %v4109 = vrcp.pop %v4083
        %v4110 = vrcp.pop %v4085
        %v4111 = vrcp.pop %v4087
        %v4112 = vrcp.pop %v4089
        %v4113 = vrcp.pop %v4091
        %v4114 = vrcp.pop %v4093
        %v4115 = vrcp.pop %v4095
        %v4116 = vrcp.pop %v4097
        %v4117 = vrcp.pop %v4099
        %v4118 = vrcp.pop %v4101
        %v4119 = vrcp.pop %v4103
        %v4120 = vmul.f32 %v4041, %v4104
        %v4121 = vmul.f32 %v4043, %v4105
        %v4122 = vmul.f32 %v4045, %v4106
        %v4123 = vmul.f32 %v4047, %v4107
        %v4124 = vmul.f32 %v4049, %v4108
        %v4125 = vmul.f32 %v4051, %v4109
        %v4126 = vmul.f32 %v4053, %v4110
        %v4127 = vmul.f32 %v4055, %v4111
        %v4128 = vmul.f32 %v4057, %v4112
        %v4129 = vmul.f32 %v4059, %v4113
        %v4130 = vmul.f32 %v4061, %v4114
        %v4131 = vmul.f32 %v4063, %v4115
        %v4132 = vmul.f32 %v4065, %v4116
        %v4133 = vmul.f32 %v4067, %v4117
        %v4134 = vmul.f32 %v4069, %v4118
        %v4135 = vmul.f32 %v4071, %v4119
        %s4136 = scalar_lea.vmem %s509, 384 [#allocation16]
        %4137 = vst [vmem:[%s4136] sm:$0xff] %v4120
        %4138 = vst [vmem:[%s4136 + $0x8] sm:$0xff] %v4121
        %4139 = vst [vmem:[%s4136 + $0x10] sm:$0xff] %v4122
        %4140 = vst [vmem:[%s4136 + $0x18] sm:$0xff] %v4123
        %4141 = vst [vmem:[%s4136 + $0x20] sm:$0xff] %v4124
        %4142 = vst [vmem:[%s4136 + $0x28] sm:$0xff] %v4125
        %4143 = vst [vmem:[%s4136 + $0x30] sm:$0xff] %v4126
        %4144 = vst [vmem:[%s4136 + $0x38] sm:$0xff] %v4127
        %4145 = vst [vmem:[%s4136 + $0x40] sm:$0xff] %v4128
        %4146 = vst [vmem:[%s4136 + $0x48] sm:$0xff] %v4129
        %4147 = vst [vmem:[%s4136 + $0x50] sm:$0xff] %v4130
        %4148 = vst [vmem:[%s4136 + $0x58] sm:$0xff] %v4131
        %4149 = vst [vmem:[%s4136 + $0x60] sm:$0xff] %v4132
        %4150 = vst [vmem:[%s4136 + $0x68] sm:$0xff] %v4133
        %4151 = vst [vmem:[%s4136 + $0x70] sm:$0xff] %v4134
        %4152 = vst [vmem:[%s4136 + $0x78] sm:$0xff] %v4135
        %4169 = vrot.lane.b32.xlu0 %v3687, 32
        %v4170 = vpop.permute.xlu0 %4169
        %4171 = vrot.lane.b32.xlu0 %v3688, 32
        %v4172 = vpop.permute.xlu0 %4171
        %4173 = vrot.lane.b32.xlu0 %v3689, 32
        %v4174 = vpop.permute.xlu0 %4173
        %4175 = vrot.lane.b32.xlu0 %v3690, 32
        %v4176 = vpop.permute.xlu0 %4175
        %4177 = vrot.lane.b32.xlu0 %v3691, 32
        %v4178 = vpop.permute.xlu0 %4177
        %4179 = vrot.lane.b32.xlu0 %v3692, 32
        %v4180 = vpop.permute.xlu0 %4179
        %4181 = vrot.lane.b32.xlu0 %v3693, 32
        %v4182 = vpop.permute.xlu0 %4181
        %4183 = vrot.lane.b32.xlu0 %v3694, 32
        %v4184 = vpop.permute.xlu0 %4183
        %4185 = vrot.lane.b32.xlu0 %v3695, 32
        %v4186 = vpop.permute.xlu0 %4185
        %4187 = vrot.lane.b32.xlu0 %v3696, 32
        %v4188 = vpop.permute.xlu0 %4187
        %4189 = vrot.lane.b32.xlu0 %v3697, 32
        %v4190 = vpop.permute.xlu0 %4189
        %4191 = vrot.lane.b32.xlu0 %v3698, 32
        %v4192 = vpop.permute.xlu0 %4191
        %4193 = vrot.lane.b32.xlu0 %v3699, 32
        %v4194 = vpop.permute.xlu0 %4193
        %4195 = vrot.lane.b32.xlu0 %v3700, 32
        %v4196 = vpop.permute.xlu0 %4195
        %4197 = vrot.lane.b32.xlu0 %v3701, 32
        %v4198 = vpop.permute.xlu0 %4197
        %4199 = vrot.lane.b32.xlu0 %v3702, 32
        %v4200 = vpop.permute.xlu0 %4199
        %4217 = vmatprep.subr.mxu0 0.0
        %4218 = vmatpush1.msra.mxu0 %v4170
        %4219 = vmatprep.subr.mxu0 0.0
        %4220 = vmatpush1.msra.mxu0 %v4172
        %4221 = vmatprep.subr.mxu0 0.0
        %4222 = vmatpush1.msra.mxu0 %v4174
        %4223 = vmatprep.subr.mxu0 0.0
        %4224 = vmatpush1.msra.mxu0 %v4176
        %4225 = vmatprep.subr.mxu0 0.0
        %4226 = vmatpush1.msra.mxu0 %v4178
        %4227 = vmatprep.subr.mxu0 0.0
        %4228 = vmatpush1.msra.mxu0 %v4180
        %4229 = vmatprep.subr.mxu0 0.0
        %4230 = vmatpush1.msra.mxu0 %v4182
        %4231 = vmatprep.subr.mxu0 0.0
        %4232 = vmatpush1.msra.mxu0 %v4184
        %4233 = vmatprep.subr.mxu0 0.0
        %4234 = vmatpush1.msra.mxu0 %v4186
        %4235 = vmatprep.subr.mxu0 0.0
        %4236 = vmatpush1.msra.mxu0 %v4188
        %4237 = vmatprep.subr.mxu0 0.0
        %4238 = vmatpush1.msra.mxu0 %v4190
        %4239 = vmatprep.subr.mxu0 0.0
        %4240 = vmatpush1.msra.mxu0 %v4192
        %4241 = vmatprep.subr.mxu0 0.0
        %4242 = vmatpush1.msra.mxu0 %v4194
        %4243 = vmatprep.subr.mxu0 0.0
        %4244 = vmatpush1.msra.mxu0 %v4196
        %4245 = vmatprep.subr.mxu0 0.0
        %4246 = vmatpush1.msra.mxu0 %v4198
        %4247 = vmatprep.subr.mxu0 0.0
        %4248 = vmatpush1.msra.mxu0 %v4200
        %4249 = vmatprep.subr.mxu0 0.0
        %4250 = vmatpush1.msra.mxu0 0.0
        %4251 = vmatprep.subr.mxu0 0.0
        %4252 = vmatpush1.msra.mxu0 0.0
        %4253 = vmatprep.subr.mxu0 0.0
        %4254 = vmatpush1.msra.mxu0 0.0
        %4255 = vmatprep.subr.mxu0 0.0
        %4256 = vmatpush1.msra.mxu0 0.0
        %4257 = vmatprep.subr.mxu0 0.0
        %4258 = vmatpush1.msra.mxu0 0.0
        %4259 = vmatprep.subr.mxu0 0.0
        %4260 = vmatpush1.msra.mxu0 0.0
        %4261 = vmatprep.subr.mxu0 0.0
        %4262 = vmatpush1.msra.mxu0 0.0
        %4263 = vmatprep.subr.mxu0 0.0
        %4264 = vmatpush1.msra.mxu0 0.0
        %4265 = vmatprep.subr.mxu0 0.0
        %4266 = vmatpush1.msra.mxu0 0.0
        %4267 = vmatprep.subr.mxu0 0.0
        %4268 = vmatpush1.msra.mxu0 0.0
        %4269 = vmatprep.subr.mxu0 0.0
        %4270 = vmatpush1.msra.mxu0 0.0
        %4271 = vmatprep.subr.mxu0 0.0
        %4272 = vmatpush1.msra.mxu0 0.0
        %4273 = vmatprep.subr.mxu0 0.0
        %4274 = vmatpush1.msra.mxu0 0.0
        %4275 = vmatprep.subr.mxu0 0.0
        %4276 = vmatpush1.msra.mxu0 0.0
        %4277 = vmatprep.subr.mxu0 0.0
        %4278 = vmatpush1.msra.mxu0 0.0
        %4279 = vmatprep.subr.mxu0 0.0
        %4280 = vmatpush1.msra.mxu0 0.0
        %4281 = vmatprep.mubr.f32.mxu0 0.0
        %4282 = vmatmul.mubr.f32.gmra.mrb[0].mxu0 %v4120
        %v4283 = vpop.f32.mrb[0].mxu0
        %v4284 = vadd.f32 0.0, %v4283
        %v4285 = vpop.f32.mrb[0].mxu0
        %4286 = vmatprep.mubr.f32.mxu0 0.0
        %4287 = vmatmul.mubr.f32.gmra.mrb[0].mxu0 %v4121
        %v4288 = vpop.f32.mrb[0].mxu0
        %v4289 = vadd.f32 0.0, %v4288
        %v4290 = vpop.f32.mrb[0].mxu0
        %4291 = vmatprep.mubr.f32.mxu0 0.0
        %4292 = vmatmul.mubr.f32.gmra.mrb[0].mxu0 %v4122
        %v4293 = vpop.f32.mrb[0].mxu0
        %v4294 = vadd.f32 0.0, %v4293
        %v4295 = vpop.f32.mrb[0].mxu0
        %4296 = vmatprep.mubr.f32.mxu0 0.0
        %4297 = vmatmul.mubr.f32.gmra.mrb[0].mxu0 %v4123
        %v4298 = vpop.f32.mrb[0].mxu0
        %v4299 = vadd.f32 0.0, %v4298
        %v4300 = vpop.f32.mrb[0].mxu0
        %4301 = vmatprep.mubr.f32.mxu0 0.0
        %4302 = vmatmul.mubr.f32.gmra.mrb[0].mxu0 %v4124
        %v4303 = vpop.f32.mrb[0].mxu0
        %v4304 = vadd.f32 0.0, %v4303
        %v4305 = vpop.f32.mrb[0].mxu0
        %4306 = vmatprep.mubr.f32.mxu0 0.0
        %4307 = vmatmul.mubr.f32.gmra.mrb[0].mxu0 %v4125
        %v4308 = vpop.f32.mrb[0].mxu0
        %v4309 = vadd.f32 0.0, %v4308
        %v4310 = vpop.f32.mrb[0].mxu0
        %4311 = vmatprep.mubr.f32.mxu0 0.0
        %4312 = vmatmul.mubr.f32.gmra.mrb[0].mxu0 %v4126
        %v4313 = vpop.f32.mrb[0].mxu0
        %v4314 = vadd.f32 0.0, %v4313
        %v4315 = vpop.f32.mrb[0].mxu0
        %4316 = vmatprep.mubr.f32.mxu0 0.0
        %4317 = vmatmul.mubr.f32.gmra.mrb[0].mxu0 %v4127
        %v4318 = vpop.f32.mrb[0].mxu0
        %v4319 = vadd.f32 0.0, %v4318
        %v4320 = vpop.f32.mrb[0].mxu0
        %4321 = vmatprep.mubr.f32.mxu0 0.0
        %4322 = vmatmul.mubr.f32.gmra.mrb[0].mxu0 %v4128
        %v4323 = vpop.f32.mrb[0].mxu0
        %v4324 = vadd.f32 0.0, %v4323
        %v4325 = vpop.f32.mrb[0].mxu0
        %4326 = vmatprep.mubr.f32.mxu0 0.0
        %4327 = vmatmul.mubr.f32.gmra.mrb[0].mxu0 %v4129
        %v4328 = vpop.f32.mrb[0].mxu0
        %v4329 = vadd.f32 0.0, %v4328
        %v4330 = vpop.f32.mrb[0].mxu0
        %4331 = vmatprep.mubr.f32.mxu0 0.0
        %4332 = vmatmul.mubr.f32.gmra.mrb[0].mxu0 %v4130
        %v4333 = vpop.f32.mrb[0].mxu0
        %v4334 = vadd.f32 0.0, %v4333
        %v4335 = vpop.f32.mrb[0].mxu0
        %4336 = vmatprep.mubr.f32.mxu0 0.0
        %4337 = vmatmul.mubr.f32.gmra.mrb[0].mxu0 %v4131
        %v4338 = vpop.f32.mrb[0].mxu0
        %v4339 = vadd.f32 0.0, %v4338
        %v4340 = vpop.f32.mrb[0].mxu0
        %4341 = vmatprep.mubr.f32.mxu0 0.0
        %4342 = vmatmul.mubr.f32.gmra.mrb[0].mxu0 %v4132
        %v4343 = vpop.f32.mrb[0].mxu0
        %v4344 = vadd.f32 0.0, %v4343
        %v4345 = vpop.f32.mrb[0].mxu0
        %4346 = vmatprep.mubr.f32.mxu0 0.0
        %4347 = vmatmul.mubr.f32.gmra.mrb[0].mxu0 %v4133
        %v4348 = vpop.f32.mrb[0].mxu0
        %v4349 = vadd.f32 0.0, %v4348
        %v4350 = vpop.f32.mrb[0].mxu0
        %4351 = vmatprep.mubr.f32.mxu0 0.0
        %4352 = vmatmul.mubr.f32.gmra.mrb[0].mxu0 %v4134
        %v4353 = vpop.f32.mrb[0].mxu0
        %v4354 = vadd.f32 0.0, %v4353
        %v4355 = vpop.f32.mrb[0].mxu0
        %4356 = vmatprep.mubr.f32.mxu0 0.0
        %4357 = vmatmul.mubr.f32.gmra.mrb[0].mxu0 %v4135
        %v4358 = vpop.f32.mrb[0].mxu0
        %v4359 = vadd.f32 0.0, %v4358
        %v4360 = vpop.f32.mrb[0].mxu0
        %4361 = vdwg.mxu0
        %v4362 = vld [vmem:[#allocation15 + $0x60] sm:$0xff]
        %v4363 = vld [vmem:[#allocation15 + $0x68] sm:$0xff]
        %v4364 = vld [vmem:[#allocation15 + $0x70] sm:$0xff]
        %v4365 = vld [vmem:[#allocation15 + $0x78] sm:$0xff]
        %v4367 = vsel %vm1135, %v4284, 0
        %v4370 = vsel %vm1135, %v4289, 0
        %v4373 = vsel %vm1135, %v4294, 0
        %v4376 = vsel %vm1135, %v4299, 0
        %v4379 = vsel %vm1135, %v4304, 0
        %v4382 = vsel %vm1135, %v4309, 0
        %v4385 = vsel %vm1135, %v4314, 0
        %v4388 = vsel %vm1135, %v4319, 0
        %v4391 = vsel %vm1135, %v4324, 0
        %v4394 = vsel %vm1135, %v4329, 0
        %v4397 = vsel %vm1135, %v4334, 0
        %v4400 = vsel %vm1135, %v4339, 0
        %v4403 = vsel %vm1135, %v4344, 0
        %v4406 = vsel %vm1135, %v4349, 0
        %v4409 = vsel %vm1135, %v4354, 0
        %v4412 = vsel %vm1135, %v4359, 0
        %4414 = vmatprep.subr.mxu0 0.0
        %4415 = vmatpush1.msra.mxu0 %v4362
        %4416 = vmatprep.subr.mxu0 0.0
        %4417 = vmatpush1.msra.mxu0 %v4363
        %4418 = vmatprep.subr.mxu0 0.0
        %4419 = vmatpush1.msra.mxu0 %v4364
        %4420 = vmatprep.subr.mxu0 0.0
        %4421 = vmatpush1.msra.mxu0 %v4365
        %4422 = vmatprep.subr.mxu0 0.0
        %4423 = vmatpush1.msra.mxu0 0.0
        %4424 = vmatprep.subr.mxu0 0.0
        %4425 = vmatpush1.msra.mxu0 0.0
        %4426 = vmatprep.subr.mxu0 0.0
        %4427 = vmatpush1.msra.mxu0 0.0
        %4428 = vmatprep.subr.mxu0 0.0
        %4429 = vmatpush1.msra.mxu0 0.0
        %4430 = vmatprep.subr.mxu0 0.0
        %4431 = vmatpush1.msra.mxu0 0.0
        %4432 = vmatprep.subr.mxu0 0.0
        %4433 = vmatpush1.msra.mxu0 0.0
        %4434 = vmatprep.subr.mxu0 0.0
        %4435 = vmatpush1.msra.mxu0 0.0
        %4436 = vmatprep.subr.mxu0 0.0
        %4437 = vmatpush1.msra.mxu0 0.0
        %4438 = vmatprep.subr.mxu0 0.0
        %4439 = vmatpush1.msra.mxu0 0.0
        %4440 = vmatprep.subr.mxu0 0.0
        %4441 = vmatpush1.msra.mxu0 0.0
        %4442 = vmatprep.subr.mxu0 0.0
        %4443 = vmatpush1.msra.mxu0 0.0
        %4444 = vmatprep.subr.mxu0 0.0
        %4445 = vmatpush1.msra.mxu0 0.0
        %4446 = vmatprep.subr.mxu0 0.0
        %4447 = vmatpush1.msra.mxu0 0.0
        %4448 = vmatprep.subr.mxu0 0.0
        %4449 = vmatpush1.msra.mxu0 0.0
        %4450 = vmatprep.subr.mxu0 0.0
        %4451 = vmatpush1.msra.mxu0 0.0
        %4452 = vmatprep.subr.mxu0 0.0
        %4453 = vmatpush1.msra.mxu0 0.0
        %4454 = vmatprep.subr.mxu0 0.0
        %4455 = vmatpush1.msra.mxu0 0.0
        %4456 = vmatprep.subr.mxu0 0.0
        %4457 = vmatpush1.msra.mxu0 0.0
        %4458 = vmatprep.subr.mxu0 0.0
        %4459 = vmatpush1.msra.mxu0 0.0
        %4460 = vmatprep.subr.mxu0 0.0
        %4461 = vmatpush1.msra.mxu0 0.0
        %4462 = vmatprep.subr.mxu0 0.0
        %4463 = vmatpush1.msra.mxu0 0.0
        %4464 = vmatprep.subr.mxu0 0.0
        %4465 = vmatpush1.msra.mxu0 0.0
        %4466 = vmatprep.subr.mxu0 0.0
        %4467 = vmatpush1.msra.mxu0 0.0
        %4468 = vmatprep.subr.mxu0 0.0
        %4469 = vmatpush1.msra.mxu0 0.0
        %4470 = vmatprep.subr.mxu0 0.0
        %4471 = vmatpush1.msra.mxu0 0.0
        %4472 = vmatprep.subr.mxu0 0.0
        %4473 = vmatpush1.msra.mxu0 0.0
        %4474 = vmatprep.subr.mxu0 0.0
        %4475 = vmatpush1.msra.mxu0 0.0
        %4476 = vmatprep.subr.mxu0 0.0
        %4477 = vmatpush1.msra.mxu0 0.0
        %4478 = vmatprep.mubr.f32.mxu0 0.0
        %4479 = vmatmul.mubr.f32.gmra.mrb[0].mxu0 %v4367
        %v4480 = vpop.f32.mrb[0].mxu0
        %v4481 = vadd.f32 0.0, %v4480
        %v4482 = vpop.f32.mrb[0].mxu0
        %4483 = vmatprep.mubr.f32.mxu0 0.0
        %4484 = vmatmul.mubr.f32.gmra.mrb[0].mxu0 %v4370
        %v4485 = vpop.f32.mrb[0].mxu0
        %v4486 = vadd.f32 0.0, %v4485
        %v4487 = vpop.f32.mrb[0].mxu0
        %4488 = vmatprep.mubr.f32.mxu0 0.0
        %4489 = vmatmul.mubr.f32.gmra.mrb[0].mxu0 %v4373
        %v4490 = vpop.f32.mrb[0].mxu0
        %v4491 = vadd.f32 0.0, %v4490
        %v4492 = vpop.f32.mrb[0].mxu0
        %4493 = vmatprep.mubr.f32.mxu0 0.0
        %4494 = vmatmul.mubr.f32.gmra.mrb[0].mxu0 %v4376
        %v4495 = vpop.f32.mrb[0].mxu0
        %v4496 = vadd.f32 0.0, %v4495
        %v4497 = vpop.f32.mrb[0].mxu0
        %4498 = vmatprep.mubr.f32.mxu0 0.0
        %4499 = vmatmul.mubr.f32.gmra.mrb[0].mxu0 %v4379
        %v4500 = vpop.f32.mrb[0].mxu0
        %v4501 = vadd.f32 0.0, %v4500
        %v4502 = vpop.f32.mrb[0].mxu0
        %4503 = vmatprep.mubr.f32.mxu0 0.0
        %4504 = vmatmul.mubr.f32.gmra.mrb[0].mxu0 %v4382
        %v4505 = vpop.f32.mrb[0].mxu0
        %v4506 = vadd.f32 0.0, %v4505
        %v4507 = vpop.f32.mrb[0].mxu0
        %4508 = vmatprep.mubr.f32.mxu0 0.0
        %4509 = vmatmul.mubr.f32.gmra.mrb[0].mxu0 %v4385
        %v4510 = vpop.f32.mrb[0].mxu0
        %v4511 = vadd.f32 0.0, %v4510
        %v4512 = vpop.f32.mrb[0].mxu0
        %4513 = vmatprep.mubr.f32.mxu0 0.0
        %4514 = vmatmul.mubr.f32.gmra.mrb[0].mxu0 %v4388
        %v4515 = vpop.f32.mrb[0].mxu0
        %v4516 = vadd.f32 0.0, %v4515
        %v4517 = vpop.f32.mrb[0].mxu0
        %4518 = vmatprep.mubr.f32.mxu0 0.0
        %4519 = vmatmul.mubr.f32.gmra.mrb[0].mxu0 %v4391
        %v4520 = vpop.f32.mrb[0].mxu0
        %v4521 = vadd.f32 0.0, %v4520
        %v4522 = vpop.f32.mrb[0].mxu0
        %4523 = vmatprep.mubr.f32.mxu0 0.0
        %4524 = vmatmul.mubr.f32.gmra.mrb[0].mxu0 %v4394
        %v4525 = vpop.f32.mrb[0].mxu0
        %v4526 = vadd.f32 0.0, %v4525
        %v4527 = vpop.f32.mrb[0].mxu0
        %4528 = vmatprep.mubr.f32.mxu0 0.0
        %4529 = vmatmul.mubr.f32.gmra.mrb[0].mxu0 %v4397
        %v4530 = vpop.f32.mrb[0].mxu0
        %v4531 = vadd.f32 0.0, %v4530
        %v4532 = vpop.f32.mrb[0].mxu0
        %4533 = vmatprep.mubr.f32.mxu0 0.0
        %4534 = vmatmul.mubr.f32.gmra.mrb[0].mxu0 %v4400
        %v4535 = vpop.f32.mrb[0].mxu0
        %v4536 = vadd.f32 0.0, %v4535
        %v4537 = vpop.f32.mrb[0].mxu0
        %4538 = vmatprep.mubr.f32.mxu0 0.0
        %4539 = vmatmul.mubr.f32.gmra.mrb[0].mxu0 %v4403
        %v4540 = vpop.f32.mrb[0].mxu0
        %v4541 = vadd.f32 0.0, %v4540
        %v4542 = vpop.f32.mrb[0].mxu0
        %4543 = vmatprep.mubr.f32.mxu0 0.0
        %4544 = vmatmul.mubr.f32.gmra.mrb[0].mxu0 %v4406
        %v4545 = vpop.f32.mrb[0].mxu0
        %v4546 = vadd.f32 0.0, %v4545
        %v4547 = vpop.f32.mrb[0].mxu0
        %4548 = vmatprep.mubr.f32.mxu0 0.0
        %4549 = vmatmul.mubr.f32.gmra.mrb[0].mxu0 %v4409
        %v4550 = vpop.f32.mrb[0].mxu0
        %v4551 = vadd.f32 0.0, %v4550
        %v4552 = vpop.f32.mrb[0].mxu0
        %4553 = vmatprep.mubr.f32.mxu0 0.0
        %4554 = vmatmul.mubr.f32.gmra.mrb[0].mxu0 %v4412
        %v4555 = vpop.f32.mrb[0].mxu0
        %v4556 = vadd.f32 0.0, %v4555
        %v4557 = vpop.f32.mrb[0].mxu0
        %4558 = vdwg.mxu0
        %v4559 = vadd.f32 %v3655, %v4481
        %v4560 = vadd.f32 %v3656, %v4486
        %v4561 = vadd.f32 %v3657, %v4491
        %v4562 = vadd.f32 %v3658, %v4496
        %v4563 = vadd.f32 %v3659, %v4501
        %v4564 = vadd.f32 %v3660, %v4506
        %v4565 = vadd.f32 %v3661, %v4511
        %v4566 = vadd.f32 %v3662, %v4516
        %v4567 = vadd.f32 %v3663, %v4521
        %v4568 = vadd.f32 %v3664, %v4526
        %v4569 = vadd.f32 %v3665, %v4531
        %v4570 = vadd.f32 %v3666, %v4536
        %v4571 = vadd.f32 %v3667, %v4541
        %v4572 = vadd.f32 %v3668, %v4546
        %v4573 = vadd.f32 %v3669, %v4551
        %v4574 = vadd.f32 %v3670, %v4556
        %v4575 = vld [vmem:[%s7] sm:$0x1]
        %v4577 = vlaneseq
        %v4578 = vshrl.u32 %v4577, 7
        %v4579 = vsub.s32 0, %v4578
        %v4580 = vrot.slane %v4575, %v4579
        %v4582 = vadd.f32 %v4559, %v4580
        %v4583 = vadd.f32 %v4560, %v4580
        %v4584 = vadd.f32 %v4561, %v4580
        %v4585 = vadd.f32 %v4562, %v4580
        %v4586 = vadd.f32 %v4563, %v4580
        %v4587 = vadd.f32 %v4564, %v4580
        %v4588 = vadd.f32 %v4565, %v4580
        %v4589 = vadd.f32 %v4566, %v4580
        %v4590 = vadd.f32 %v4567, %v4580
        %v4591 = vadd.f32 %v4568, %v4580
        %v4592 = vadd.f32 %v4569, %v4580
        %v4593 = vadd.f32 %v4570, %v4580
        %v4594 = vadd.f32 %v4571, %v4580
        %v4595 = vadd.f32 %v4572, %v4580
        %v4596 = vadd.f32 %v4573, %v4580
        %v4597 = vadd.f32 %v4574, %v4580
        %4598 = vst [vmem:[%s516] sm:$0xff] %v4582
        %4599 = vst [vmem:[%s516 + $0x8] sm:$0xff] %v4583
        %4600 = vst [vmem:[%s516 + $0x10] sm:$0xff] %v4584
        %4601 = vst [vmem:[%s516 + $0x18] sm:$0xff] %v4585
        %4602 = vst [vmem:[%s516 + $0x20] sm:$0xff] %v4586
        %4603 = vst [vmem:[%s516 + $0x28] sm:$0xff] %v4587
        %4604 = vst [vmem:[%s516 + $0x30] sm:$0xff] %v4588
        %4605 = vst [vmem:[%s516 + $0x38] sm:$0xff] %v4589
        %4606 = vst [vmem:[%s516 + $0x40] sm:$0xff] %v4590
        %4607 = vst [vmem:[%s516 + $0x48] sm:$0xff] %v4591
        %4608 = vst [vmem:[%s516 + $0x50] sm:$0xff] %v4592
        %4609 = vst [vmem:[%s516 + $0x58] sm:$0xff] %v4593
        %4610 = vst [vmem:[%s516 + $0x60] sm:$0xff] %v4594
        %4611 = vst [vmem:[%s516 + $0x68] sm:$0xff] %v4595
        %4612 = vst [vmem:[%s516 + $0x70] sm:$0xff] %v4596
        %4613 = vst [vmem:[%s516 + $0x78] sm:$0xff] %v4597
        %s4614 = sand.u32 %s242, 1
        %s4615 = scalar_lea.sflag [#allocation6], %s4614
        %s4616 = sand.u32 %s242, 1
        %s4617 = smul.addr %s4616, 512
        %s4618 = scalar_lea.vmem [#allocation16], %s4617
        %s4619 = sand.u32 %s270, 1
        %s4620 = scalar_lea.sflag [#allocation18], %s4619
        %s4621 = sand.u32 %s270, 1
        %s4622 = smul.addr %s4621, 128
        %s4623 = scalar_lea.vmem [#allocation17], %s4622
        // Predicated region
        $region85: #{tpu_custom_call.1} parent=51 // pred_check
          %p4624 = pneg %p252
        $region86: #{tpu_custom_call.1} parent=51 // pred_check_branch
          %4626 = sbr.rel (%p4624) target = $region88
        $region87: #{tpu_custom_call.1} parent=51 // pred_region
          %s4627 = smul.u32 16, %s40
          %s4629 = ssub.s32 8192, 8192
          %4630 = vsyncadd %s4615, %s4629
          %s4631 = smul.addr %s39, 64
          %s4632 = sadd.s32 %s4627, %s4631
          %s4633 = smul.addr %s4632, 128
          %s4634 = scalar_lea.hbm %s8, %s4633
          %s4635 = sshll.u32 %s4618, 4
          %s4636 = int_to_ptr.vmem [resolvable:$true] %s4635
          %4641 = dma.vmem_to_hbm [thread:$0]  %s4636, 8192, %s4634, %s4615, 128, 128, 8
        $region88: #{tpu_custom_call.1} parent=51 // pred_fallthru
          _
        // Predicated region
        $region89: #{tpu_custom_call.1} parent=51 // pred_check
          %p4642 = pneg %p280
        $region90: #{tpu_custom_call.1} parent=51 // pred_check_branch
          %4644 = sbr.rel (%p4642) target = $region92
        $region91: #{tpu_custom_call.1} parent=51 // pred_region
          %s4645 = smul.u32 16, %s40
          %s4647 = ssub.s32 2048, 2048
          %4648 = vsyncadd %s4620, %s4647
          %s4649 = smul.addr %s39, 16
          %s4650 = sadd.s32 %s4645, %s4649
          %s4651 = smul.addr %s4650, 128
          %s4652 = scalar_lea.hbm %s9, %s4651
          %s4653 = sshll.u32 %s4623, 4
          %s4654 = int_to_ptr.vmem [resolvable:$true] %s4653
          %4659 = dma.vmem_to_hbm [thread:$0]  %s4654, 2048, %s4652, %s4620, 128, 128, 8
        $region92: #{tpu_custom_call.1} parent=51 // pred_fallthru
          _
      $region52: #{tpu_custom_call.1} parent=5 // pred_fallthru
        _
      %p4660 = scmp.le.s32.totalorder 2, %s30
      // Predicated region
      $region93: #{tpu_custom_call.1} parent=5 // pred_check
        %p4661 = pneg %p4660
      $region94: #{tpu_custom_call.1} parent=5 // pred_check_branch
        %4663 = sbr.rel (%p4661) target = $region96
      $region95: #{tpu_custom_call.1} parent=5 // pred_region
        %s4664 = ssub.s32 %s30, 2
        // Predicated region
        $region97: #{tpu_custom_call.1} parent=95 // pred_check
          %p4665 = pneg %p258
        $region98: #{tpu_custom_call.1} parent=95 // pred_check_branch
          %4667 = sbr.rel (%p4665) target = $region100
        $region99: #{tpu_custom_call.1} parent=95 // pred_region
          %s4668 = sand.u32 %s243, 1
          %s4669 = scalar_lea.sflag [#allocation6], %s4668
          %s4670 = sand.u32 %s243, 1
          %s4671 = smul.addr %s4670, 512
          %s4672 = scalar_lea.vmem [#allocation16], %s4671
          %4673 = dma.done %s4669, 8192
        $region100: #{tpu_custom_call.1} parent=95 // pred_fallthru
          _
        // Predicated region
        $region101: #{tpu_custom_call.1} parent=95 // pred_check
          %p4674 = pneg %p286
        $region102: #{tpu_custom_call.1} parent=95 // pred_check_branch
          %4676 = sbr.rel (%p4674) target = $region104
        $region103: #{tpu_custom_call.1} parent=95 // pred_region
          %s4677 = sand.u32 %s271, 1
          %s4678 = scalar_lea.sflag [#allocation18], %s4677
          %s4679 = sand.u32 %s271, 1
          %s4680 = smul.addr %s4679, 128
          %s4681 = scalar_lea.vmem [#allocation17], %s4680
          %4682 = dma.done %s4678, 2048
        $region104: #{tpu_custom_call.1} parent=95 // pred_fallthru
          _
      $region96: #{tpu_custom_call.1} parent=5 // pred_fallthru
        _
    $region6: #{tpu_custom_call.1} parent=1 // loop_footer
      %s34 = sadd.s32 1, %s30
    $region7: #{tpu_custom_call.1} parent=1 // loop_footer_branch
      %29 = sbr.rel target = $region3
    $region8: #{tpu_custom_call.1} parent=1 // loop_exit
      _
    %4683 = vsyncpa [#allocation5], 1
    %s4684 = scalar_lea.sflag [#allocation5], 1
    %4685 = vsyncpa %s4684, 1
    %4686 = vsyncpa [#allocation8], 1
    %s4687 = scalar_lea.sflag [#allocation8], 1
    %4688 = vsyncpa %s4687, 1
    %4689 = vsyncpa [#allocation11], 1
    %4690 = vsyncpa [#allocation14], 1
    %4691 = vsyncpa [#allocation6], 1
    %s4692 = scalar_lea.sflag [#allocation6], 1
    %4693 = vsyncpa %s4692, 1
    %4694 = vsyncpa [#allocation18], 1
    %s4695 = scalar_lea.sflag [#allocation18], 1
    %4696 = vsyncpa %s4695, 1

</llo_original>
